<compile_context>
chip_gen: v5e
topology: v5e:2x2
jax: 0.10.0
libtpu: 0.0.40
codegen_flags: <defaults>
</compile_context>

<pallas_src>
import functools

import jax
import jax.numpy as jnp
from jax import lax
from jax.experimental import pallas as pl
from jax.experimental.pallas import tpu as pltpu

LANE = 128


def _round_up(v, m):
    return (v + m - 1) // m * m


def _pad_last(a, target):
    pad = target - a.shape[-1]
    if pad == 0:
        return a
    return jnp.pad(a, [(0, 0)] * (a.ndim - 1) + [(0, pad)])


def _preact_residual_kernel(Ho, Wo, has_shortcut, *refs):
    if has_shortcut:
        (x_ref, s1_ref, b1_ref, w1_ref, c1_ref, s2_ref, b2_ref,
         w3_ref, c3_ref, s3_ref, b3_ref, w4_ref, c4_ref,
         ws_ref, cs_ref, out_ref, hp_ref, patch_ref) = refs
    else:
        (x_ref, s1_ref, b1_ref, w1_ref, c1_ref, s2_ref, b2_ref,
         w3_ref, c3_ref, s3_ref, b3_ref, w4_ref, c4_ref,
         out_ref, hp_ref, patch_ref) = refs
        ws_ref = cs_ref = None

    HW = Ho * Wo
    Cb_p = w1_ref.shape[1]

    x = x_ref[0]                                            # (HW, Cin_p) f32

    # ---- BN1 (folded) + ReLU (f32, VPU) + 1x1 bottleneck conv (bf16 MXU) ----
    h = jnp.maximum(x * s1_ref[...] + b1_ref[...], 0.0)
    h = jnp.dot(h.astype(jnp.bfloat16), w1_ref[...],
                preferred_element_type=jnp.float32) + c1_ref[...]

    # ---- BN2 + ReLU ----
    h = jnp.maximum(h * s2_ref[...] + b2_ref[...], 0.0)     # (HW, Cb_p) f32

    # ---- 3x3 conv (padding=1) as a single im2col matmul ----
    # Zero only the 1-pixel border of the padded scratch; interior is overwritten.
    # Done every step so the grid axis can be "parallel" (per-core scratch).
    zrow = jnp.zeros((1, Wo + 2, Cb_p), jnp.bfloat16)
    hp_ref[0:1, :, :] = zrow
    hp_ref[Ho + 1:Ho + 2, :, :] = zrow
    zcol = jnp.zeros((Ho, 1, Cb_p), jnp.bfloat16)
    hp_ref[1:Ho + 1, 0:1, :] = zcol
    hp_ref[1:Ho + 1, Wo + 1:Wo + 2, :] = zcol
    hp_ref[1:Ho + 1, 1:Wo + 1, :] = h.astype(jnp.bfloat16).reshape(Ho, Wo, Cb_p)

    # Gather the 9 shifted taps into one lane-dense (HW, 9*Cb_p) patch matrix.
    for t in range(9):
        dy, dx = t // 3, t % 3
        patch_ref[:, t * Cb_p:(t + 1) * Cb_p] = (
            hp_ref[dy:dy + Ho, dx:dx + Wo, :].reshape(HW, Cb_p))

    acc = jnp.dot(patch_ref[...], w3_ref[...],
                  preferred_element_type=jnp.float32) + c3_ref[...]

    # ---- BN3 + ReLU + 1x1 expansion conv ----
    h = jnp.maximum(acc * s3_ref[...] + b3_ref[...], 0.0)
    res = jnp.dot(h.astype(jnp.bfloat16), w4_ref[...],
                  preferred_element_type=jnp.float32) + c4_ref[...]

    # ---- shortcut ----
    if has_shortcut:
        sc = jnp.dot(x.astype(jnp.bfloat16), ws_ref[...],
                     preferred_element_type=jnp.float32) + cs_ref[...]
    else:
        # Identity shortcut (module uses it only when stride==2 and Cin==Cout);
        # no matmul, padded channels are zero on both sides.
        sc = x

    out_ref[0] = (res + sc).astype(out_ref.dtype)


def preact_residual_unit(x_nchw, p, stride, has_shortcut):
    """Pallas forward.  x_nchw: (N, Cin, H, W) f32 -> (N, Cout, Ho, Wo) f32."""
    N, Cin, H, W = x_nchw.shape
    Cb = p["w1"].shape[1]
    Cout = p["w4"].shape[1]
    Cin_p, Cb_p, Cout_p = (_round_up(c, LANE) for c in (Cin, Cb, Cout))

    # NCHW -> NHWC, apply the 1x1-conv stride by spatial subsampling (legal since
    # everything before the strided convs is pointwise), flatten pixels, pad lanes.
    # TODO(synk): fold the transpose/stride/pad into the kernel's index_map to save
    # one HBM pass over the activations.
    x = jnp.transpose(x_nchw, (0, 2, 3, 1))[:, ::stride, ::stride, :]
    _, Ho, Wo, _ = x.shape
    HW = Ho * Wo
    x2 = _pad_last(x.reshape(N, HW, Cin).astype(jnp.float32), Cin_p)

    f32, bf16 = jnp.float32, jnp.bfloat16
    s1 = _pad_last(p["s1"], Cin_p).astype(f32)
    b1 = _pad_last(p["b1"], Cin_p).astype(f32)
    w1 = _pad_last(jnp.pad(p["w1"], ((0, Cin_p - Cin), (0, 0))), Cb_p).astype(bf16)
    c1 = _pad_last(p["c1"], Cb_p).astype(f32)
    s2 = _pad_last(p["s2"], Cb_p).astype(f32)
    b2 = _pad_last(p["b2"], Cb_p).astype(f32)
    # (9, Cb, Cb) -> (9*Cb_p, Cb_p), tap-major rows matching the im2col patch layout.
    w3 = jnp.pad(p["w3"], ((0, 0), (0, Cb_p - Cb), (0, Cb_p - Cb)))
    w3 = w3.reshape(9 * Cb_p, Cb_p).astype(bf16)
    c3 = _pad_last(p["c3"], Cb_p).astype(f32)
    s3 = _pad_last(p["s3"], Cb_p).astype(f32)
    b3 = _pad_last(p["b3"], Cb_p).astype(f32)
    w4 = _pad_last(jnp.pad(p["w4"], ((0, Cb_p - Cb), (0, 0))), Cout_p).astype(bf16)
    c4 = _pad_last(p["c4"], Cout_p).astype(f32)

    operands = [x2, s1, b1, w1, c1, s2, b2, w3, c3, s3, b3, w4, c4]
    if has_shortcut:
        ws = _pad_last(jnp.pad(p["ws"], ((0, Cin_p - Cin), (0, 0))), Cout_p).astype(bf16)
        cs = _pad_last(p["cs"], Cout_p).astype(f32)
        operands += [ws, cs]

    def full_spec(shape):
        return pl.BlockSpec(shape, lambda n: (0,) * len(shape))

    in_specs = [pl.BlockSpec((1, HW, Cin_p), lambda n: (n, 0, 0))]
    in_specs += [full_spec(a.shape) for a in operands[1:]]
    out_spec = pl.BlockSpec((1, HW, Cout_p), lambda n: (n, 0, 0))

    # VMEM budget: double-buffered x/out blocks + resident weights + scratches +
    # headroom for f32 temporaries.  Capped at 64 MiB so it also fits v7x.
    bytes_per_step = (
        2 * HW * Cin_p * 4 + 2 * HW * Cout_p * 4
        + 2 * sum(int(a.size) * a.dtype.itemsize for a in operands[1:])
        + (Ho + 2) * (Wo + 2) * Cb_p * 2
        + HW * 9 * Cb_p * 2
        + 6 * HW * max(Cin_p, Cb_p, Cout_p) * 4)
    vmem_limit = int(min(max(2 * bytes_per_step, 32 * 1024 * 1024), 64 * 1024 * 1024))

    grid_spec = pltpu.PrefetchScalarGridSpec(
        num_scalar_prefetch=0,
        grid=(N,),
        in_specs=in_specs,
        out_specs=out_spec,
        scratch_shapes=[
            pltpu.VMEM((Ho + 2, Wo + 2, Cb_p), jnp.bfloat16),   # padded 3x3 input
            pltpu.VMEM((HW, 9 * Cb_p), jnp.bfloat16),           # im2col patch matrix
        ],
    )

    kernel = functools.partial(_preact_residual_kernel, Ho, Wo, has_shortcut)
    out = pl.pallas_call(
        kernel,
        out_shape=jax.ShapeDtypeStruct((N, HW, Cout_p), jnp.float32),
        grid_spec=grid_spec,
        compiler_params=pltpu.CompilerParams(
            dimension_semantics=("parallel",),
            vmem_limit_bytes=vmem_limit),
    )(*operands)

    out = out[:, :, :Cout].reshape(N, Ho, Wo, Cout)
    return jnp.transpose(out, (0, 3, 1, 2))


def make_params(key, in_channels, out_channels, stride):
    """Deterministic synthetic parameters (eval-mode BN folded to scale/bias)."""
    Cb = out_channels // 4
    ks = jax.random.split(key, 20)

    def bn_fold(k0, k1, k2, k3, C):
        gamma = jax.random.uniform(k0, (C,), jnp.float32, 0.5, 1.5)
        beta = 0.1 * jax.random.normal(k1, (C,), jnp.float32)
        mean = 0.1 * jax.random.normal(k2, (C,), jnp.float32)
        var = jax.random.uniform(k3, (C,), jnp.float32, 0.5, 1.5)
        scale = gamma * lax.rsqrt(var + 1e-5)
        return scale.reshape(1, C), (beta - mean * scale).reshape(1, C)

    s1, b1 = bn_fold(ks[0], ks[1], ks[2], ks[3], in_channels)
    s2, b2 = bn_fold(ks[4], ks[5], ks[6], ks[7], Cb)
    s3, b3 = bn_fold(ks[8], ks[9], ks[10], ks[11], Cb)

    p = dict(
        s1=s1, b1=b1,
        w1=0.1 * jax.random.normal(ks[12], (in_channels, Cb), jnp.float32),
        c1=0.1 * jax.random.normal(ks[13], (1, Cb), jnp.float32),
        s2=s2, b2=b2,
        w3=0.1 * jax.random.normal(ks[14], (9, Cb, Cb), jnp.float32),  # (ky*3+kx, in, out)
        c3=0.1 * jax.random.normal(ks[15], (1, Cb), jnp.float32),
        s3=s3, b3=b3,
        w4=0.1 * jax.random.normal(ks[16], (Cb, out_channels), jnp.float32),
        c4=0.1 * jax.random.normal(ks[17], (1, out_channels), jnp.float32),
    )

    # Matches the PyTorch module exactly: conv shortcut iff (stride != 2) or (in != out).
    has_shortcut = (stride != 2) or (in_channels != out_channels)
    if has_shortcut:
        p["ws"] = 0.1 * jax.random.normal(ks[18], (in_channels, out_channels), jnp.float32)
        p["cs"] = 0.1 * jax.random.normal(ks[19], (1, out_channels), jnp.float32)
    return p, has_shortcut


def reference_forward(x_nchw, p, stride, has_shortcut):
    """Pure-JAX reference (lax convs; weights rounded to bf16 like the kernel)."""
    x = jnp.transpose(x_nchw, (0, 2, 3, 1)).astype(jnp.float32)
    Cin = x.shape[-1]
    Cb = p["w1"].shape[1]
    Cout = p["w4"].shape[1]
    dn = ("NHWC", "HWIO", "NHWC")
    q = lambda w: w.astype(jnp.bfloat16).astype(jnp.float32)

    def aff_relu(h, s, b):
        return jnp.maximum(h * s.reshape(1, 1, 1, -1) + b.reshape(1, 1, 1, -1), 0.0)

    h = aff_relu(x, p["s1"], p["b1"])
    h = lax.conv_general_dilated(h, q(p["w1"]).reshape(1, 1, Cin, Cb), (stride, stride),
                                 "VALID", dimension_numbers=dn) + p["c1"].reshape(1, 1, 1, -1)
    h = aff_relu(h, p["s2"], p["b2"])
    h = lax.conv_general_dilated(h, q(p["w3"]).reshape(3, 3, Cb, Cb), (1, 1),
                                 ((1, 1), (1, 1)), dimension_numbers=dn) + p["c3"].reshape(1, 1, 1, -1)
    h = aff_relu(h, p["s3"], p["b3"])
    res = lax.conv_general_dilated(h, q(p["w4"]).reshape(1, 1, Cb, Cout), (1, 1),
                                   "VALID", dimension_numbers=dn) + p["c4"].reshape(1, 1, 1, -1)
    if has_shortcut:
        sc = lax.conv_general_dilated(x, q(p["ws"]).reshape(1, 1, Cin, Cout), (stride, stride),
                                      "VALID", dimension_numbers=dn) + p["cs"].reshape(1, 1, 1, -1)
    else:
        sc = x[:, ::stride, ::stride, :]
    return jnp.transpose(res + sc, (0, 3, 1, 2))


if __name__ == "__main__":
    key = jax.random.PRNGKey(0)

    configs = [
        # (N, Cin, H, W, Cout, stride)
        (2, 16, 16, 16, 32, 1),   # conv shortcut, stride 1
        (2, 32, 16, 16, 64, 2),   # conv shortcut, stride 2 (downsample)
    ]

    for idx, (N, Cin, H, W, Cout, stride) in enumerate(configs):
        kx, kp = jax.random.split(jax.random.fold_in(key, idx))
        x = jax.random.normal(kx, (N, Cin, H, W), dtype=jnp.float32)
        params, has_shortcut = make_params(kp, Cin, Cout, stride)

        fwd = jax.jit(functools.partial(
            preact_residual_unit, stride=stride, has_shortcut=has_shortcut))
        out = jax.block_until_ready(fwd(x, params))

        ref = reference_forward(x, params, stride, has_shortcut)
        assert out.shape == ref.shape, (out.shape, ref.shape)
        err = float(jnp.max(jnp.abs(out - ref)))
        if err > 2e-2:
            raise AssertionError(f"config {idx}: Pallas kernel mismatch, max abs err = {err}")

    print("KERNEL_OK")
</pallas_src>

<mosaic_0001>
module attributes {stable_mosaic.version = 11 : i64} {
  func.func @_preact_residual_kernel(%arg0: i32, %arg1: memref<1x256x128xf32, #tpu.memory_space<vmem>>, %arg2: memref<1x128xf32, #tpu.memory_space<vmem>>, %arg3: memref<1x128xf32, #tpu.memory_space<vmem>>, %arg4: memref<128x128xbf16, #tpu.memory_space<vmem>>, %arg5: memref<1x128xf32, #tpu.memory_space<vmem>>, %arg6: memref<1x128xf32, #tpu.memory_space<vmem>>, %arg7: memref<1x128xf32, #tpu.memory_space<vmem>>, %arg8: memref<1152x128xbf16, #tpu.memory_space<vmem>>, %arg9: memref<1x128xf32, #tpu.memory_space<vmem>>, %arg10: memref<1x128xf32, #tpu.memory_space<vmem>>, %arg11: memref<1x128xf32, #tpu.memory_space<vmem>>, %arg12: memref<128x128xbf16, #tpu.memory_space<vmem>>, %arg13: memref<1x128xf32, #tpu.memory_space<vmem>>, %arg14: memref<128x128xbf16, #tpu.memory_space<vmem>>, %arg15: memref<1x128xf32, #tpu.memory_space<vmem>>, %arg16: memref<1x256x128xf32, #tpu.memory_space<vmem>>, %arg17: memref<18x18x128xbf16, #tpu.memory_space<vmem>>, %arg18: memref<256x1152xbf16, #tpu.memory_space<vmem>>) attributes {dimension_semantics = [#tpu.dimension_semantics<parallel>], iteration_bounds = array<i64: 2>, scalar_prefetch = 0 : i64, scratch_operands = 2 : i64, tpu.core_type = #tpu.core_type<tc>, window_params = [{transform_indices = @transform_0, window_bounds = array<i64: 1, 256, 128>}, {pipeline_mode = #tpu.pipeline_mode<synchronous>, transform_indices = @transform_1, window_bounds = array<i64: 1, 128>}, {pipeline_mode = #tpu.pipeline_mode<synchronous>, transform_indices = @transform_2, window_bounds = array<i64: 1, 128>}, {pipeline_mode = #tpu.pipeline_mode<synchronous>, transform_indices = @transform_3, window_bounds = array<i64: 128, 128>}, {pipeline_mode = #tpu.pipeline_mode<synchronous>, transform_indices = @transform_4, window_bounds = array<i64: 1, 128>}, {pipeline_mode = #tpu.pipeline_mode<synchronous>, transform_indices = @transform_5, window_bounds = array<i64: 1, 128>}, {pipeline_mode = #tpu.pipeline_mode<synchronous>, transform_indices = @transform_6, window_bounds = array<i64: 1, 128>}, {pipeline_mode = #tpu.pipeline_mode<synchronous>, transform_indices = @transform_7, window_bounds = array<i64: 1152, 128>}, {pipeline_mode = #tpu.pipeline_mode<synchronous>, transform_indices = @transform_8, window_bounds = array<i64: 1, 128>}, {pipeline_mode = #tpu.pipeline_mode<synchronous>, transform_indices = @transform_9, window_bounds = array<i64: 1, 128>}, {pipeline_mode = #tpu.pipeline_mode<synchronous>, transform_indices = @transform_10, window_bounds = array<i64: 1, 128>}, {pipeline_mode = #tpu.pipeline_mode<synchronous>, transform_indices = @transform_11, window_bounds = array<i64: 128, 128>}, {pipeline_mode = #tpu.pipeline_mode<synchronous>, transform_indices = @transform_12, window_bounds = array<i64: 1, 128>}, {pipeline_mode = #tpu.pipeline_mode<synchronous>, transform_indices = @transform_13, window_bounds = array<i64: 128, 128>}, {pipeline_mode = #tpu.pipeline_mode<synchronous>, transform_indices = @transform_14, window_bounds = array<i64: 1, 128>}, {transform_indices = @transform_15, window_bounds = array<i64: 1, 256, 128>}]} {
    %c0 = arith.constant 0 : index
    %c0_0 = arith.constant 0 : index
    %c0_1 = arith.constant 0 : index
    %0 = vector.load %arg1[%c0, %c0_0, %c0_1] : memref<1x256x128xf32, #tpu.memory_space<vmem>>, vector<1x256x128xf32>
    %1 = vector.shape_cast %0 : vector<1x256x128xf32> to vector<256x128xf32>
    %c0_2 = arith.constant 0 : index
    %c0_3 = arith.constant 0 : index
    %2 = vector.load %arg2[%c0_2, %c0_3] : memref<1x128xf32, #tpu.memory_space<vmem>>, vector<1x128xf32>
    %3 = vector.broadcast %2 : vector<1x128xf32> to vector<256x128xf32>
    %4 = arith.mulf %1, %3 : vector<256x128xf32>
    %c0_4 = arith.constant 0 : index
    %c0_5 = arith.constant 0 : index
    %5 = vector.load %arg3[%c0_4, %c0_5] : memref<1x128xf32, #tpu.memory_space<vmem>>, vector<1x128xf32>
    %6 = vector.broadcast %5 : vector<1x128xf32> to vector<256x128xf32>
    %7 = arith.addf %4, %6 : vector<256x128xf32>
    %cst = arith.constant 0.000000e+00 : f32
    %8 = vector.broadcast %cst : f32 to vector<256x128xf32>
    %9 = arith.maximumf %7, %8 : vector<256x128xf32>
    %10 = arith.truncf %9 : vector<256x128xf32> to vector<256x128xbf16>
    %c0_6 = arith.constant 0 : index
    %c0_7 = arith.constant 0 : index
    %11 = vector.load %arg4[%c0_6, %c0_7] : memref<128x128xbf16, #tpu.memory_space<vmem>>, vector<128x128xbf16>
    %cst_8 = arith.constant dense<0.000000e+00> : vector<256x128xf32>
    %12 = tpu.matmul %10, %11, %cst_8 {dimension_numbers = #tpu.dot_dimension_numbers<[1], [0], [0], [1], [0, 0, 1, 1], [], []>} : vector<256x128xbf16>, vector<128x128xbf16>, vector<256x128xf32> -> vector<256x128xf32>
    %c0_9 = arith.constant 0 : index
    %c0_10 = arith.constant 0 : index
    %13 = vector.load %arg5[%c0_9, %c0_10] : memref<1x128xf32, #tpu.memory_space<vmem>>, vector<1x128xf32>
    %14 = vector.broadcast %13 : vector<1x128xf32> to vector<256x128xf32>
    %15 = arith.addf %12, %14 : vector<256x128xf32>
    %c0_11 = arith.constant 0 : index
    %c0_12 = arith.constant 0 : index
    %16 = vector.load %arg6[%c0_11, %c0_12] : memref<1x128xf32, #tpu.memory_space<vmem>>, vector<1x128xf32>
    %17 = vector.broadcast %16 : vector<1x128xf32> to vector<256x128xf32>
    %18 = arith.mulf %15, %17 : vector<256x128xf32>
    %c0_13 = arith.constant 0 : index
    %c0_14 = arith.constant 0 : index
    %19 = vector.load %arg7[%c0_13, %c0_14] : memref<1x128xf32, #tpu.memory_space<vmem>>, vector<1x128xf32>
    %20 = vector.broadcast %19 : vector<1x128xf32> to vector<256x128xf32>
    %21 = arith.addf %18, %20 : vector<256x128xf32>
    %cst_15 = arith.constant 0.000000e+00 : f32
    %22 = vector.broadcast %cst_15 : f32 to vector<256x128xf32>
    %23 = arith.maximumf %21, %22 : vector<256x128xf32>
    %cst_16 = arith.constant 0.000000e+00 : bf16
    %24 = vector.broadcast %cst_16 : bf16 to vector<1x18x128xbf16>
    %c0_17 = arith.constant 0 : index
    %c0_18 = arith.constant 0 : index
    %c0_19 = arith.constant 0 : index
    %25 = vector.load %arg17[%c0_17, %c0_18, %c0_19] : memref<18x18x128xbf16, #tpu.memory_space<vmem>>, vector<1x18x128xbf16>
    tpu.vector_store %arg17[%c0_17, %c0_18, %c0_19], %24 {strides = array<i32>} : memref<18x18x128xbf16, #tpu.memory_space<vmem>>, vector<1x18x128xbf16>,
    %c17 = arith.constant 17 : index
    %c0_20 = arith.constant 0 : index
    %c0_21 = arith.constant 0 : index
    %26 = vector.load %arg17[%c17, %c0_20, %c0_21] : memref<18x18x128xbf16, #tpu.memory_space<vmem>>, vector<1x18x128xbf16>
    tpu.vector_store %arg17[%c17, %c0_20, %c0_21], %24 {strides = array<i32>} : memref<18x18x128xbf16, #tpu.memory_space<vmem>>, vector<1x18x128xbf16>,
    %cst_22 = arith.constant 0.000000e+00 : bf16
    %27 = vector.broadcast %cst_22 : bf16 to vector<16x1x128xbf16>
    %c1 = arith.constant 1 : index
    %c0_23 = arith.constant 0 : index
    %c0_24 = arith.constant 0 : index
    %28 = vector.load %arg17[%c1, %c0_23, %c0_24] : memref<18x18x128xbf16, #tpu.memory_space<vmem>>, vector<16x1x128xbf16>
    tpu.vector_store %arg17[%c1, %c0_23, %c0_24], %27 {strides = array<i32>} : memref<18x18x128xbf16, #tpu.memory_space<vmem>>, vector<16x1x128xbf16>,
    %c1_25 = arith.constant 1 : index
    %c17_26 = arith.constant 17 : index
    %c0_27 = arith.constant 0 : index
    %29 = vector.load %arg17[%c1_25, %c17_26, %c0_27] : memref<18x18x128xbf16, #tpu.memory_space<vmem>>, vector<16x1x128xbf16>
    tpu.vector_store %arg17[%c1_25, %c17_26, %c0_27], %27 {strides = array<i32>} : memref<18x18x128xbf16, #tpu.memory_space<vmem>>, vector<16x1x128xbf16>,
    %30 = arith.truncf %23 : vector<256x128xf32> to vector<256x128xbf16>
    %31 = vector.shape_cast %30 : vector<256x128xbf16> to vector<16x16x128xbf16>
    %c1_28 = arith.constant 1 : index
    %c1_29 = arith.constant 1 : index
    %c0_30 = arith.constant 0 : index
    %32 = vector.load %arg17[%c1_28, %c1_29, %c0_30] : memref<18x18x128xbf16, #tpu.memory_space<vmem>>, vector<16x16x128xbf16>
    tpu.vector_store %arg17[%c1_28, %c1_29, %c0_30], %31 {strides = array<i32>} : memref<18x18x128xbf16, #tpu.memory_space<vmem>>, vector<16x16x128xbf16>,
    %c0_31 = arith.constant 0 : index
    %c0_32 = arith.constant 0 : index
    %c0_33 = arith.constant 0 : index
    %33 = vector.load %arg17[%c0_31, %c0_32, %c0_33] : memref<18x18x128xbf16, #tpu.memory_space<vmem>>, vector<16x16x128xbf16>
    %34 = vector.shape_cast %33 : vector<16x16x128xbf16> to vector<256x128xbf16>
    %c0_34 = arith.constant 0 : index
    %c0_35 = arith.constant 0 : index
    %35 = vector.load %arg18[%c0_34, %c0_35] : memref<256x1152xbf16, #tpu.memory_space<vmem>>, vector<256x128xbf16>
    tpu.vector_store %arg18[%c0_34, %c0_35], %34 {strides = array<i32>} : memref<256x1152xbf16, #tpu.memory_space<vmem>>, vector<256x128xbf16>,
    %c0_36 = arith.constant 0 : index
    %c1_37 = arith.constant 1 : index
    %c0_38 = arith.constant 0 : index
    %36 = vector.load %arg17[%c0_36, %c1_37, %c0_38] : memref<18x18x128xbf16, #tpu.memory_space<vmem>>, vector<16x16x128xbf16>
    %37 = vector.shape_cast %36 : vector<16x16x128xbf16> to vector<256x128xbf16>
    %c0_39 = arith.constant 0 : index
    %c128 = arith.constant 128 : index
    %38 = vector.load %arg18[%c0_39, %c128] : memref<256x1152xbf16, #tpu.memory_space<vmem>>, vector<256x128xbf16>
    tpu.vector_store %arg18[%c0_39, %c128], %37 {strides = array<i32>} : memref<256x1152xbf16, #tpu.memory_space<vmem>>, vector<256x128xbf16>,
    %c0_40 = arith.constant 0 : index
    %c2 = arith.constant 2 : index
    %c0_41 = arith.constant 0 : index
    %39 = vector.load %arg17[%c0_40, %c2, %c0_41] : memref<18x18x128xbf16, #tpu.memory_space<vmem>>, vector<16x16x128xbf16>
    %40 = vector.shape_cast %39 : vector<16x16x128xbf16> to vector<256x128xbf16>
    %c0_42 = arith.constant 0 : index
    %c256 = arith.constant 256 : index
    %41 = vector.load %arg18[%c0_42, %c256] : memref<256x1152xbf16, #tpu.memory_space<vmem>>, vector<256x128xbf16>
    tpu.vector_store %arg18[%c0_42, %c256], %40 {strides = array<i32>} : memref<256x1152xbf16, #tpu.memory_space<vmem>>, vector<256x128xbf16>,
    %c1_43 = arith.constant 1 : index
    %c0_44 = arith.constant 0 : index
    %c0_45 = arith.constant 0 : index
    %42 = vector.load %arg17[%c1_43, %c0_44, %c0_45] : memref<18x18x128xbf16, #tpu.memory_space<vmem>>, vector<16x16x128xbf16>
    %43 = vector.shape_cast %42 : vector<16x16x128xbf16> to vector<256x128xbf16>
    %c0_46 = arith.constant 0 : index
    %c384 = arith.constant 384 : index
    %44 = vector.load %arg18[%c0_46, %c384] : memref<256x1152xbf16, #tpu.memory_space<vmem>>, vector<256x128xbf16>
    tpu.vector_store %arg18[%c0_46, %c384], %43 {strides = array<i32>} : memref<256x1152xbf16, #tpu.memory_space<vmem>>, vector<256x128xbf16>,
    %c1_47 = arith.constant 1 : index
    %c1_48 = arith.constant 1 : index
    %c0_49 = arith.constant 0 : index
    %45 = vector.load %arg17[%c1_47, %c1_48, %c0_49] : memref<18x18x128xbf16, #tpu.memory_space<vmem>>, vector<16x16x128xbf16>
    %46 = vector.shape_cast %45 : vector<16x16x128xbf16> to vector<256x128xbf16>
    %c0_50 = arith.constant 0 : index
    %c512 = arith.constant 512 : index
    %47 = vector.load %arg18[%c0_50, %c512] : memref<256x1152xbf16, #tpu.memory_space<vmem>>, vector<256x128xbf16>
    tpu.vector_store %arg18[%c0_50, %c512], %46 {strides = array<i32>} : memref<256x1152xbf16, #tpu.memory_space<vmem>>, vector<256x128xbf16>,
    %c1_51 = arith.constant 1 : index
    %c2_52 = arith.constant 2 : index
    %c0_53 = arith.constant 0 : index
    %48 = vector.load %arg17[%c1_51, %c2_52, %c0_53] : memref<18x18x128xbf16, #tpu.memory_space<vmem>>, vector<16x16x128xbf16>
    %49 = vector.shape_cast %48 : vector<16x16x128xbf16> to vector<256x128xbf16>
    %c0_54 = arith.constant 0 : index
    %c640 = arith.constant 640 : index
    %50 = vector.load %arg18[%c0_54, %c640] : memref<256x1152xbf16, #tpu.memory_space<vmem>>, vector<256x128xbf16>
    tpu.vector_store %arg18[%c0_54, %c640], %49 {strides = array<i32>} : memref<256x1152xbf16, #tpu.memory_space<vmem>>, vector<256x128xbf16>,
    %c2_55 = arith.constant 2 : index
    %c0_56 = arith.constant 0 : index
    %c0_57 = arith.constant 0 : index
    %51 = vector.load %arg17[%c2_55, %c0_56, %c0_57] : memref<18x18x128xbf16, #tpu.memory_space<vmem>>, vector<16x16x128xbf16>
    %52 = vector.shape_cast %51 : vector<16x16x128xbf16> to vector<256x128xbf16>
    %c0_58 = arith.constant 0 : index
    %c768 = arith.constant 768 : index
    %53 = vector.load %arg18[%c0_58, %c768] : memref<256x1152xbf16, #tpu.memory_space<vmem>>, vector<256x128xbf16>
    tpu.vector_store %arg18[%c0_58, %c768], %52 {strides = array<i32>} : memref<256x1152xbf16, #tpu.memory_space<vmem>>, vector<256x128xbf16>,
    %c2_59 = arith.constant 2 : index
    %c1_60 = arith.constant 1 : index
    %c0_61 = arith.constant 0 : index
    %54 = vector.load %arg17[%c2_59, %c1_60, %c0_61] : memref<18x18x128xbf16, #tpu.memory_space<vmem>>, vector<16x16x128xbf16>
    %55 = vector.shape_cast %54 : vector<16x16x128xbf16> to vector<256x128xbf16>
    %c0_62 = arith.constant 0 : index
    %c896 = arith.constant 896 : index
    %56 = vector.load %arg18[%c0_62, %c896] : memref<256x1152xbf16, #tpu.memory_space<vmem>>, vector<256x128xbf16>
    tpu.vector_store %arg18[%c0_62, %c896], %55 {strides = array<i32>} : memref<256x1152xbf16, #tpu.memory_space<vmem>>, vector<256x128xbf16>,
    %c2_63 = arith.constant 2 : index
    %c2_64 = arith.constant 2 : index
    %c0_65 = arith.constant 0 : index
    %57 = vector.load %arg17[%c2_63, %c2_64, %c0_65] : memref<18x18x128xbf16, #tpu.memory_space<vmem>>, vector<16x16x128xbf16>
    %58 = vector.shape_cast %57 : vector<16x16x128xbf16> to vector<256x128xbf16>
    %c0_66 = arith.constant 0 : index
    %c1024 = arith.constant 1024 : index
    %59 = vector.load %arg18[%c0_66, %c1024] : memref<256x1152xbf16, #tpu.memory_space<vmem>>, vector<256x128xbf16>
    tpu.vector_store %arg18[%c0_66, %c1024], %58 {strides = array<i32>} : memref<256x1152xbf16, #tpu.memory_space<vmem>>, vector<256x128xbf16>,
    %c0_67 = arith.constant 0 : index
    %c0_68 = arith.constant 0 : index
    %60 = vector.load %arg18[%c0_67, %c0_68] : memref<256x1152xbf16, #tpu.memory_space<vmem>>, vector<256x1152xbf16>
    %c0_69 = arith.constant 0 : index
    %c0_70 = arith.constant 0 : index
    %61 = vector.load %arg8[%c0_69, %c0_70] : memref<1152x128xbf16, #tpu.memory_space<vmem>>, vector<1152x128xbf16>
    %cst_71 = arith.constant dense<0.000000e+00> : vector<256x128xf32>
    %62 = tpu.matmul %60, %61, %cst_71 {dimension_numbers = #tpu.dot_dimension_numbers<[1], [0], [0], [1], [0, 0, 1, 1], [], []>} : vector<256x1152xbf16>, vector<1152x128xbf16>, vector<256x128xf32> -> vector<256x128xf32>
    %c0_72 = arith.constant 0 : index
    %c0_73 = arith.constant 0 : index
    %63 = vector.load %arg9[%c0_72, %c0_73] : memref<1x128xf32, #tpu.memory_space<vmem>>, vector<1x128xf32>
    %64 = vector.broadcast %63 : vector<1x128xf32> to vector<256x128xf32>
    %65 = arith.addf %62, %64 : vector<256x128xf32>
    %c0_74 = arith.constant 0 : index
    %c0_75 = arith.constant 0 : index
    %66 = vector.load %arg10[%c0_74, %c0_75] : memref<1x128xf32, #tpu.memory_space<vmem>>, vector<1x128xf32>
    %67 = vector.broadcast %66 : vector<1x128xf32> to vector<256x128xf32>
    %68 = arith.mulf %65, %67 : vector<256x128xf32>
    %c0_76 = arith.constant 0 : index
    %c0_77 = arith.constant 0 : index
    %69 = vector.load %arg11[%c0_76, %c0_77] : memref<1x128xf32, #tpu.memory_space<vmem>>, vector<1x128xf32>
    %70 = vector.broadcast %69 : vector<1x128xf32> to vector<256x128xf32>
    %71 = arith.addf %68, %70 : vector<256x128xf32>
    %cst_78 = arith.constant 0.000000e+00 : f32
    %72 = vector.broadcast %cst_78 : f32 to vector<256x128xf32>
    %73 = arith.maximumf %71, %72 : vector<256x128xf32>
    %74 = arith.truncf %73 : vector<256x128xf32> to vector<256x128xbf16>
    %c0_79 = arith.constant 0 : index
    %c0_80 = arith.constant 0 : index
    %75 = vector.load %arg12[%c0_79, %c0_80] : memref<128x128xbf16, #tpu.memory_space<vmem>>, vector<128x128xbf16>
    %cst_81 = arith.constant dense<0.000000e+00> : vector<256x128xf32>
    %76 = tpu.matmul %74, %75, %cst_81 {dimension_numbers = #tpu.dot_dimension_numbers<[1], [0], [0], [1], [0, 0, 1, 1], [], []>} : vector<256x128xbf16>, vector<128x128xbf16>, vector<256x128xf32> -> vector<256x128xf32>
    %c0_82 = arith.constant 0 : index
    %c0_83 = arith.constant 0 : index
    %77 = vector.load %arg13[%c0_82, %c0_83] : memref<1x128xf32, #tpu.memory_space<vmem>>, vector<1x128xf32>
    %78 = vector.broadcast %77 : vector<1x128xf32> to vector<256x128xf32>
    %79 = arith.addf %76, %78 : vector<256x128xf32>
    %80 = arith.truncf %1 : vector<256x128xf32> to vector<256x128xbf16>
    %c0_84 = arith.constant 0 : index
    %c0_85 = arith.constant 0 : index
    %81 = vector.load %arg14[%c0_84, %c0_85] : memref<128x128xbf16, #tpu.memory_space<vmem>>, vector<128x128xbf16>
    %cst_86 = arith.constant dense<0.000000e+00> : vector<256x128xf32>
    %82 = tpu.matmul %80, %81, %cst_86 {dimension_numbers = #tpu.dot_dimension_numbers<[1], [0], [0], [1], [0, 0, 1, 1], [], []>} : vector<256x128xbf16>, vector<128x128xbf16>, vector<256x128xf32> -> vector<256x128xf32>
    %c0_87 = arith.constant 0 : index
    %c0_88 = arith.constant 0 : index
    %83 = vector.load %arg15[%c0_87, %c0_88] : memref<1x128xf32, #tpu.memory_space<vmem>>, vector<1x128xf32>
    %84 = vector.broadcast %83 : vector<1x128xf32> to vector<256x128xf32>
    %85 = arith.addf %82, %84 : vector<256x128xf32>
    %86 = arith.addf %79, %85 : vector<256x128xf32>
    %c0_89 = arith.constant 0 : index
    %c0_90 = arith.constant 0 : index
    %c0_91 = arith.constant 0 : index
    %87 = vector.load %arg16[%c0_89, %c0_90, %c0_91] : memref<1x256x128xf32, #tpu.memory_space<vmem>>, vector<1x256x128xf32>
    %88 = vector.shape_cast %87 : vector<1x256x128xf32> to vector<256x128xf32>
    %89 = vector.shape_cast %86 : vector<256x128xf32> to vector<1x256x128xf32>
    tpu.vector_store %arg16[%c0_89, %c0_90, %c0_91], %89 {strides = array<i32>} : memref<1x256x128xf32, #tpu.memory_space<vmem>>, vector<1x256x128xf32>,
    return
  }
  func.func @transform_0(%arg0: i32) -> (i32, i32, i32) {
    %c0_i32 = arith.constant 0 : i32
    %c0_i32_0 = arith.constant 0 : i32
    %c0_i32_1 = arith.constant 0 : i32
    return %arg0, %c0_i32, %c0_i32_0 : i32, i32, i32
  }
  func.func @transform_1(%arg0: i32) -> (i32, i32) {
    %c0_i32 = arith.constant 0 : i32
    %c0_i32_0 = arith.constant 0 : i32
    %c0_i32_1 = arith.constant 0 : i32
    return %c0_i32, %c0_i32_0 : i32, i32
  }
  func.func @transform_2(%arg0: i32) -> (i32, i32) {
    %c0_i32 = arith.constant 0 : i32
    %c0_i32_0 = arith.constant 0 : i32
    %c0_i32_1 = arith.constant 0 : i32
    return %c0_i32, %c0_i32_0 : i32, i32
  }
  func.func @transform_3(%arg0: i32) -> (i32, i32) {
    %c0_i32 = arith.constant 0 : i32
    %c0_i32_0 = arith.constant 0 : i32
    %c0_i32_1 = arith.constant 0 : i32
    return %c0_i32, %c0_i32_0 : i32, i32
  }
  func.func @transform_4(%arg0: i32) -> (i32, i32) {
    %c0_i32 = arith.constant 0 : i32
    %c0_i32_0 = arith.constant 0 : i32
    %c0_i32_1 = arith.constant 0 : i32
    return %c0_i32, %c0_i32_0 : i32, i32
  }
  func.func @transform_5(%arg0: i32) -> (i32, i32) {
    %c0_i32 = arith.constant 0 : i32
    %c0_i32_0 = arith.constant 0 : i32
    %c0_i32_1 = arith.constant 0 : i32
    return %c0_i32, %c0_i32_0 : i32, i32
  }
  func.func @transform_6(%arg0: i32) -> (i32, i32) {
    %c0_i32 = arith.constant 0 : i32
    %c0_i32_0 = arith.constant 0 : i32
    %c0_i32_1 = arith.constant 0 : i32
    return %c0_i32, %c0_i32_0 : i32, i32
  }
  func.func @transform_7(%arg0: i32) -> (i32, i32) {
    %c0_i32 = arith.constant 0 : i32
    %c0_i32_0 = arith.constant 0 : i32
    %c0_i32_1 = arith.constant 0 : i32
    return %c0_i32, %c0_i32_0 : i32, i32
  }
  func.func @transform_8(%arg0: i32) -> (i32, i32) {
    %c0_i32 = arith.constant 0 : i32
    %c0_i32_0 = arith.constant 0 : i32
    %c0_i32_1 = arith.constant 0 : i32
    return %c0_i32, %c0_i32_0 : i32, i32
  }
  func.func @transform_9(%arg0: i32) -> (i32, i32) {
    %c0_i32 = arith.constant 0 : i32
    %c0_i32_0 = arith.constant 0 : i32
    %c0_i32_1 = arith.constant 0 : i32
    return %c0_i32, %c0_i32_0 : i32, i32
  }
  func.func @transform_10(%arg0: i32) -> (i32, i32) {
    %c0_i32 = arith.constant 0 : i32
    %c0_i32_0 = arith.constant 0 : i32
    %c0_i32_1 = arith.constant 0 : i32
    return %c0_i32, %c0_i32_0 : i32, i32
  }
  func.func @transform_11(%arg0: i32) -> (i32, i32) {
    %c0_i32 = arith.constant 0 : i32
    %c0_i32_0 = arith.constant 0 : i32
    %c0_i32_1 = arith.constant 0 : i32
    return %c0_i32, %c0_i32_0 : i32, i32
  }
  func.func @transform_12(%arg0: i32) -> (i32, i32) {
    %c0_i32 = arith.constant 0 : i32
    %c0_i32_0 = arith.constant 0 : i32
    %c0_i32_1 = arith.constant 0 : i32
    return %c0_i32, %c0_i32_0 : i32, i32
  }
  func.func @transform_13(%arg0: i32) -> (i32, i32) {
    %c0_i32 = arith.constant 0 : i32
    %c0_i32_0 = arith.constant 0 : i32
    %c0_i32_1 = arith.constant 0 : i32
    return %c0_i32, %c0_i32_0 : i32, i32
  }
  func.func @transform_14(%arg0: i32) -> (i32, i32) {
    %c0_i32 = arith.constant 0 : i32
    %c0_i32_0 = arith.constant 0 : i32
    %c0_i32_1 = arith.constant 0 : i32
    return %c0_i32, %c0_i32_0 : i32, i32
  }
  func.func @transform_15(%arg0: i32) -> (i32, i32, i32) {
    %c0_i32 = arith.constant 0 : i32
    %c0_i32_0 = arith.constant 0 : i32
    %c0_i32_1 = arith.constant 0 : i32
    return %arg0, %c0_i32, %c0_i32_0 : i32, i32, i32
  }
}

</mosaic_0001>

<llo_original>
// kernel: preact_residual_unit.1
$region0: #{preact_residual_unit.1}
  #allocation0 [shape = 'u32[]', space=smem, size = 0x4, offset = 0x4, fixed_abs, tag = 'smem constant byte address 0x4 - core index']
  #allocation1 [shape = 'u32[72,128]{1,0:T(1,128)}', space=vmem, size = 0x9000, scoped, tag = 'internal scratch']
  #allocation2 [shape = 'bf16[18,18,128]{2,1,0:T(8,128)(2,1)}', space=vmem, size = 0x1b000, scoped, tag = 'scratch operand']
  #allocation3 [shape = 'bf16[256,1152]{1,0:T(8,128)(2,1)}', space=vmem, size = 0x90000, scoped, tag = 'scratch operand']
  %s0 = inlined_call_operand.vmem [shape: f32[2,256,128], index: 0, kind: input, shape index: {}]
  %s1 = inlined_call_operand.vmem [shape: f32[1,128], index: 1, kind: input, shape index: {}]
  %s2 = inlined_call_operand.vmem [shape: f32[1,128], index: 2, kind: input, shape index: {}]
  %s3 = inlined_call_operand.vmem [shape: bf16[128,128], index: 3, kind: input, shape index: {}]
  %s4 = inlined_call_operand.vmem [shape: f32[1,128], index: 4, kind: input, shape index: {}]
  %s5 = inlined_call_operand.vmem [shape: f32[1,128], index: 5, kind: input, shape index: {}]
  %s6 = inlined_call_operand.vmem [shape: f32[1,128], index: 6, kind: input, shape index: {}]
  %s7 = inlined_call_operand.vmem [shape: bf16[1152,128], index: 7, kind: input, shape index: {}]
  %s8 = inlined_call_operand.vmem [shape: f32[1,128], index: 8, kind: input, shape index: {}]
  %s9 = inlined_call_operand.vmem [shape: f32[1,128], index: 9, kind: input, shape index: {}]
  %s10 = inlined_call_operand.vmem [shape: f32[1,128], index: 10, kind: input, shape index: {}]
  %s11 = inlined_call_operand.vmem [shape: bf16[128,128], index: 11, kind: input, shape index: {}]
  %s12 = inlined_call_operand.vmem [shape: f32[1,128], index: 12, kind: input, shape index: {}]
  %s13 = inlined_call_operand.vmem [shape: bf16[128,128], index: 13, kind: input, shape index: {}]
  %s14 = inlined_call_operand.vmem [shape: f32[1,128], index: 14, kind: input, shape index: {}]
  %s15 = inlined_call_operand.hbm [shape: f32[2,256,128], index: 15, kind: output, shape index: {}]
  %s16 = sld [smem:[#allocation0]]
  $region93: #{preact_residual_unit.1} parent=0
    _
  %s18 = ssub.s32 1, %s16
  %s19 = scalar_select 0, %s18, %s16
  $region1: #{preact_residual_unit.1} parent=0
    #allocation4 [shape = 'u8[262144]{0}', space=vmem, size = 0x40000, scoped, tag = 'output window, operand 0']
    #allocation5 [shape = 's32[2]{0}', space=sflag, size = 0x8, scoped, tag = 'scoped memory for preact_residual_unit.1']
    %20 = vsyncpa [#allocation5], 0
    %s21 = scalar_lea.sflag [#allocation5], 1
    %22 = vsyncpa %s21, 0
    loop: start=0, step=1, limit=4
    $region2: #{preact_residual_unit.1} parent=1 // loop_pre_header
      _
    $region3: #{preact_residual_unit.1} parent=1 // loop_header
      %s24 = sphi 0, %s28
      %p25 = scmp.ge.s32.totalorder %s24, 4
      %s34 = sphi 0, %s36
      %s37 = sphi 0, %s34
      %s38 = sphi 0, %s37
      %s54 = sphi 0, %s38
      %s58 = sphi 0, %s58
      %s60 = sphi 0, %s58
      %s61 = sphi 0, %s60
      %s75 = sphi 0, %s61
      %s79 = sphi 0, %s79
      %s81 = sphi 0, %s79
      %s82 = sphi 0, %s81
      %s96 = sphi 0, %s82
      %s100 = sphi 0, %s100
      %s102 = sphi 0, %s100
      %s103 = sphi 0, %s102
      %s117 = sphi 0, %s103
      %s121 = sphi 0, %s121
      %s123 = sphi 0, %s121
      %s124 = sphi 0, %s123
      %s138 = sphi 0, %s124
      %s142 = sphi 0, %s142
      %s144 = sphi 0, %s142
      %s145 = sphi 0, %s144
      %s159 = sphi 0, %s145
      %s163 = sphi 0, %s163
      %s165 = sphi 0, %s163
      %s166 = sphi 0, %s165
      %s180 = sphi 0, %s166
      %s184 = sphi 0, %s184
      %s186 = sphi 0, %s184
      %s187 = sphi 0, %s186
      %s201 = sphi 0, %s187
      %s205 = sphi 0, %s205
      %s207 = sphi 0, %s205
      %s208 = sphi 0, %s207
      %s222 = sphi 0, %s208
      %s226 = sphi 0, %s226
      %s228 = sphi 0, %s226
      %s229 = sphi 0, %s228
      %s243 = sphi 0, %s229
      %s247 = sphi 0, %s247
      %s249 = sphi 0, %s247
      %s250 = sphi 0, %s249
      %s264 = sphi 0, %s250
      %s268 = sphi 0, %s268
      %s270 = sphi 0, %s268
      %s271 = sphi 0, %s270
      %s285 = sphi 0, %s271
      %s289 = sphi 0, %s289
      %s291 = sphi 0, %s289
      %s292 = sphi 0, %s291
      %s306 = sphi 0, %s292
      %s310 = sphi 0, %s310
      %s312 = sphi 0, %s310
      %s313 = sphi 0, %s312
      %s327 = sphi 0, %s313
      %s331 = sphi 0, %s331
      %s333 = sphi 0, %s331
      %s334 = sphi 0, %s333
      %s348 = sphi 0, %s334
      %s354 = sphi 0, %s356
      %s357 = sphi 0, %s354
      %s358 = sphi 0, %s357
      %s374 = sphi 0, %s358
    $region4: #{preact_residual_unit.1} parent=1 // loop_header_branch
      %27 = sbr.rel (%p25) target = $region8
    $region5: #{preact_residual_unit.1} parent=1 // loop_body
      %s29 = ssub.s32 %s24, 1
      %s30 = ssub.s32 %s24, 2
      %s31 = sadd.s32 %s24, 1
      %s32 = ssub.s32 %s24, %s31
      %p33 = scmp.eq.s32.totalorder %s32, 0
      %s35 = sadd.s32 %s34, 1
      %s36 = scalar_select %p33, %s34, %s35
      %p39 = pneg %p33
      %p40 = scmp.eq.s32.totalorder %s24, 1
      %p41 = por %p39, %p40
      %p42 = scmp.ne.s32.totalorder %s34, %s37
      %p43 = scmp.eq.s32.totalorder %s24, 0
      %p44 = por %p42, %p43
      %p45 = scmp.ne.s32.totalorder %s34, %s37
      %p46 = scmp.eq.s32.totalorder %s29, 1
      %p47 = por %p45, %p46
      %p48 = scmp.ne.s32.totalorder %s37, %s38
      %p49 = scmp.eq.s32.totalorder %s29, 0
      %p50 = por %p48, %p49
      %p51 = scmp.ne.s32.totalorder %s37, %s38
      %p52 = scmp.eq.s32.totalorder %s30, 1
      %p53 = por %p51, %p52
      %p55 = scmp.ne.s32.totalorder %s38, %s54
      %p56 = scmp.eq.s32.totalorder %s30, 0
      %p57 = por %p55, %p56
      %s59 = sadd.s32 %s58, 1
      %p62 = scmp.eq.s32.totalorder %s24, 1
      %p63 = scmp.ne.s32.totalorder %s58, %s60
      %p64 = scmp.eq.s32.totalorder %s24, 0
      %p65 = por %p63, %p64
      %p66 = scmp.ne.s32.totalorder %s58, %s60
      %p67 = scmp.eq.s32.totalorder %s29, 1
      %p68 = por %p66, %p67
      %p69 = scmp.ne.s32.totalorder %s60, %s61
      %p70 = scmp.eq.s32.totalorder %s29, 0
      %p71 = por %p69, %p70
      %p72 = scmp.ne.s32.totalorder %s60, %s61
      %p73 = scmp.eq.s32.totalorder %s30, 1
      %p74 = por %p72, %p73
      %p76 = scmp.ne.s32.totalorder %s61, %s75
      %p77 = scmp.eq.s32.totalorder %s30, 0
      %p78 = por %p76, %p77
      %s80 = sadd.s32 %s79, 1
      %p83 = scmp.eq.s32.totalorder %s24, 1
      %p84 = scmp.ne.s32.totalorder %s79, %s81
      %p85 = scmp.eq.s32.totalorder %s24, 0
      %p86 = por %p84, %p85
      %p87 = scmp.ne.s32.totalorder %s79, %s81
      %p88 = scmp.eq.s32.totalorder %s29, 1
      %p89 = por %p87, %p88
      %p90 = scmp.ne.s32.totalorder %s81, %s82
      %p91 = scmp.eq.s32.totalorder %s29, 0
      %p92 = por %p90, %p91
      %p93 = scmp.ne.s32.totalorder %s81, %s82
      %p94 = scmp.eq.s32.totalorder %s30, 1
      %p95 = por %p93, %p94
      %p97 = scmp.ne.s32.totalorder %s82, %s96
      %p98 = scmp.eq.s32.totalorder %s30, 0
      %p99 = por %p97, %p98
      %s101 = sadd.s32 %s100, 1
      %p104 = scmp.eq.s32.totalorder %s24, 1
      %p105 = scmp.ne.s32.totalorder %s100, %s102
      %p106 = scmp.eq.s32.totalorder %s24, 0
      %p107 = por %p105, %p106
      %p108 = scmp.ne.s32.totalorder %s100, %s102
      %p109 = scmp.eq.s32.totalorder %s29, 1
      %p110 = por %p108, %p109
      %p111 = scmp.ne.s32.totalorder %s102, %s103
      %p112 = scmp.eq.s32.totalorder %s29, 0
      %p113 = por %p111, %p112
      %p114 = scmp.ne.s32.totalorder %s102, %s103
      %p115 = scmp.eq.s32.totalorder %s30, 1
      %p116 = por %p114, %p115
      %p118 = scmp.ne.s32.totalorder %s103, %s117
      %p119 = scmp.eq.s32.totalorder %s30, 0
      %p120 = por %p118, %p119
      %s122 = sadd.s32 %s121, 1
      %p125 = scmp.eq.s32.totalorder %s24, 1
      %p126 = scmp.ne.s32.totalorder %s121, %s123
      %p127 = scmp.eq.s32.totalorder %s24, 0
      %p128 = por %p126, %p127
      %p129 = scmp.ne.s32.totalorder %s121, %s123
      %p130 = scmp.eq.s32.totalorder %s29, 1
      %p131 = por %p129, %p130
      %p132 = scmp.ne.s32.totalorder %s123, %s124
      %p133 = scmp.eq.s32.totalorder %s29, 0
      %p134 = por %p132, %p133
      %p135 = scmp.ne.s32.totalorder %s123, %s124
      %p136 = scmp.eq.s32.totalorder %s30, 1
      %p137 = por %p135, %p136
      %p139 = scmp.ne.s32.totalorder %s124, %s138
      %p140 = scmp.eq.s32.totalorder %s30, 0
      %p141 = por %p139, %p140
      %s143 = sadd.s32 %s142, 1
      %p146 = scmp.eq.s32.totalorder %s24, 1
      %p147 = scmp.ne.s32.totalorder %s142, %s144
      %p148 = scmp.eq.s32.totalorder %s24, 0
      %p149 = por %p147, %p148
      %p150 = scmp.ne.s32.totalorder %s142, %s144
      %p151 = scmp.eq.s32.totalorder %s29, 1
      %p152 = por %p150, %p151
      %p153 = scmp.ne.s32.totalorder %s144, %s145
      %p154 = scmp.eq.s32.totalorder %s29, 0
      %p155 = por %p153, %p154
      %p156 = scmp.ne.s32.totalorder %s144, %s145
      %p157 = scmp.eq.s32.totalorder %s30, 1
      %p158 = por %p156, %p157
      %p160 = scmp.ne.s32.totalorder %s145, %s159
      %p161 = scmp.eq.s32.totalorder %s30, 0
      %p162 = por %p160, %p161
      %s164 = sadd.s32 %s163, 1
      %p167 = scmp.eq.s32.totalorder %s24, 1
      %p168 = scmp.ne.s32.totalorder %s163, %s165
      %p169 = scmp.eq.s32.totalorder %s24, 0
      %p170 = por %p168, %p169
      %p171 = scmp.ne.s32.totalorder %s163, %s165
      %p172 = scmp.eq.s32.totalorder %s29, 1
      %p173 = por %p171, %p172
      %p174 = scmp.ne.s32.totalorder %s165, %s166
      %p175 = scmp.eq.s32.totalorder %s29, 0
      %p176 = por %p174, %p175
      %p177 = scmp.ne.s32.totalorder %s165, %s166
      %p178 = scmp.eq.s32.totalorder %s30, 1
      %p179 = por %p177, %p178
      %p181 = scmp.ne.s32.totalorder %s166, %s180
      %p182 = scmp.eq.s32.totalorder %s30, 0
      %p183 = por %p181, %p182
      %s185 = sadd.s32 %s184, 1
      %p188 = scmp.eq.s32.totalorder %s24, 1
      %p189 = scmp.ne.s32.totalorder %s184, %s186
      %p190 = scmp.eq.s32.totalorder %s24, 0
      %p191 = por %p189, %p190
      %p192 = scmp.ne.s32.totalorder %s184, %s186
      %p193 = scmp.eq.s32.totalorder %s29, 1
      %p194 = por %p192, %p193
      %p195 = scmp.ne.s32.totalorder %s186, %s187
      %p196 = scmp.eq.s32.totalorder %s29, 0
      %p197 = por %p195, %p196
      %p198 = scmp.ne.s32.totalorder %s186, %s187
      %p199 = scmp.eq.s32.totalorder %s30, 1
      %p200 = por %p198, %p199
      %p202 = scmp.ne.s32.totalorder %s187, %s201
      %p203 = scmp.eq.s32.totalorder %s30, 0
      %p204 = por %p202, %p203
      %s206 = sadd.s32 %s205, 1
      %p209 = scmp.eq.s32.totalorder %s24, 1
      %p210 = scmp.ne.s32.totalorder %s205, %s207
      %p211 = scmp.eq.s32.totalorder %s24, 0
      %p212 = por %p210, %p211
      %p213 = scmp.ne.s32.totalorder %s205, %s207
      %p214 = scmp.eq.s32.totalorder %s29, 1
      %p215 = por %p213, %p214
      %p216 = scmp.ne.s32.totalorder %s207, %s208
      %p217 = scmp.eq.s32.totalorder %s29, 0
      %p218 = por %p216, %p217
      %p219 = scmp.ne.s32.totalorder %s207, %s208
      %p220 = scmp.eq.s32.totalorder %s30, 1
      %p221 = por %p219, %p220
      %p223 = scmp.ne.s32.totalorder %s208, %s222
      %p224 = scmp.eq.s32.totalorder %s30, 0
      %p225 = por %p223, %p224
      %s227 = sadd.s32 %s226, 1
      %p230 = scmp.eq.s32.totalorder %s24, 1
      %p231 = scmp.ne.s32.totalorder %s226, %s228
      %p232 = scmp.eq.s32.totalorder %s24, 0
      %p233 = por %p231, %p232
      %p234 = scmp.ne.s32.totalorder %s226, %s228
      %p235 = scmp.eq.s32.totalorder %s29, 1
      %p236 = por %p234, %p235
      %p237 = scmp.ne.s32.totalorder %s228, %s229
      %p238 = scmp.eq.s32.totalorder %s29, 0
      %p239 = por %p237, %p238
      %p240 = scmp.ne.s32.totalorder %s228, %s229
      %p241 = scmp.eq.s32.totalorder %s30, 1
      %p242 = por %p240, %p241
      %p244 = scmp.ne.s32.totalorder %s229, %s243
      %p245 = scmp.eq.s32.totalorder %s30, 0
      %p246 = por %p244, %p245
      %s248 = sadd.s32 %s247, 1
      %p251 = scmp.eq.s32.totalorder %s24, 1
      %p252 = scmp.ne.s32.totalorder %s247, %s249
      %p253 = scmp.eq.s32.totalorder %s24, 0
      %p254 = por %p252, %p253
      %p255 = scmp.ne.s32.totalorder %s247, %s249
      %p256 = scmp.eq.s32.totalorder %s29, 1
      %p257 = por %p255, %p256
      %p258 = scmp.ne.s32.totalorder %s249, %s250
      %p259 = scmp.eq.s32.totalorder %s29, 0
      %p260 = por %p258, %p259
      %p261 = scmp.ne.s32.totalorder %s249, %s250
      %p262 = scmp.eq.s32.totalorder %s30, 1
      %p263 = por %p261, %p262
      %p265 = scmp.ne.s32.totalorder %s250, %s264
      %p266 = scmp.eq.s32.totalorder %s30, 0
      %p267 = por %p265, %p266
      %s269 = sadd.s32 %s268, 1
      %p272 = scmp.eq.s32.totalorder %s24, 1
      %p273 = scmp.ne.s32.totalorder %s268, %s270
      %p274 = scmp.eq.s32.totalorder %s24, 0
      %p275 = por %p273, %p274
      %p276 = scmp.ne.s32.totalorder %s268, %s270
      %p277 = scmp.eq.s32.totalorder %s29, 1
      %p278 = por %p276, %p277
      %p279 = scmp.ne.s32.totalorder %s270, %s271
      %p280 = scmp.eq.s32.totalorder %s29, 0
      %p281 = por %p279, %p280
      %p282 = scmp.ne.s32.totalorder %s270, %s271
      %p283 = scmp.eq.s32.totalorder %s30, 1
      %p284 = por %p282, %p283
      %p286 = scmp.ne.s32.totalorder %s271, %s285
      %p287 = scmp.eq.s32.totalorder %s30, 0
      %p288 = por %p286, %p287
      %s290 = sadd.s32 %s289, 1
      %p293 = scmp.eq.s32.totalorder %s24, 1
      %p294 = scmp.ne.s32.totalorder %s289, %s291
      %p295 = scmp.eq.s32.totalorder %s24, 0
      %p296 = por %p294, %p295
      %p297 = scmp.ne.s32.totalorder %s289, %s291
      %p298 = scmp.eq.s32.totalorder %s29, 1
      %p299 = por %p297, %p298
      %p300 = scmp.ne.s32.totalorder %s291, %s292
      %p301 = scmp.eq.s32.totalorder %s29, 0
      %p302 = por %p300, %p301
      %p303 = scmp.ne.s32.totalorder %s291, %s292
      %p304 = scmp.eq.s32.totalorder %s30, 1
      %p305 = por %p303, %p304
      %p307 = scmp.ne.s32.totalorder %s292, %s306
      %p308 = scmp.eq.s32.totalorder %s30, 0
      %p309 = por %p307, %p308
      %s311 = sadd.s32 %s310, 1
      %p314 = scmp.eq.s32.totalorder %s24, 1
      %p315 = scmp.ne.s32.totalorder %s310, %s312
      %p316 = scmp.eq.s32.totalorder %s24, 0
      %p317 = por %p315, %p316
      %p318 = scmp.ne.s32.totalorder %s310, %s312
      %p319 = scmp.eq.s32.totalorder %s29, 1
      %p320 = por %p318, %p319
      %p321 = scmp.ne.s32.totalorder %s312, %s313
      %p322 = scmp.eq.s32.totalorder %s29, 0
      %p323 = por %p321, %p322
      %p324 = scmp.ne.s32.totalorder %s312, %s313
      %p325 = scmp.eq.s32.totalorder %s30, 1
      %p326 = por %p324, %p325
      %p328 = scmp.ne.s32.totalorder %s313, %s327
      %p329 = scmp.eq.s32.totalorder %s30, 0
      %p330 = por %p328, %p329
      %s332 = sadd.s32 %s331, 1
      %p335 = scmp.eq.s32.totalorder %s24, 1
      %p336 = scmp.ne.s32.totalorder %s331, %s333
      %p337 = scmp.eq.s32.totalorder %s24, 0
      %p338 = por %p336, %p337
      %p339 = scmp.ne.s32.totalorder %s331, %s333
      %p340 = scmp.eq.s32.totalorder %s29, 1
      %p341 = por %p339, %p340
      %p342 = scmp.ne.s32.totalorder %s333, %s334
      %p343 = scmp.eq.s32.totalorder %s29, 0
      %p344 = por %p342, %p343
      %p345 = scmp.ne.s32.totalorder %s333, %s334
      %p346 = scmp.eq.s32.totalorder %s30, 1
      %p347 = por %p345, %p346
      %p349 = scmp.ne.s32.totalorder %s334, %s348
      %p350 = scmp.eq.s32.totalorder %s30, 0
      %p351 = por %p349, %p350
      %s352 = ssub.s32 %s24, %s31
      %p353 = scmp.eq.s32.totalorder %s352, 0
      %s355 = sadd.s32 %s354, 1
      %s356 = scalar_select %p353, %s354, %s355
      %p359 = pneg %p353
      %p360 = scmp.eq.s32.totalorder %s24, 1
      %p361 = por %p359, %p360
      %p362 = scmp.ne.s32.totalorder %s354, %s357
      %p363 = scmp.eq.s32.totalorder %s24, 0
      %p364 = por %p362, %p363
      %p365 = scmp.ne.s32.totalorder %s354, %s357
      %p366 = scmp.eq.s32.totalorder %s29, 1
      %p367 = por %p365, %p366
      %p368 = scmp.ne.s32.totalorder %s357, %s358
      %p369 = scmp.eq.s32.totalorder %s29, 0
      %p370 = por %p368, %p369
      %p371 = scmp.ne.s32.totalorder %s357, %s358
      %p372 = scmp.eq.s32.totalorder %s30, 1
      %p373 = por %p371, %p372
      %p375 = scmp.ne.s32.totalorder %s358, %s374
      %p376 = scmp.eq.s32.totalorder %s30, 0
      %p377 = por %p375, %p376
      %p378 = scmp.le.s32.totalorder 1, %s24
      %p379 = scmp.lt.s32.totalorder %s24, 3
      %p380 = pnand %p378, %p379
      %p381 = pneg %p380
      // Predicated region
      $region9: #{preact_residual_unit.1} parent=5 // pred_check
        _
      $region10: #{preact_residual_unit.1} parent=5 // pred_check_branch
        %383 = sbr.rel (%p380) target = $region12
      $region11: #{preact_residual_unit.1} parent=5 // pred_region
        %s384 = ssub.s32 %s24, 1
        // Predicated region
        $region13: #{preact_residual_unit.1} parent=11 // pred_check
          %p385 = pneg %p71
        $region14: #{preact_residual_unit.1} parent=11 // pred_check_branch
          %387 = sbr.rel (%p385) target = $region16
        $region15: #{preact_residual_unit.1} parent=11 // pred_region
          _
        $region16: #{preact_residual_unit.1} parent=11 // pred_fallthru
          _
        // Predicated region
        $region17: #{preact_residual_unit.1} parent=11 // pred_check
          %p388 = pneg %p92
        $region18: #{preact_residual_unit.1} parent=11 // pred_check_branch
          %390 = sbr.rel (%p388) target = $region20
        $region19: #{preact_residual_unit.1} parent=11 // pred_region
          _
        $region20: #{preact_residual_unit.1} parent=11 // pred_fallthru
          _
        // Predicated region
        $region21: #{preact_residual_unit.1} parent=11 // pred_check
          %p391 = pneg %p113
        $region22: #{preact_residual_unit.1} parent=11 // pred_check_branch
          %393 = sbr.rel (%p391) target = $region24
        $region23: #{preact_residual_unit.1} parent=11 // pred_region
          _
        $region24: #{preact_residual_unit.1} parent=11 // pred_fallthru
          _
        // Predicated region
        $region25: #{preact_residual_unit.1} parent=11 // pred_check
          %p394 = pneg %p134
        $region26: #{preact_residual_unit.1} parent=11 // pred_check_branch
          %396 = sbr.rel (%p394) target = $region28
        $region27: #{preact_residual_unit.1} parent=11 // pred_region
          _
        $region28: #{preact_residual_unit.1} parent=11 // pred_fallthru
          _
        // Predicated region
        $region29: #{preact_residual_unit.1} parent=11 // pred_check
          %p397 = pneg %p155
        $region30: #{preact_residual_unit.1} parent=11 // pred_check_branch
          %399 = sbr.rel (%p397) target = $region32
        $region31: #{preact_residual_unit.1} parent=11 // pred_region
          _
        $region32: #{preact_residual_unit.1} parent=11 // pred_fallthru
          _
        // Predicated region
        $region33: #{preact_residual_unit.1} parent=11 // pred_check
          %p400 = pneg %p176
        $region34: #{preact_residual_unit.1} parent=11 // pred_check_branch
          %402 = sbr.rel (%p400) target = $region36
        $region35: #{preact_residual_unit.1} parent=11 // pred_region
          _
        $region36: #{preact_residual_unit.1} parent=11 // pred_fallthru
          _
        // Predicated region
        $region37: #{preact_residual_unit.1} parent=11 // pred_check
          %p403 = pneg %p197
        $region38: #{preact_residual_unit.1} parent=11 // pred_check_branch
          %405 = sbr.rel (%p403) target = $region40
        $region39: #{preact_residual_unit.1} parent=11 // pred_region
          _
        $region40: #{preact_residual_unit.1} parent=11 // pred_fallthru
          _
        // Predicated region
        $region41: #{preact_residual_unit.1} parent=11 // pred_check
          %p406 = pneg %p218
        $region42: #{preact_residual_unit.1} parent=11 // pred_check_branch
          %408 = sbr.rel (%p406) target = $region44
        $region43: #{preact_residual_unit.1} parent=11 // pred_region
          _
        $region44: #{preact_residual_unit.1} parent=11 // pred_fallthru
          _
        // Predicated region
        $region45: #{preact_residual_unit.1} parent=11 // pred_check
          %p409 = pneg %p239
        $region46: #{preact_residual_unit.1} parent=11 // pred_check_branch
          %411 = sbr.rel (%p409) target = $region48
        $region47: #{preact_residual_unit.1} parent=11 // pred_region
          _
        $region48: #{preact_residual_unit.1} parent=11 // pred_fallthru
          _
        // Predicated region
        $region49: #{preact_residual_unit.1} parent=11 // pred_check
          %p412 = pneg %p260
        $region50: #{preact_residual_unit.1} parent=11 // pred_check_branch
          %414 = sbr.rel (%p412) target = $region52
        $region51: #{preact_residual_unit.1} parent=11 // pred_region
          _
        $region52: #{preact_residual_unit.1} parent=11 // pred_fallthru
          _
        // Predicated region
        $region53: #{preact_residual_unit.1} parent=11 // pred_check
          %p415 = pneg %p281
        $region54: #{preact_residual_unit.1} parent=11 // pred_check_branch
          %417 = sbr.rel (%p415) target = $region56
        $region55: #{preact_residual_unit.1} parent=11 // pred_region
          _
        $region56: #{preact_residual_unit.1} parent=11 // pred_fallthru
          _
        // Predicated region
        $region57: #{preact_residual_unit.1} parent=11 // pred_check
          %p418 = pneg %p302
        $region58: #{preact_residual_unit.1} parent=11 // pred_check_branch
          %420 = sbr.rel (%p418) target = $region60
        $region59: #{preact_residual_unit.1} parent=11 // pred_region
          _
        $region60: #{preact_residual_unit.1} parent=11 // pred_fallthru
          _
        // Predicated region
        $region61: #{preact_residual_unit.1} parent=11 // pred_check
          %p421 = pneg %p323
        $region62: #{preact_residual_unit.1} parent=11 // pred_check_branch
          %423 = sbr.rel (%p421) target = $region64
        $region63: #{preact_residual_unit.1} parent=11 // pred_region
          _
        $region64: #{preact_residual_unit.1} parent=11 // pred_fallthru
          _
        // Predicated region
        $region65: #{preact_residual_unit.1} parent=11 // pred_check
          %p424 = pneg %p344
        $region66: #{preact_residual_unit.1} parent=11 // pred_check_branch
          %426 = sbr.rel (%p424) target = $region68
        $region67: #{preact_residual_unit.1} parent=11 // pred_region
          _
        $region68: #{preact_residual_unit.1} parent=11 // pred_fallthru
          _
      $region12: #{preact_residual_unit.1} parent=5 // pred_fallthru
        _
      %p427 = scmp.lt.s32.totalorder %s24, 2
      // Predicated region
      $region69: #{preact_residual_unit.1} parent=5 // pred_check
        %p428 = pneg %p427
      $region70: #{preact_residual_unit.1} parent=5 // pred_check_branch
        %430 = sbr.rel (%p428) target = $region72
      $region71: #{preact_residual_unit.1} parent=5 // pred_region
        // Predicated region
        $region73: #{preact_residual_unit.1} parent=71 // pred_check
          %p431 = pneg %p44
        $region74: #{preact_residual_unit.1} parent=71 // pred_check_branch
          %433 = sbr.rel (%p431) target = $region76
        $region75: #{preact_residual_unit.1} parent=71 // pred_region
          %p434 = scmp.lt.s32.totalorder %s24, 1
          %s435 = scalar_select %p434, %s24, 1
          %s436 = smul.addr %s435, 32
          %s437 = smul.addr %s436, 8
          %s438 = scalar_lea.vmem %s0, %s437
        $region76: #{preact_residual_unit.1} parent=71 // pred_fallthru
          _
      $region72: #{preact_residual_unit.1} parent=5 // pred_fallthru
        _
      %p439 = scmp.le.s32.totalorder 1, %s24
      %p440 = scmp.lt.s32.totalorder %s24, 3
      %p441 = pnand %p439, %p440
      %p442 = pneg %p441
      // Predicated region
      $region77: #{preact_residual_unit.1} parent=5 // pred_check
        _
      $region78: #{preact_residual_unit.1} parent=5 // pred_check_branch
        %444 = sbr.rel (%p441) target = $region80
      $region79: #{preact_residual_unit.1} parent=5 // pred_region
        %s445 = ssub.s32 %s24, 1
        %p446 = scmp.lt.s32.totalorder %s29, 1
        %s447 = scalar_select %p446, %s29, 1
        %s448 = smul.addr %s447, 32
        %s449 = smul.addr %s448, 8
        %s450 = scalar_lea.vmem %s0, %s449
        %p451 = pneg %p50
        %p452 = pneg %p47
        %p453 = pneg %p71
        %p454 = pneg %p68
        %p455 = pneg %p92
        %p456 = pneg %p89
        %p457 = pneg %p113
        %p458 = pneg %p110
        %p459 = pneg %p134
        %p460 = pneg %p131
        %p461 = pneg %p155
        %p462 = pneg %p152
        %p463 = pneg %p176
        %p464 = pneg %p173
        %p465 = pneg %p197
        %p466 = pneg %p194
        %p467 = pneg %p218
        %p468 = pneg %p215
        %p469 = pneg %p239
        %p470 = pneg %p236
        %p471 = pneg %p260
        %p472 = pneg %p257
        %p473 = pneg %p281
        %p474 = pneg %p278
        %p475 = pneg %p302
        %p476 = pneg %p299
        %p477 = pneg %p323
        %p478 = pneg %p320
        %p479 = pneg %p344
        %p480 = pneg %p341
        %p481 = pneg %p370
        %p482 = pneg %p367
        %s483 = sand.u32 %s357, 1
        %s484 = scalar_lea.sflag [#allocation5], %s483
        %s485 = sand.u32 %s357, 1
        %s486 = smul.addr %s485, 256
        %s487 = scalar_lea.vmem [#allocation4], %s486
        %p488 = scmp.lt.s32.totalorder %s29, 1
        %s489 = scalar_select %p488, %s29, 1
        %s490 = smul.addr %s489, 32
        %s491 = smul.addr %s490, 8
        %s492 = scalar_lea.vmem %s0, %s491
        %v494 = vld [vmem:[%s492] sm:$0xff]
        %v495 = vld [vmem:[%s492 + $0x8] sm:$0xff]
        %v496 = vld [vmem:[%s492 + $0x10] sm:$0xff]
        %v497 = vld [vmem:[%s492 + $0x18] sm:$0xff]
        %v498 = vld [vmem:[%s492 + $0x20] sm:$0xff]
        %v499 = vld [vmem:[%s492 + $0x28] sm:$0xff]
        %v500 = vld [vmem:[%s492 + $0x30] sm:$0xff]
        %v501 = vld [vmem:[%s492 + $0x38] sm:$0xff]
        %v502 = vld [vmem:[%s492 + $0x40] sm:$0xff]
        %v503 = vld [vmem:[%s492 + $0x48] sm:$0xff]
        %v504 = vld [vmem:[%s492 + $0x50] sm:$0xff]
        %v505 = vld [vmem:[%s492 + $0x58] sm:$0xff]
        %v506 = vld [vmem:[%s492 + $0x60] sm:$0xff]
        %v507 = vld [vmem:[%s492 + $0x68] sm:$0xff]
        %v508 = vld [vmem:[%s492 + $0x70] sm:$0xff]
        %v509 = vld [vmem:[%s492 + $0x78] sm:$0xff]
        %v510 = vld [vmem:[%s492 + $0x80] sm:$0xff]
        %v511 = vld [vmem:[%s492 + $0x88] sm:$0xff]
        %v512 = vld [vmem:[%s492 + $0x90] sm:$0xff]
        %v513 = vld [vmem:[%s492 + $0x98] sm:$0xff]
        %v514 = vld [vmem:[%s492 + $0xa0] sm:$0xff]
        %v515 = vld [vmem:[%s492 + $0xa8] sm:$0xff]
        %v516 = vld [vmem:[%s492 + $0xb0] sm:$0xff]
        %v517 = vld [vmem:[%s492 + $0xb8] sm:$0xff]
        %v518 = vld [vmem:[%s492 + $0xc0] sm:$0xff]
        %v519 = vld [vmem:[%s492 + $0xc8] sm:$0xff]
        %v520 = vld [vmem:[%s492 + $0xd0] sm:$0xff]
        %v521 = vld [vmem:[%s492 + $0xd8] sm:$0xff]
        %v522 = vld [vmem:[%s492 + $0xe0] sm:$0xff]
        %v523 = vld [vmem:[%s492 + $0xe8] sm:$0xff]
        %v524 = vld [vmem:[%s492 + $0xf0] sm:$0xff]
        %v525 = vld [vmem:[%s492 + $0xf8] sm:$0xff]
        %v526 = vld [vmem:[%s1] sm:$0x1]
        %v528 = vperm.slane %v526, 0
        %v530 = vmul.f32 %v494, %v528
        %v531 = vmul.f32 %v495, %v528
        %v532 = vmul.f32 %v496, %v528
        %v533 = vmul.f32 %v497, %v528
        %v534 = vmul.f32 %v498, %v528
        %v535 = vmul.f32 %v499, %v528
        %v536 = vmul.f32 %v500, %v528
        %v537 = vmul.f32 %v501, %v528
        %v538 = vmul.f32 %v502, %v528
        %v539 = vmul.f32 %v503, %v528
        %v540 = vmul.f32 %v504, %v528
        %v541 = vmul.f32 %v505, %v528
        %v542 = vmul.f32 %v506, %v528
        %v543 = vmul.f32 %v507, %v528
        %v544 = vmul.f32 %v508, %v528
        %v545 = vmul.f32 %v509, %v528
        %v546 = vmul.f32 %v510, %v528
        %v547 = vmul.f32 %v511, %v528
        %v548 = vmul.f32 %v512, %v528
        %v549 = vmul.f32 %v513, %v528
        %v550 = vmul.f32 %v514, %v528
        %v551 = vmul.f32 %v515, %v528
        %v552 = vmul.f32 %v516, %v528
        %v553 = vmul.f32 %v517, %v528
        %v554 = vmul.f32 %v518, %v528
        %v555 = vmul.f32 %v519, %v528
        %v556 = vmul.f32 %v520, %v528
        %v557 = vmul.f32 %v521, %v528
        %v558 = vmul.f32 %v522, %v528
        %v559 = vmul.f32 %v523, %v528
        %v560 = vmul.f32 %v524, %v528
        %v561 = vmul.f32 %v525, %v528
        %v562 = vld [vmem:[%s2] sm:$0x1]
        %v564 = vperm.slane %v562, 0
        %v566 = vadd.f32 %v530, %v564
        %v567 = vadd.f32 %v531, %v564
        %v568 = vadd.f32 %v532, %v564
        %v569 = vadd.f32 %v533, %v564
        %v570 = vadd.f32 %v534, %v564
        %v571 = vadd.f32 %v535, %v564
        %v572 = vadd.f32 %v536, %v564
        %v573 = vadd.f32 %v537, %v564
        %v574 = vadd.f32 %v538, %v564
        %v575 = vadd.f32 %v539, %v564
        %v576 = vadd.f32 %v540, %v564
        %v577 = vadd.f32 %v541, %v564
        %v578 = vadd.f32 %v542, %v564
        %v579 = vadd.f32 %v543, %v564
        %v580 = vadd.f32 %v544, %v564
        %v581 = vadd.f32 %v545, %v564
        %v582 = vadd.f32 %v546, %v564
        %v583 = vadd.f32 %v547, %v564
        %v584 = vadd.f32 %v548, %v564
        %v585 = vadd.f32 %v549, %v564
        %v586 = vadd.f32 %v550, %v564
        %v587 = vadd.f32 %v551, %v564
        %v588 = vadd.f32 %v552, %v564
        %v589 = vadd.f32 %v553, %v564
        %v590 = vadd.f32 %v554, %v564
        %v591 = vadd.f32 %v555, %v564
        %v592 = vadd.f32 %v556, %v564
        %v593 = vadd.f32 %v557, %v564
        %v594 = vadd.f32 %v558, %v564
        %v595 = vadd.f32 %v559, %v564
        %v596 = vadd.f32 %v560, %v564
        %v597 = vadd.f32 %v561, %v564
        %v598 = vmax.f32 %v566, 0.0
        %v599 = vmax.f32 %v567, 0.0
        %v600 = vmax.f32 %v568, 0.0
        %v601 = vmax.f32 %v569, 0.0
        %v602 = vmax.f32 %v570, 0.0
        %v603 = vmax.f32 %v571, 0.0
        %v604 = vmax.f32 %v572, 0.0
        %v605 = vmax.f32 %v573, 0.0
        %v606 = vmax.f32 %v574, 0.0
        %v607 = vmax.f32 %v575, 0.0
        %v608 = vmax.f32 %v576, 0.0
        %v609 = vmax.f32 %v577, 0.0
        %v610 = vmax.f32 %v578, 0.0
        %v611 = vmax.f32 %v579, 0.0
        %v612 = vmax.f32 %v580, 0.0
        %v613 = vmax.f32 %v581, 0.0
        %v614 = vmax.f32 %v582, 0.0
        %v615 = vmax.f32 %v583, 0.0
        %v616 = vmax.f32 %v584, 0.0
        %v617 = vmax.f32 %v585, 0.0
        %v618 = vmax.f32 %v586, 0.0
        %v619 = vmax.f32 %v587, 0.0
        %v620 = vmax.f32 %v588, 0.0
        %v621 = vmax.f32 %v589, 0.0
        %v622 = vmax.f32 %v590, 0.0
        %v623 = vmax.f32 %v591, 0.0
        %v624 = vmax.f32 %v592, 0.0
        %v625 = vmax.f32 %v593, 0.0
        %v626 = vmax.f32 %v594, 0.0
        %v627 = vmax.f32 %v595, 0.0
        %v628 = vmax.f32 %v596, 0.0
        %v629 = vmax.f32 %v597, 0.0
        %v630 = vpack.c.bf16 %v599, %v598
        %v631 = vpack.c.bf16 %v601, %v600
        %v632 = vpack.c.bf16 %v603, %v602
        %v633 = vpack.c.bf16 %v605, %v604
        %v634 = vpack.c.bf16 %v607, %v606
        %v635 = vpack.c.bf16 %v609, %v608
        %v636 = vpack.c.bf16 %v611, %v610
        %v637 = vpack.c.bf16 %v613, %v612
        %v638 = vpack.c.bf16 %v615, %v614
        %v639 = vpack.c.bf16 %v617, %v616
        %v640 = vpack.c.bf16 %v619, %v618
        %v641 = vpack.c.bf16 %v621, %v620
        %v642 = vpack.c.bf16 %v623, %v622
        %v643 = vpack.c.bf16 %v625, %v624
        %v644 = vpack.c.bf16 %v627, %v626
        %v645 = vpack.c.bf16 %v629, %v628
        %v646 = vld [vmem:[%s3] sm:$0xf]
        %v647 = vld [vmem:[%s3 + $0x4] sm:$0xf]
        %v648 = vld [vmem:[%s3 + $0x8] sm:$0xf]
        %v649 = vld [vmem:[%s3 + $0xc] sm:$0xf]
        %v650 = vld [vmem:[%s3 + $0x10] sm:$0xf]
        %v651 = vld [vmem:[%s3 + $0x14] sm:$0xf]
        %v652 = vld [vmem:[%s3 + $0x18] sm:$0xf]
        %v653 = vld [vmem:[%s3 + $0x1c] sm:$0xf]
        %v654 = vld [vmem:[%s3 + $0x20] sm:$0xf]
        %v655 = vld [vmem:[%s3 + $0x24] sm:$0xf]
        %v656 = vld [vmem:[%s3 + $0x28] sm:$0xf]
        %v657 = vld [vmem:[%s3 + $0x2c] sm:$0xf]
        %v658 = vld [vmem:[%s3 + $0x30] sm:$0xf]
        %v659 = vld [vmem:[%s3 + $0x34] sm:$0xf]
        %v660 = vld [vmem:[%s3 + $0x38] sm:$0xf]
        %v661 = vld [vmem:[%s3 + $0x3c] sm:$0xf]
        %v662 = vld [vmem:[%s4] sm:$0x1]
        %v664 = vperm.slane %v662, 0
        %v682 = vunpack.c.l.b16 %v646
        %v683 = vunpack.c.l.b16 %v647
        %v684 = vunpack.c.l.b16 %v648
        %v685 = vunpack.c.l.b16 %v649
        %v686 = vunpack.c.l.b16 %v650
        %v687 = vunpack.c.l.b16 %v651
        %v688 = vunpack.c.l.b16 %v652
        %v689 = vunpack.c.l.b16 %v653
        %v690 = vunpack.c.l.b16 %v654
        %v691 = vunpack.c.l.b16 %v655
        %v692 = vunpack.c.l.b16 %v656
        %v693 = vunpack.c.l.b16 %v657
        %v694 = vunpack.c.l.b16 %v658
        %v695 = vunpack.c.l.b16 %v659
        %v696 = vunpack.c.l.b16 %v660
        %v697 = vunpack.c.l.b16 %v661
        %v698 = vpack.c.b16 %v683, %v682
        %v699 = vpack.c.b16 %v685, %v684
        %v700 = vpack.c.b16 %v687, %v686
        %v701 = vpack.c.b16 %v689, %v688
        %v702 = vpack.c.b16 %v691, %v690
        %v703 = vpack.c.b16 %v693, %v692
        %v704 = vpack.c.b16 %v695, %v694
        %v705 = vpack.c.b16 %v697, %v696
        %714 = vmatpush.bf16.msra.mxu0 %v705
        %715 = vmatpush.bf16.msra.mxu0 %v704
        %716 = vmatpush.bf16.msra.mxu0 %v703
        %717 = vmatpush.bf16.msra.mxu0 %v702
        %718 = vmatpush.bf16.msra.mxu0 %v701
        %719 = vmatpush.bf16.msra.mxu0 %v700
        %720 = vmatpush.bf16.msra.mxu0 %v699
        %721 = vmatpush.bf16.msra.mxu0 %v698
        %722 = vmatmul.bf16.gmra.mxu0 %v630
        %v723 = vpop.f32.mrf.mxu0
        %v724 = vadd.f32 %v664, %v723
        %v725 = vpop.f32.mrf.mxu0
        %v726 = vadd.f32 %v664, %v725
        %727 = vmatmul.bf16.gmra.mxu0 %v631
        %v728 = vpop.f32.mrf.mxu0
        %v729 = vadd.f32 %v664, %v728
        %v730 = vpop.f32.mrf.mxu0
        %v731 = vadd.f32 %v664, %v730
        %732 = vmatmul.bf16.gmra.mxu0 %v632
        %v733 = vpop.f32.mrf.mxu0
        %v734 = vadd.f32 %v664, %v733
        %v735 = vpop.f32.mrf.mxu0
        %v736 = vadd.f32 %v664, %v735
        %737 = vmatmul.bf16.gmra.mxu0 %v633
        %v738 = vpop.f32.mrf.mxu0
        %v739 = vadd.f32 %v664, %v738
        %v740 = vpop.f32.mrf.mxu0
        %v741 = vadd.f32 %v664, %v740
        %742 = vmatmul.bf16.gmra.mxu0 %v634
        %v743 = vpop.f32.mrf.mxu0
        %v744 = vadd.f32 %v664, %v743
        %v745 = vpop.f32.mrf.mxu0
        %v746 = vadd.f32 %v664, %v745
        %747 = vmatmul.bf16.gmra.mxu0 %v635
        %v748 = vpop.f32.mrf.mxu0
        %v749 = vadd.f32 %v664, %v748
        %v750 = vpop.f32.mrf.mxu0
        %v751 = vadd.f32 %v664, %v750
        %752 = vmatmul.bf16.gmra.mxu0 %v636
        %v753 = vpop.f32.mrf.mxu0
        %v754 = vadd.f32 %v664, %v753
        %v755 = vpop.f32.mrf.mxu0
        %v756 = vadd.f32 %v664, %v755
        %757 = vmatmul.bf16.gmra.mxu0 %v637
        %v758 = vpop.f32.mrf.mxu0
        %v759 = vadd.f32 %v664, %v758
        %v760 = vpop.f32.mrf.mxu0
        %v761 = vadd.f32 %v664, %v760
        %762 = vmatmul.bf16.gmra.mxu0 %v638
        %v763 = vpop.f32.mrf.mxu0
        %v764 = vadd.f32 %v664, %v763
        %v765 = vpop.f32.mrf.mxu0
        %v766 = vadd.f32 %v664, %v765
        %767 = vmatmul.bf16.gmra.mxu0 %v639
        %v768 = vpop.f32.mrf.mxu0
        %v769 = vadd.f32 %v664, %v768
        %v770 = vpop.f32.mrf.mxu0
        %v771 = vadd.f32 %v664, %v770
        %772 = vmatmul.bf16.gmra.mxu0 %v640
        %v773 = vpop.f32.mrf.mxu0
        %v774 = vadd.f32 %v664, %v773
        %v775 = vpop.f32.mrf.mxu0
        %v776 = vadd.f32 %v664, %v775
        %777 = vmatmul.bf16.gmra.mxu0 %v641
        %v778 = vpop.f32.mrf.mxu0
        %v779 = vadd.f32 %v664, %v778
        %v780 = vpop.f32.mrf.mxu0
        %v781 = vadd.f32 %v664, %v780
        %782 = vmatmul.bf16.gmra.mxu0 %v642
        %v783 = vpop.f32.mrf.mxu0
        %v784 = vadd.f32 %v664, %v783
        %v785 = vpop.f32.mrf.mxu0
        %v786 = vadd.f32 %v664, %v785
        %787 = vmatmul.bf16.gmra.mxu0 %v643
        %v788 = vpop.f32.mrf.mxu0
        %v789 = vadd.f32 %v664, %v788
        %v790 = vpop.f32.mrf.mxu0
        %v791 = vadd.f32 %v664, %v790
        %792 = vmatmul.bf16.gmra.mxu0 %v644
        %v793 = vpop.f32.mrf.mxu0
        %v794 = vadd.f32 %v664, %v793
        %v795 = vpop.f32.mrf.mxu0
        %v796 = vadd.f32 %v664, %v795
        %797 = vmatmul.bf16.gmra.mxu0 %v645
        %v798 = vpop.f32.mrf.mxu0
        %v799 = vadd.f32 %v664, %v798
        %v800 = vpop.f32.mrf.mxu0
        %v801 = vadd.f32 %v664, %v800
        %802 = vdwg.mxu0
        %v803 = vld [vmem:[%s5] sm:$0x1]
        %v805 = vperm.slane %v803, 0
        %v807 = vmul.f32 %v724, %v805
        %v808 = vmul.f32 %v726, %v805
        %v809 = vmul.f32 %v729, %v805
        %v810 = vmul.f32 %v731, %v805
        %v811 = vmul.f32 %v734, %v805
        %v812 = vmul.f32 %v736, %v805
        %v813 = vmul.f32 %v739, %v805
        %v814 = vmul.f32 %v741, %v805
        %v815 = vmul.f32 %v744, %v805
        %v816 = vmul.f32 %v746, %v805
        %v817 = vmul.f32 %v749, %v805
        %v818 = vmul.f32 %v751, %v805
        %v819 = vmul.f32 %v754, %v805
        %v820 = vmul.f32 %v756, %v805
        %v821 = vmul.f32 %v759, %v805
        %v822 = vmul.f32 %v761, %v805
        %v823 = vmul.f32 %v764, %v805
        %v824 = vmul.f32 %v766, %v805
        %v825 = vmul.f32 %v769, %v805
        %v826 = vmul.f32 %v771, %v805
        %v827 = vmul.f32 %v774, %v805
        %v828 = vmul.f32 %v776, %v805
        %v829 = vmul.f32 %v779, %v805
        %v830 = vmul.f32 %v781, %v805
        %v831 = vmul.f32 %v784, %v805
        %v832 = vmul.f32 %v786, %v805
        %v833 = vmul.f32 %v789, %v805
        %v834 = vmul.f32 %v791, %v805
        %v835 = vmul.f32 %v794, %v805
        %v836 = vmul.f32 %v796, %v805
        %v837 = vmul.f32 %v799, %v805
        %v838 = vmul.f32 %v801, %v805
        %v839 = vld [vmem:[%s6] sm:$0x1]
        %v841 = vperm.slane %v839, 0
        %v843 = vadd.f32 %v807, %v841
        %v844 = vadd.f32 %v808, %v841
        %v845 = vadd.f32 %v809, %v841
        %v846 = vadd.f32 %v810, %v841
        %v847 = vadd.f32 %v811, %v841
        %v848 = vadd.f32 %v812, %v841
        %v849 = vadd.f32 %v813, %v841
        %v850 = vadd.f32 %v814, %v841
        %v851 = vadd.f32 %v815, %v841
        %v852 = vadd.f32 %v816, %v841
        %v853 = vadd.f32 %v817, %v841
        %v854 = vadd.f32 %v818, %v841
        %v855 = vadd.f32 %v819, %v841
        %v856 = vadd.f32 %v820, %v841
        %v857 = vadd.f32 %v821, %v841
        %v858 = vadd.f32 %v822, %v841
        %v859 = vadd.f32 %v823, %v841
        %v860 = vadd.f32 %v824, %v841
        %v861 = vadd.f32 %v825, %v841
        %v862 = vadd.f32 %v826, %v841
        %v863 = vadd.f32 %v827, %v841
        %v864 = vadd.f32 %v828, %v841
        %v865 = vadd.f32 %v829, %v841
        %v866 = vadd.f32 %v830, %v841
        %v867 = vadd.f32 %v831, %v841
        %v868 = vadd.f32 %v832, %v841
        %v869 = vadd.f32 %v833, %v841
        %v870 = vadd.f32 %v834, %v841
        %v871 = vadd.f32 %v835, %v841
        %v872 = vadd.f32 %v836, %v841
        %v873 = vadd.f32 %v837, %v841
        %v874 = vadd.f32 %v838, %v841
        %v875 = vmax.f32 %v843, 0.0
        %v876 = vmax.f32 %v844, 0.0
        %v877 = vmax.f32 %v845, 0.0
        %v878 = vmax.f32 %v846, 0.0
        %v879 = vmax.f32 %v847, 0.0
        %v880 = vmax.f32 %v848, 0.0
        %v881 = vmax.f32 %v849, 0.0
        %v882 = vmax.f32 %v850, 0.0
        %v883 = vmax.f32 %v851, 0.0
        %v884 = vmax.f32 %v852, 0.0
        %v885 = vmax.f32 %v853, 0.0
        %v886 = vmax.f32 %v854, 0.0
        %v887 = vmax.f32 %v855, 0.0
        %v888 = vmax.f32 %v856, 0.0
        %v889 = vmax.f32 %v857, 0.0
        %v890 = vmax.f32 %v858, 0.0
        %v891 = vmax.f32 %v859, 0.0
        %v892 = vmax.f32 %v860, 0.0
        %v893 = vmax.f32 %v861, 0.0
        %v894 = vmax.f32 %v862, 0.0
        %v895 = vmax.f32 %v863, 0.0
        %v896 = vmax.f32 %v864, 0.0
        %v897 = vmax.f32 %v865, 0.0
        %v898 = vmax.f32 %v866, 0.0
        %v899 = vmax.f32 %v867, 0.0
        %v900 = vmax.f32 %v868, 0.0
        %v901 = vmax.f32 %v869, 0.0
        %v902 = vmax.f32 %v870, 0.0
        %v903 = vmax.f32 %v871, 0.0
        %v904 = vmax.f32 %v872, 0.0
        %v905 = vmax.f32 %v873, 0.0
        %v906 = vmax.f32 %v874, 0.0
        %907 = vst [vmem:[#allocation2] sm:$0xf] 0
        %908 = vst [vmem:[#allocation2 + $0x4] sm:$0xf] 0
        %909 = vst [vmem:[#allocation2 + $0x8] sm:$0x1] 0
        %s910 = scalar_lea.vmem [#allocation2], 204
        %911 = vst [vmem:[%s910] sm:$0xf] 0
        %912 = vst [vmem:[%s910 + $0x4] sm:$0xf] 0
        %913 = vst [vmem:[%s910 + $0x8] sm:$0x1] 0
        %s914 = scalar_lea.vmem [#allocation2], 12
        %vm915 = vcmask 1040384
        %vm916 = vsmask.f32 256
        %vm917 = vmand %vm915, %vm916
        %v918 = vld [vmem:[%s914] sm:$0x1]
        %v919 = vsel %vm917, 0, %v918
        %920 = vst [vmem:[%s914] sm:$0x1] %v919
        %v921 = vld [vmem:[%s914 + $0xc] sm:$0x1]
        %v922 = vsel %vm917, 0, %v921
        %923 = vst [vmem:[%s914 + $0xc] sm:$0x1] %v922
        %v924 = vld [vmem:[%s914 + $0x18] sm:$0x1]
        %v925 = vsel %vm917, 0, %v924
        %926 = vst [vmem:[%s914 + $0x18] sm:$0x1] %v925
        %v927 = vld [vmem:[%s914 + $0x24] sm:$0x1]
        %v928 = vsel %vm917, 0, %v927
        %929 = vst [vmem:[%s914 + $0x24] sm:$0x1] %v928
        %v930 = vld [vmem:[%s914 + $0x30] sm:$0x1]
        %v931 = vsel %vm917, 0, %v930
        %932 = vst [vmem:[%s914 + $0x30] sm:$0x1] %v931
        %v933 = vld [vmem:[%s914 + $0x3c] sm:$0x1]
        %v934 = vsel %vm917, 0, %v933
        %935 = vst [vmem:[%s914 + $0x3c] sm:$0x1] %v934
        %v936 = vld [vmem:[%s914 + $0x48] sm:$0x1]
        %v937 = vsel %vm917, 0, %v936
        %938 = vst [vmem:[%s914 + $0x48] sm:$0x1] %v937
        %v939 = vld [vmem:[%s914 + $0x54] sm:$0x1]
        %v940 = vsel %vm917, 0, %v939
        %941 = vst [vmem:[%s914 + $0x54] sm:$0x1] %v940
        %v942 = vld [vmem:[%s914 + $0x60] sm:$0x1]
        %v943 = vsel %vm917, 0, %v942
        %944 = vst [vmem:[%s914 + $0x60] sm:$0x1] %v943
        %v945 = vld [vmem:[%s914 + $0x6c] sm:$0x1]
        %v946 = vsel %vm917, 0, %v945
        %947 = vst [vmem:[%s914 + $0x6c] sm:$0x1] %v946
        %v948 = vld [vmem:[%s914 + $0x78] sm:$0x1]
        %v949 = vsel %vm917, 0, %v948
        %950 = vst [vmem:[%s914 + $0x78] sm:$0x1] %v949
        %v951 = vld [vmem:[%s914 + $0x84] sm:$0x1]
        %v952 = vsel %vm917, 0, %v951
        %953 = vst [vmem:[%s914 + $0x84] sm:$0x1] %v952
        %v954 = vld [vmem:[%s914 + $0x90] sm:$0x1]
        %v955 = vsel %vm917, 0, %v954
        %956 = vst [vmem:[%s914 + $0x90] sm:$0x1] %v955
        %v957 = vld [vmem:[%s914 + $0x9c] sm:$0x1]
        %v958 = vsel %vm917, 0, %v957
        %959 = vst [vmem:[%s914 + $0x9c] sm:$0x1] %v958
        %v960 = vld [vmem:[%s914 + $0xa8] sm:$0x1]
        %v961 = vsel %vm917, 0, %v960
        %962 = vst [vmem:[%s914 + $0xa8] sm:$0x1] %v961
        %v963 = vld [vmem:[%s914 + $0xb4] sm:$0x1]
        %v964 = vsel %vm917, 0, %v963
        %965 = vst [vmem:[%s914 + $0xb4] sm:$0x1] %v964
        %vm966 = vsmask.f32 7938
        %vm967 = vmand %vm915, %vm966
        %v968 = vld [vmem:[%s914 + $0x8] sm:$0x1]
        %v969 = vsel %vm967, 0, %v968
        %970 = vst [vmem:[%s914 + $0x8] sm:$0x1] %v969
        %v971 = vld [vmem:[%s914 + $0x14] sm:$0x1]
        %v972 = vsel %vm967, 0, %v971
        %973 = vst [vmem:[%s914 + $0x14] sm:$0x1] %v972
        %v974 = vld [vmem:[%s914 + $0x20] sm:$0x1]
        %v975 = vsel %vm967, 0, %v974
        %976 = vst [vmem:[%s914 + $0x20] sm:$0x1] %v975
        %v977 = vld [vmem:[%s914 + $0x2c] sm:$0x1]
        %v978 = vsel %vm967, 0, %v977
        %979 = vst [vmem:[%s914 + $0x2c] sm:$0x1] %v978
        %v980 = vld [vmem:[%s914 + $0x38] sm:$0x1]
        %v981 = vsel %vm967, 0, %v980
        %982 = vst [vmem:[%s914 + $0x38] sm:$0x1] %v981
        %v983 = vld [vmem:[%s914 + $0x44] sm:$0x1]
        %v984 = vsel %vm967, 0, %v983
        %985 = vst [vmem:[%s914 + $0x44] sm:$0x1] %v984
        %v986 = vld [vmem:[%s914 + $0x50] sm:$0x1]
        %v987 = vsel %vm967, 0, %v986
        %988 = vst [vmem:[%s914 + $0x50] sm:$0x1] %v987
        %v989 = vld [vmem:[%s914 + $0x5c] sm:$0x1]
        %v990 = vsel %vm967, 0, %v989
        %991 = vst [vmem:[%s914 + $0x5c] sm:$0x1] %v990
        %v992 = vld [vmem:[%s914 + $0x68] sm:$0x1]
        %v993 = vsel %vm967, 0, %v992
        %994 = vst [vmem:[%s914 + $0x68] sm:$0x1] %v993
        %v995 = vld [vmem:[%s914 + $0x74] sm:$0x1]
        %v996 = vsel %vm967, 0, %v995
        %997 = vst [vmem:[%s914 + $0x74] sm:$0x1] %v996
        %v998 = vld [vmem:[%s914 + $0x80] sm:$0x1]
        %v999 = vsel %vm967, 0, %v998
        %1000 = vst [vmem:[%s914 + $0x80] sm:$0x1] %v999
        %v1001 = vld [vmem:[%s914 + $0x8c] sm:$0x1]
        %v1002 = vsel %vm967, 0, %v1001
        %1003 = vst [vmem:[%s914 + $0x8c] sm:$0x1] %v1002
        %v1004 = vld [vmem:[%s914 + $0x98] sm:$0x1]
        %v1005 = vsel %vm967, 0, %v1004
        %1006 = vst [vmem:[%s914 + $0x98] sm:$0x1] %v1005
        %v1007 = vld [vmem:[%s914 + $0xa4] sm:$0x1]
        %v1008 = vsel %vm967, 0, %v1007
        %1009 = vst [vmem:[%s914 + $0xa4] sm:$0x1] %v1008
        %v1010 = vld [vmem:[%s914 + $0xb0] sm:$0x1]
        %v1011 = vsel %vm967, 0, %v1010
        %1012 = vst [vmem:[%s914 + $0xb0] sm:$0x1] %v1011
        %v1013 = vld [vmem:[%s914 + $0xbc] sm:$0x1]
        %v1014 = vsel %vm967, 0, %v1013
        %1015 = vst [vmem:[%s914 + $0xbc] sm:$0x1] %v1014
        %v1016 = vpack.c.bf16 %v875, %v875
        %v1017 = vpack.c.bf16 %v876, %v876
        %v1018 = vpack.c.bf16 %v877, %v877
        %v1019 = vpack.c.bf16 %v878, %v878
        %v1020 = vpack.c.bf16 %v879, %v879
        %v1021 = vpack.c.bf16 %v880, %v880
        %v1022 = vpack.c.bf16 %v881, %v881
        %v1023 = vpack.c.bf16 %v882, %v882
        %v1024 = vpack.c.bf16 %v883, %v883
        %v1025 = vpack.c.bf16 %v884, %v884
        %v1026 = vpack.c.bf16 %v885, %v885
        %v1027 = vpack.c.bf16 %v886, %v886
        %v1028 = vpack.c.bf16 %v887, %v887
        %v1029 = vpack.c.bf16 %v888, %v888
        %v1030 = vpack.c.bf16 %v889, %v889
        %v1031 = vpack.c.bf16 %v890, %v890
        %v1032 = vpack.c.bf16 %v891, %v891
        %v1033 = vpack.c.bf16 %v892, %v892
        %v1034 = vpack.c.bf16 %v893, %v893
        %v1035 = vpack.c.bf16 %v894, %v894
        %v1036 = vpack.c.bf16 %v895, %v895
        %v1037 = vpack.c.bf16 %v896, %v896
        %v1038 = vpack.c.bf16 %v897, %v897
        %v1039 = vpack.c.bf16 %v898, %v898
        %v1040 = vpack.c.bf16 %v899, %v899
        %v1041 = vpack.c.bf16 %v900, %v900
        %v1042 = vpack.c.bf16 %v901, %v901
        %v1043 = vpack.c.bf16 %v902, %v902
        %v1044 = vpack.c.bf16 %v903, %v903
        %v1045 = vpack.c.bf16 %v904, %v904
        %v1046 = vpack.c.bf16 %v905, %v905
        %v1047 = vpack.c.bf16 %v906, %v906
        %vm1048 = vsmask.f32 4368
        %vm1049 = vmor %vm916, %vm1048
        %v1051 = vshrl.u32 %v1016, 16
        %v1053 = vrot.slane %v1051, 7
        %v1054 = vshll.u32 %v1016, 16
        %v1056 = vor.u32 %v1053, %v1054
        %v1057 = vrot.slane %v1053, 4
        %v1059 = vshrl.u32 %v1017, 16
        %v1061 = vrot.slane %v1059, 7
        %v1062 = vshll.u32 %v1017, 16
        %v1064 = vor.u32 %v1061, %v1062
        %v1065 = vsel %vm1049, %v1057, %v1064
        %v1066 = vrot.slane %v1061, 4
        %v1068 = vshrl.u32 %v1018, 16
        %v1070 = vrot.slane %v1068, 7
        %v1071 = vshll.u32 %v1018, 16
        %v1073 = vor.u32 %v1070, %v1071
        %v1074 = vrot.slane %v1070, 4
        %v1076 = vshrl.u32 %v1019, 16
        %v1078 = vrot.slane %v1076, 7
        %v1079 = vshll.u32 %v1019, 16
        %v1081 = vor.u32 %v1078, %v1079
        %v1082 = vsel %vm1049, %v1074, %v1081
        %v1083 = vrot.slane %v1078, 4
        %v1085 = vshrl.u32 %v1020, 16
        %v1087 = vrot.slane %v1085, 7
        %v1088 = vshll.u32 %v1020, 16
        %v1090 = vor.u32 %v1087, %v1088
        %v1091 = vrot.slane %v1087, 4
        %v1093 = vshrl.u32 %v1021, 16
        %v1095 = vrot.slane %v1093, 7
        %v1096 = vshll.u32 %v1021, 16
        %v1098 = vor.u32 %v1095, %v1096
        %v1099 = vsel %vm1049, %v1091, %v1098
        %v1100 = vrot.slane %v1095, 4
        %v1102 = vshrl.u32 %v1022, 16
        %v1104 = vrot.slane %v1102, 7
        %v1105 = vshll.u32 %v1022, 16
        %v1107 = vor.u32 %v1104, %v1105
        %v1108 = vrot.slane %v1104, 4
        %v1110 = vshrl.u32 %v1023, 16
        %v1112 = vrot.slane %v1110, 7
        %v1113 = vshll.u32 %v1023, 16
        %v1115 = vor.u32 %v1112, %v1113
        %v1116 = vsel %vm1049, %v1108, %v1115
        %v1117 = vrot.slane %v1112, 4
        %v1119 = vshrl.u32 %v1024, 16
        %v1121 = vrot.slane %v1119, 7
        %v1122 = vshll.u32 %v1024, 16
        %v1124 = vor.u32 %v1121, %v1122
        %v1125 = vrot.slane %v1121, 4
        %v1127 = vshrl.u32 %v1025, 16
        %v1129 = vrot.slane %v1127, 7
        %v1130 = vshll.u32 %v1025, 16
        %v1132 = vor.u32 %v1129, %v1130
        %v1133 = vsel %vm1049, %v1125, %v1132
        %v1134 = vrot.slane %v1129, 4
        %v1136 = vshrl.u32 %v1026, 16
        %v1138 = vrot.slane %v1136, 7
        %v1139 = vshll.u32 %v1026, 16
        %v1141 = vor.u32 %v1138, %v1139
        %v1142 = vrot.slane %v1138, 4
        %v1144 = vshrl.u32 %v1027, 16
        %v1146 = vrot.slane %v1144, 7
        %v1147 = vshll.u32 %v1027, 16
        %v1149 = vor.u32 %v1146, %v1147
        %v1150 = vsel %vm1049, %v1142, %v1149
        %v1151 = vrot.slane %v1146, 4
        %v1153 = vshrl.u32 %v1028, 16
        %v1155 = vrot.slane %v1153, 7
        %v1156 = vshll.u32 %v1028, 16
        %v1158 = vor.u32 %v1155, %v1156
        %v1159 = vrot.slane %v1155, 4
        %v1161 = vshrl.u32 %v1029, 16
        %v1163 = vrot.slane %v1161, 7
        %v1164 = vshll.u32 %v1029, 16
        %v1166 = vor.u32 %v1163, %v1164
        %v1167 = vsel %vm1049, %v1159, %v1166
        %v1168 = vrot.slane %v1163, 4
        %v1170 = vshrl.u32 %v1030, 16
        %v1172 = vrot.slane %v1170, 7
        %v1173 = vshll.u32 %v1030, 16
        %v1175 = vor.u32 %v1172, %v1173
        %v1176 = vrot.slane %v1172, 4
        %v1178 = vshrl.u32 %v1031, 16
        %v1180 = vrot.slane %v1178, 7
        %v1181 = vshll.u32 %v1031, 16
        %v1183 = vor.u32 %v1180, %v1181
        %v1184 = vsel %vm1049, %v1176, %v1183
        %v1185 = vrot.slane %v1180, 4
        %v1187 = vshrl.u32 %v1032, 16
        %v1189 = vrot.slane %v1187, 7
        %v1190 = vshll.u32 %v1032, 16
        %v1192 = vor.u32 %v1189, %v1190
        %v1193 = vrot.slane %v1189, 4
        %v1195 = vshrl.u32 %v1033, 16
        %v1197 = vrot.slane %v1195, 7
        %v1198 = vshll.u32 %v1033, 16
        %v1200 = vor.u32 %v1197, %v1198
        %v1201 = vsel %vm1049, %v1193, %v1200
        %v1202 = vrot.slane %v1197, 4
        %v1204 = vshrl.u32 %v1034, 16
        %v1206 = vrot.slane %v1204, 7
        %v1207 = vshll.u32 %v1034, 16
        %v1209 = vor.u32 %v1206, %v1207
        %v1210 = vrot.slane %v1206, 4
        %v1212 = vshrl.u32 %v1035, 16
        %v1214 = vrot.slane %v1212, 7
        %v1215 = vshll.u32 %v1035, 16
        %v1217 = vor.u32 %v1214, %v1215
        %v1218 = vsel %vm1049, %v1210, %v1217
        %v1219 = vrot.slane %v1214, 4
        %v1221 = vshrl.u32 %v1036, 16
        %v1223 = vrot.slane %v1221, 7
        %v1224 = vshll.u32 %v1036, 16
        %v1226 = vor.u32 %v1223, %v1224
        %v1227 = vrot.slane %v1223, 4
        %v1229 = vshrl.u32 %v1037, 16
        %v1231 = vrot.slane %v1229, 7
        %v1232 = vshll.u32 %v1037, 16
        %v1234 = vor.u32 %v1231, %v1232
        %v1235 = vsel %vm1049, %v1227, %v1234
        %v1236 = vrot.slane %v1231, 4
        %v1238 = vshrl.u32 %v1038, 16
        %v1240 = vrot.slane %v1238, 7
        %v1241 = vshll.u32 %v1038, 16
        %v1243 = vor.u32 %v1240, %v1241
        %v1244 = vrot.slane %v1240, 4
        %v1246 = vshrl.u32 %v1039, 16
        %v1248 = vrot.slane %v1246, 7
        %v1249 = vshll.u32 %v1039, 16
        %v1251 = vor.u32 %v1248, %v1249
        %v1252 = vsel %vm1049, %v1244, %v1251
        %v1253 = vrot.slane %v1248, 4
        %v1255 = vshrl.u32 %v1040, 16
        %v1257 = vrot.slane %v1255, 7
        %v1258 = vshll.u32 %v1040, 16
        %v1260 = vor.u32 %v1257, %v1258
        %v1261 = vrot.slane %v1257, 4
        %v1263 = vshrl.u32 %v1041, 16
        %v1265 = vrot.slane %v1263, 7
        %v1266 = vshll.u32 %v1041, 16
        %v1268 = vor.u32 %v1265, %v1266
        %v1269 = vsel %vm1049, %v1261, %v1268
        %v1270 = vrot.slane %v1265, 4
        %v1272 = vshrl.u32 %v1042, 16
        %v1274 = vrot.slane %v1272, 7
        %v1275 = vshll.u32 %v1042, 16
        %v1277 = vor.u32 %v1274, %v1275
        %v1278 = vrot.slane %v1274, 4
        %v1280 = vshrl.u32 %v1043, 16
        %v1282 = vrot.slane %v1280, 7
        %v1283 = vshll.u32 %v1043, 16
        %v1285 = vor.u32 %v1282, %v1283
        %v1286 = vsel %vm1049, %v1278, %v1285
        %v1287 = vrot.slane %v1282, 4
        %v1289 = vshrl.u32 %v1044, 16
        %v1291 = vrot.slane %v1289, 7
        %v1292 = vshll.u32 %v1044, 16
        %v1294 = vor.u32 %v1291, %v1292
        %v1295 = vrot.slane %v1291, 4
        %v1297 = vshrl.u32 %v1045, 16
        %v1299 = vrot.slane %v1297, 7
        %v1300 = vshll.u32 %v1045, 16
        %v1302 = vor.u32 %v1299, %v1300
        %v1303 = vsel %vm1049, %v1295, %v1302
        %v1304 = vrot.slane %v1299, 4
        %v1306 = vshrl.u32 %v1046, 16
        %v1308 = vrot.slane %v1306, 7
        %v1309 = vshll.u32 %v1046, 16
        %v1311 = vor.u32 %v1308, %v1309
        %v1312 = vrot.slane %v1308, 4
        %v1314 = vshrl.u32 %v1047, 16
        %v1316 = vrot.slane %v1314, 7
        %v1317 = vshll.u32 %v1047, 16
        %v1319 = vor.u32 %v1316, %v1317
        %v1320 = vsel %vm1049, %v1312, %v1319
        %v1321 = vrot.slane %v1316, 4
        %vm1370 = vcmask 1043456
        %vm1371 = vmand %vm1370, %vm966
        %v1372 = vld [vmem:[%s914] sm:$0xf]
        %v1373 = vsel %vm1371, %v1056, %v1372
        %1374 = vst [vmem:[%s914] sm:$0xf] %v1373
        %1375 = vst [vmem:[%s914 + $0x4] sm:$0xf] %v1065
        %v1376 = vld [vmem:[%s914 + $0x8] sm:$0x1]
        %v1377 = vsel %vm917, %v1066, %v1376
        %1378 = vst [vmem:[%s914 + $0x8] sm:$0x1] %v1377
        %v1379 = vld [vmem:[%s914 + $0xc] sm:$0xf]
        %v1380 = vsel %vm1371, %v1073, %v1379
        %1381 = vst [vmem:[%s914 + $0xc] sm:$0xf] %v1380
        %1382 = vst [vmem:[%s914 + $0x10] sm:$0xf] %v1082
        %v1383 = vld [vmem:[%s914 + $0x14] sm:$0x1]
        %v1384 = vsel %vm917, %v1083, %v1383
        %1385 = vst [vmem:[%s914 + $0x14] sm:$0x1] %v1384
        %v1386 = vld [vmem:[%s914 + $0x18] sm:$0xf]
        %v1387 = vsel %vm1371, %v1090, %v1386
        %1388 = vst [vmem:[%s914 + $0x18] sm:$0xf] %v1387
        %1389 = vst [vmem:[%s914 + $0x1c] sm:$0xf] %v1099
        %v1390 = vld [vmem:[%s914 + $0x20] sm:$0x1]
        %v1391 = vsel %vm917, %v1100, %v1390
        %1392 = vst [vmem:[%s914 + $0x20] sm:$0x1] %v1391
        %v1393 = vld [vmem:[%s914 + $0x24] sm:$0xf]
        %v1394 = vsel %vm1371, %v1107, %v1393
        %1395 = vst [vmem:[%s914 + $0x24] sm:$0xf] %v1394
        %1396 = vst [vmem:[%s914 + $0x28] sm:$0xf] %v1116
        %v1397 = vld [vmem:[%s914 + $0x2c] sm:$0x1]
        %v1398 = vsel %vm917, %v1117, %v1397
        %1399 = vst [vmem:[%s914 + $0x2c] sm:$0x1] %v1398
        %v1400 = vld [vmem:[%s914 + $0x30] sm:$0xf]
        %v1401 = vsel %vm1371, %v1124, %v1400
        %1402 = vst [vmem:[%s914 + $0x30] sm:$0xf] %v1401
        %1403 = vst [vmem:[%s914 + $0x34] sm:$0xf] %v1133
        %v1404 = vld [vmem:[%s914 + $0x38] sm:$0x1]
        %v1405 = vsel %vm917, %v1134, %v1404
        %1406 = vst [vmem:[%s914 + $0x38] sm:$0x1] %v1405
        %v1407 = vld [vmem:[%s914 + $0x3c] sm:$0xf]
        %v1408 = vsel %vm1371, %v1141, %v1407
        %1409 = vst [vmem:[%s914 + $0x3c] sm:$0xf] %v1408
        %1410 = vst [vmem:[%s914 + $0x40] sm:$0xf] %v1150
        %v1411 = vld [vmem:[%s914 + $0x44] sm:$0x1]
        %v1412 = vsel %vm917, %v1151, %v1411
        %1413 = vst [vmem:[%s914 + $0x44] sm:$0x1] %v1412
        %v1414 = vld [vmem:[%s914 + $0x48] sm:$0xf]
        %v1415 = vsel %vm1371, %v1158, %v1414
        %1416 = vst [vmem:[%s914 + $0x48] sm:$0xf] %v1415
        %1417 = vst [vmem:[%s914 + $0x4c] sm:$0xf] %v1167
        %v1418 = vld [vmem:[%s914 + $0x50] sm:$0x1]
        %v1419 = vsel %vm917, %v1168, %v1418
        %1420 = vst [vmem:[%s914 + $0x50] sm:$0x1] %v1419
        %v1421 = vld [vmem:[%s914 + $0x54] sm:$0xf]
        %v1422 = vsel %vm1371, %v1175, %v1421
        %1423 = vst [vmem:[%s914 + $0x54] sm:$0xf] %v1422
        %1424 = vst [vmem:[%s914 + $0x58] sm:$0xf] %v1184
        %v1425 = vld [vmem:[%s914 + $0x5c] sm:$0x1]
        %v1426 = vsel %vm917, %v1185, %v1425
        %1427 = vst [vmem:[%s914 + $0x5c] sm:$0x1] %v1426
        %v1428 = vld [vmem:[%s914 + $0x60] sm:$0xf]
        %v1429 = vsel %vm1371, %v1192, %v1428
        %1430 = vst [vmem:[%s914 + $0x60] sm:$0xf] %v1429
        %1431 = vst [vmem:[%s914 + $0x64] sm:$0xf] %v1201
        %v1432 = vld [vmem:[%s914 + $0x68] sm:$0x1]
        %v1433 = vsel %vm917, %v1202, %v1432
        %1434 = vst [vmem:[%s914 + $0x68] sm:$0x1] %v1433
        %v1435 = vld [vmem:[%s914 + $0x6c] sm:$0xf]
        %v1436 = vsel %vm1371, %v1209, %v1435
        %1437 = vst [vmem:[%s914 + $0x6c] sm:$0xf] %v1436
        %1438 = vst [vmem:[%s914 + $0x70] sm:$0xf] %v1218
        %v1439 = vld [vmem:[%s914 + $0x74] sm:$0x1]
        %v1440 = vsel %vm917, %v1219, %v1439
        %1441 = vst [vmem:[%s914 + $0x74] sm:$0x1] %v1440
        %v1442 = vld [vmem:[%s914 + $0x78] sm:$0xf]
        %v1443 = vsel %vm1371, %v1226, %v1442
        %1444 = vst [vmem:[%s914 + $0x78] sm:$0xf] %v1443
        %1445 = vst [vmem:[%s914 + $0x7c] sm:$0xf] %v1235
        %v1446 = vld [vmem:[%s914 + $0x80] sm:$0x1]
        %v1447 = vsel %vm917, %v1236, %v1446
        %1448 = vst [vmem:[%s914 + $0x80] sm:$0x1] %v1447
        %v1449 = vld [vmem:[%s914 + $0x84] sm:$0xf]
        %v1450 = vsel %vm1371, %v1243, %v1449
        %1451 = vst [vmem:[%s914 + $0x84] sm:$0xf] %v1450
        %1452 = vst [vmem:[%s914 + $0x88] sm:$0xf] %v1252
        %v1453 = vld [vmem:[%s914 + $0x8c] sm:$0x1]
        %v1454 = vsel %vm917, %v1253, %v1453
        %1455 = vst [vmem:[%s914 + $0x8c] sm:$0x1] %v1454
        %v1456 = vld [vmem:[%s914 + $0x90] sm:$0xf]
        %v1457 = vsel %vm1371, %v1260, %v1456
        %1458 = vst [vmem:[%s914 + $0x90] sm:$0xf] %v1457
        %1459 = vst [vmem:[%s914 + $0x94] sm:$0xf] %v1269
        %v1460 = vld [vmem:[%s914 + $0x98] sm:$0x1]
        %v1461 = vsel %vm917, %v1270, %v1460
        %1462 = vst [vmem:[%s914 + $0x98] sm:$0x1] %v1461
        %v1463 = vld [vmem:[%s914 + $0x9c] sm:$0xf]
        %v1464 = vsel %vm1371, %v1277, %v1463
        %1465 = vst [vmem:[%s914 + $0x9c] sm:$0xf] %v1464
        %1466 = vst [vmem:[%s914 + $0xa0] sm:$0xf] %v1286
        %v1467 = vld [vmem:[%s914 + $0xa4] sm:$0x1]
        %v1468 = vsel %vm917, %v1287, %v1467
        %1469 = vst [vmem:[%s914 + $0xa4] sm:$0x1] %v1468
        %v1470 = vld [vmem:[%s914 + $0xa8] sm:$0xf]
        %v1471 = vsel %vm1371, %v1294, %v1470
        %1472 = vst [vmem:[%s914 + $0xa8] sm:$0xf] %v1471
        %1473 = vst [vmem:[%s914 + $0xac] sm:$0xf] %v1303
        %v1474 = vld [vmem:[%s914 + $0xb0] sm:$0x1]
        %v1475 = vsel %vm917, %v1304, %v1474
        %1476 = vst [vmem:[%s914 + $0xb0] sm:$0x1] %v1475
        %v1477 = vld [vmem:[%s914 + $0xb4] sm:$0xf]
        %v1478 = vsel %vm1371, %v1311, %v1477
        %1479 = vst [vmem:[%s914 + $0xb4] sm:$0xf] %v1478
        %1480 = vst [vmem:[%s914 + $0xb8] sm:$0xf] %v1320
        %v1481 = vld [vmem:[%s914 + $0xbc] sm:$0x1]
        %v1482 = vsel %vm917, %v1321, %v1481
        %1483 = vst [vmem:[%s914 + $0xbc] sm:$0x1] %v1482
        %v1484 = vld [vmem:[#allocation2] sm:$0xf]
        %v1485 = vld [vmem:[#allocation2 + $0x4] sm:$0xf]
        %v1486 = vld [vmem:[#allocation2 + $0xc] sm:$0xf]
        %v1487 = vld [vmem:[#allocation2 + $0x10] sm:$0xf]
        %v1488 = vld [vmem:[#allocation2 + $0x18] sm:$0xf]
        %v1489 = vld [vmem:[#allocation2 + $0x1c] sm:$0xf]
        %v1490 = vld [vmem:[#allocation2 + $0x24] sm:$0xf]
        %v1491 = vld [vmem:[#allocation2 + $0x28] sm:$0xf]
        %v1492 = vld [vmem:[#allocation2 + $0x30] sm:$0xf]
        %v1493 = vld [vmem:[#allocation2 + $0x34] sm:$0xf]
        %v1494 = vld [vmem:[#allocation2 + $0x3c] sm:$0xf]
        %v1495 = vld [vmem:[#allocation2 + $0x40] sm:$0xf]
        %v1496 = vld [vmem:[#allocation2 + $0x48] sm:$0xf]
        %v1497 = vld [vmem:[#allocation2 + $0x4c] sm:$0xf]
        %v1498 = vld [vmem:[#allocation2 + $0x54] sm:$0xf]
        %v1499 = vld [vmem:[#allocation2 + $0x58] sm:$0xf]
        %v1500 = vld [vmem:[#allocation2 + $0x60] sm:$0xf]
        %v1501 = vld [vmem:[#allocation2 + $0x64] sm:$0xf]
        %v1502 = vld [vmem:[#allocation2 + $0x6c] sm:$0xf]
        %v1503 = vld [vmem:[#allocation2 + $0x70] sm:$0xf]
        %v1504 = vld [vmem:[#allocation2 + $0x78] sm:$0xf]
        %v1505 = vld [vmem:[#allocation2 + $0x7c] sm:$0xf]
        %v1506 = vld [vmem:[#allocation2 + $0x84] sm:$0xf]
        %v1507 = vld [vmem:[#allocation2 + $0x88] sm:$0xf]
        %v1508 = vld [vmem:[#allocation2 + $0x90] sm:$0xf]
        %v1509 = vld [vmem:[#allocation2 + $0x94] sm:$0xf]
        %v1510 = vld [vmem:[#allocation2 + $0x9c] sm:$0xf]
        %v1511 = vld [vmem:[#allocation2 + $0xa0] sm:$0xf]
        %v1512 = vld [vmem:[#allocation2 + $0xa8] sm:$0xf]
        %v1513 = vld [vmem:[#allocation2 + $0xac] sm:$0xf]
        %v1514 = vld [vmem:[#allocation2 + $0xb4] sm:$0xf]
        %v1515 = vld [vmem:[#allocation2 + $0xb8] sm:$0xf]
        %1516 = vst [vmem:[#allocation3] sm:$0xf] %v1484
        %1517 = vst [vmem:[#allocation3 + $0x24] sm:$0xf] %v1485
        %1518 = vst [vmem:[#allocation3 + $0x48] sm:$0xf] %v1486
        %1519 = vst [vmem:[#allocation3 + $0x6c] sm:$0xf] %v1487
        %1520 = vst [vmem:[#allocation3 + $0x90] sm:$0xf] %v1488
        %1521 = vst [vmem:[#allocation3 + $0xb4] sm:$0xf] %v1489
        %1522 = vst [vmem:[#allocation3 + $0xd8] sm:$0xf] %v1490
        %1523 = vst [vmem:[#allocation3 + $0xfc] sm:$0xf] %v1491
        %1524 = vst [vmem:[#allocation3 + $0x120] sm:$0xf] %v1492
        %1525 = vst [vmem:[#allocation3 + $0x144] sm:$0xf] %v1493
        %1526 = vst [vmem:[#allocation3 + $0x168] sm:$0xf] %v1494
        %1527 = vst [vmem:[#allocation3 + $0x18c] sm:$0xf] %v1495
        %1528 = vst [vmem:[#allocation3 + $0x1b0] sm:$0xf] %v1496
        %1529 = vst [vmem:[#allocation3 + $0x1d4] sm:$0xf] %v1497
        %1530 = vst [vmem:[#allocation3 + $0x1f8] sm:$0xf] %v1498
        %1531 = vst [vmem:[#allocation3 + $0x21c] sm:$0xf] %v1499
        %1532 = vst [vmem:[#allocation3 + $0x240] sm:$0xf] %v1500
        %1533 = vst [vmem:[#allocation3 + $0x264] sm:$0xf] %v1501
        %1534 = vst [vmem:[#allocation3 + $0x288] sm:$0xf] %v1502
        %1535 = vst [vmem:[#allocation3 + $0x2ac] sm:$0xf] %v1503
        %1536 = vst [vmem:[#allocation3 + $0x2d0] sm:$0xf] %v1504
        %1537 = vst [vmem:[#allocation3 + $0x2f4] sm:$0xf] %v1505
        %1538 = vst [vmem:[#allocation3 + $0x318] sm:$0xf] %v1506
        %1539 = vst [vmem:[#allocation3 + $0x33c] sm:$0xf] %v1507
        %1540 = vst [vmem:[#allocation3 + $0x360] sm:$0xf] %v1508
        %1541 = vst [vmem:[#allocation3 + $0x384] sm:$0xf] %v1509
        %1542 = vst [vmem:[#allocation3 + $0x3a8] sm:$0xf] %v1510
        %1543 = vst [vmem:[#allocation3 + $0x3cc] sm:$0xf] %v1511
        %1544 = vst [vmem:[#allocation3 + $0x3f0] sm:$0xf] %v1512
        %1545 = vst [vmem:[#allocation3 + $0x414] sm:$0xf] %v1513
        %1546 = vst [vmem:[#allocation3 + $0x438] sm:$0xf] %v1514
        %1547 = vst [vmem:[#allocation3 + $0x45c] sm:$0xf] %v1515
        %v1548 = vld [vmem:[#allocation2] sm:$0xf]
        %v1549 = vld [vmem:[#allocation2 + $0x4] sm:$0xf]
        %v1550 = vld [vmem:[#allocation2 + $0x8] sm:$0x1]
        %v1551 = vld [vmem:[#allocation2 + $0xc] sm:$0xf]
        %v1552 = vld [vmem:[#allocation2 + $0x10] sm:$0xf]
        %v1553 = vld [vmem:[#allocation2 + $0x14] sm:$0x1]
        %v1554 = vld [vmem:[#allocation2 + $0x18] sm:$0xf]
        %v1555 = vld [vmem:[#allocation2 + $0x1c] sm:$0xf]
        %v1556 = vld [vmem:[#allocation2 + $0x20] sm:$0x1]
        %v1557 = vld [vmem:[#allocation2 + $0x24] sm:$0xf]
        %v1558 = vld [vmem:[#allocation2 + $0x28] sm:$0xf]
        %v1559 = vld [vmem:[#allocation2 + $0x2c] sm:$0x1]
        %v1560 = vld [vmem:[#allocation2 + $0x30] sm:$0xf]
        %v1561 = vld [vmem:[#allocation2 + $0x34] sm:$0xf]
        %v1562 = vld [vmem:[#allocation2 + $0x38] sm:$0x1]
        %v1563 = vld [vmem:[#allocation2 + $0x3c] sm:$0xf]
        %v1564 = vld [vmem:[#allocation2 + $0x40] sm:$0xf]
        %v1565 = vld [vmem:[#allocation2 + $0x44] sm:$0x1]
        %v1566 = vld [vmem:[#allocation2 + $0x48] sm:$0xf]
        %v1567 = vld [vmem:[#allocation2 + $0x4c] sm:$0xf]
        %v1568 = vld [vmem:[#allocation2 + $0x50] sm:$0x1]
        %v1569 = vld [vmem:[#allocation2 + $0x54] sm:$0xf]
        %v1570 = vld [vmem:[#allocation2 + $0x58] sm:$0xf]
        %v1571 = vld [vmem:[#allocation2 + $0x5c] sm:$0x1]
        %v1572 = vld [vmem:[#allocation2 + $0x60] sm:$0xf]
        %v1573 = vld [vmem:[#allocation2 + $0x64] sm:$0xf]
        %v1574 = vld [vmem:[#allocation2 + $0x68] sm:$0x1]
        %v1575 = vld [vmem:[#allocation2 + $0x6c] sm:$0xf]
        %v1576 = vld [vmem:[#allocation2 + $0x70] sm:$0xf]
        %v1577 = vld [vmem:[#allocation2 + $0x74] sm:$0x1]
        %v1578 = vld [vmem:[#allocation2 + $0x78] sm:$0xf]
        %v1579 = vld [vmem:[#allocation2 + $0x7c] sm:$0xf]
        %v1580 = vld [vmem:[#allocation2 + $0x80] sm:$0x1]
        %v1581 = vld [vmem:[#allocation2 + $0x84] sm:$0xf]
        %v1582 = vld [vmem:[#allocation2 + $0x88] sm:$0xf]
        %v1583 = vld [vmem:[#allocation2 + $0x8c] sm:$0x1]
        %v1584 = vld [vmem:[#allocation2 + $0x90] sm:$0xf]
        %v1585 = vld [vmem:[#allocation2 + $0x94] sm:$0xf]
        %v1586 = vld [vmem:[#allocation2 + $0x98] sm:$0x1]
        %v1587 = vld [vmem:[#allocation2 + $0x9c] sm:$0xf]
        %v1588 = vld [vmem:[#allocation2 + $0xa0] sm:$0xf]
        %v1589 = vld [vmem:[#allocation2 + $0xa4] sm:$0x1]
        %v1590 = vld [vmem:[#allocation2 + $0xa8] sm:$0xf]
        %v1591 = vld [vmem:[#allocation2 + $0xac] sm:$0xf]
        %v1592 = vld [vmem:[#allocation2 + $0xb0] sm:$0x1]
        %v1593 = vld [vmem:[#allocation2 + $0xb4] sm:$0xf]
        %v1594 = vld [vmem:[#allocation2 + $0xb8] sm:$0xf]
        %v1595 = vld [vmem:[#allocation2 + $0xbc] sm:$0x1]
        %vm1596 = vsmask.f32 3328
        %vm1597 = vsmask.f32 7440
        %vm1598 = vmor %vm1596, %vm1597
        %v1600 = vshrl.u32 %v1548, 16
        %v1602 = vrot.slane %v1600, 4
        %v1603 = vshll.u32 %v1548, 16
        %v1605 = vrot.slane %v1603, 5
        %v1606 = vor.u32 %v1602, %v1605
        %v1607 = vrot.slane %v1606, 4
        %v1609 = vshll.u32 %v1549, 16
        %v1611 = vrot.slane %v1609, 5
        %v1612 = vsel %vm1598, %v1607, %v1611
        %v1613 = vshrl.u32 %v1549, 16
        %v1615 = vrot.slane %v1613, 4
        %v1616 = vor.u32 %v1615, %v1611
        %v1617 = vrot.slane %v1616, 4
        %v1619 = vshll.u32 %v1550, 16
        %v1621 = vrot.slane %v1619, 5
        %v1622 = vsel %vm1598, %v1617, %v1621
        %v1624 = vshrl.u32 %v1551, 16
        %v1626 = vrot.slane %v1624, 4
        %v1627 = vshll.u32 %v1551, 16
        %v1629 = vrot.slane %v1627, 5
        %v1630 = vor.u32 %v1626, %v1629
        %v1631 = vrot.slane %v1630, 4
        %v1633 = vshll.u32 %v1552, 16
        %v1635 = vrot.slane %v1633, 5
        %v1636 = vsel %vm1598, %v1631, %v1635
        %v1637 = vshrl.u32 %v1552, 16
        %v1639 = vrot.slane %v1637, 4
        %v1640 = vor.u32 %v1639, %v1635
        %v1641 = vrot.slane %v1640, 4
        %v1643 = vshll.u32 %v1553, 16
        %v1645 = vrot.slane %v1643, 5
        %v1646 = vsel %vm1598, %v1641, %v1645
        %v1648 = vshrl.u32 %v1554, 16
        %v1650 = vrot.slane %v1648, 4
        %v1651 = vshll.u32 %v1554, 16
        %v1653 = vrot.slane %v1651, 5
        %v1654 = vor.u32 %v1650, %v1653
        %v1655 = vrot.slane %v1654, 4
        %v1657 = vshll.u32 %v1555, 16
        %v1659 = vrot.slane %v1657, 5
        %v1660 = vsel %vm1598, %v1655, %v1659
        %v1661 = vshrl.u32 %v1555, 16
        %v1663 = vrot.slane %v1661, 4
        %v1664 = vor.u32 %v1663, %v1659
        %v1665 = vrot.slane %v1664, 4
        %v1667 = vshll.u32 %v1556, 16
        %v1669 = vrot.slane %v1667, 5
        %v1670 = vsel %vm1598, %v1665, %v1669
        %v1672 = vshrl.u32 %v1557, 16
        %v1674 = vrot.slane %v1672, 4
        %v1675 = vshll.u32 %v1557, 16
        %v1677 = vrot.slane %v1675, 5
        %v1678 = vor.u32 %v1674, %v1677
        %v1679 = vrot.slane %v1678, 4
        %v1681 = vshll.u32 %v1558, 16
        %v1683 = vrot.slane %v1681, 5
        %v1684 = vsel %vm1598, %v1679, %v1683
        %v1685 = vshrl.u32 %v1558, 16
        %v1687 = vrot.slane %v1685, 4
        %v1688 = vor.u32 %v1687, %v1683
        %v1689 = vrot.slane %v1688, 4
        %v1691 = vshll.u32 %v1559, 16
        %v1693 = vrot.slane %v1691, 5
        %v1694 = vsel %vm1598, %v1689, %v1693
        %v1696 = vshrl.u32 %v1560, 16
        %v1698 = vrot.slane %v1696, 4
        %v1699 = vshll.u32 %v1560, 16
        %v1701 = vrot.slane %v1699, 5
        %v1702 = vor.u32 %v1698, %v1701
        %v1703 = vrot.slane %v1702, 4
        %v1705 = vshll.u32 %v1561, 16
        %v1707 = vrot.slane %v1705, 5
        %v1708 = vsel %vm1598, %v1703, %v1707
        %v1709 = vshrl.u32 %v1561, 16
        %v1711 = vrot.slane %v1709, 4
        %v1712 = vor.u32 %v1711, %v1707
        %v1713 = vrot.slane %v1712, 4
        %v1715 = vshll.u32 %v1562, 16
        %v1717 = vrot.slane %v1715, 5
        %v1718 = vsel %vm1598, %v1713, %v1717
        %v1720 = vshrl.u32 %v1563, 16
        %v1722 = vrot.slane %v1720, 4
        %v1723 = vshll.u32 %v1563, 16
        %v1725 = vrot.slane %v1723, 5
        %v1726 = vor.u32 %v1722, %v1725
        %v1727 = vrot.slane %v1726, 4
        %v1729 = vshll.u32 %v1564, 16
        %v1731 = vrot.slane %v1729, 5
        %v1732 = vsel %vm1598, %v1727, %v1731
        %v1733 = vshrl.u32 %v1564, 16
        %v1735 = vrot.slane %v1733, 4
        %v1736 = vor.u32 %v1735, %v1731
        %v1737 = vrot.slane %v1736, 4
        %v1739 = vshll.u32 %v1565, 16
        %v1741 = vrot.slane %v1739, 5
        %v1742 = vsel %vm1598, %v1737, %v1741
        %v1744 = vshrl.u32 %v1566, 16
        %v1746 = vrot.slane %v1744, 4
        %v1747 = vshll.u32 %v1566, 16
        %v1749 = vrot.slane %v1747, 5
        %v1750 = vor.u32 %v1746, %v1749
        %v1751 = vrot.slane %v1750, 4
        %v1753 = vshll.u32 %v1567, 16
        %v1755 = vrot.slane %v1753, 5
        %v1756 = vsel %vm1598, %v1751, %v1755
        %v1757 = vshrl.u32 %v1567, 16
        %v1759 = vrot.slane %v1757, 4
        %v1760 = vor.u32 %v1759, %v1755
        %v1761 = vrot.slane %v1760, 4
        %v1763 = vshll.u32 %v1568, 16
        %v1765 = vrot.slane %v1763, 5
        %v1766 = vsel %vm1598, %v1761, %v1765
        %v1768 = vshrl.u32 %v1569, 16
        %v1770 = vrot.slane %v1768, 4
        %v1771 = vshll.u32 %v1569, 16
        %v1773 = vrot.slane %v1771, 5
        %v1774 = vor.u32 %v1770, %v1773
        %v1775 = vrot.slane %v1774, 4
        %v1777 = vshll.u32 %v1570, 16
        %v1779 = vrot.slane %v1777, 5
        %v1780 = vsel %vm1598, %v1775, %v1779
        %v1781 = vshrl.u32 %v1570, 16
        %v1783 = vrot.slane %v1781, 4
        %v1784 = vor.u32 %v1783, %v1779
        %v1785 = vrot.slane %v1784, 4
        %v1787 = vshll.u32 %v1571, 16
        %v1789 = vrot.slane %v1787, 5
        %v1790 = vsel %vm1598, %v1785, %v1789
        %v1792 = vshrl.u32 %v1572, 16
        %v1794 = vrot.slane %v1792, 4
        %v1795 = vshll.u32 %v1572, 16
        %v1797 = vrot.slane %v1795, 5
        %v1798 = vor.u32 %v1794, %v1797
        %v1799 = vrot.slane %v1798, 4
        %v1801 = vshll.u32 %v1573, 16
        %v1803 = vrot.slane %v1801, 5
        %v1804 = vsel %vm1598, %v1799, %v1803
        %v1805 = vshrl.u32 %v1573, 16
        %v1807 = vrot.slane %v1805, 4
        %v1808 = vor.u32 %v1807, %v1803
        %v1809 = vrot.slane %v1808, 4
        %v1811 = vshll.u32 %v1574, 16
        %v1813 = vrot.slane %v1811, 5
        %v1814 = vsel %vm1598, %v1809, %v1813
        %v1816 = vshrl.u32 %v1575, 16
        %v1818 = vrot.slane %v1816, 4
        %v1819 = vshll.u32 %v1575, 16
        %v1821 = vrot.slane %v1819, 5
        %v1822 = vor.u32 %v1818, %v1821
        %v1823 = vrot.slane %v1822, 4
        %v1825 = vshll.u32 %v1576, 16
        %v1827 = vrot.slane %v1825, 5
        %v1828 = vsel %vm1598, %v1823, %v1827
        %v1829 = vshrl.u32 %v1576, 16
        %v1831 = vrot.slane %v1829, 4
        %v1832 = vor.u32 %v1831, %v1827
        %v1833 = vrot.slane %v1832, 4
        %v1835 = vshll.u32 %v1577, 16
        %v1837 = vrot.slane %v1835, 5
        %v1838 = vsel %vm1598, %v1833, %v1837
        %v1840 = vshrl.u32 %v1578, 16
        %v1842 = vrot.slane %v1840, 4
        %v1843 = vshll.u32 %v1578, 16
        %v1845 = vrot.slane %v1843, 5
        %v1846 = vor.u32 %v1842, %v1845
        %v1847 = vrot.slane %v1846, 4
        %v1849 = vshll.u32 %v1579, 16
        %v1851 = vrot.slane %v1849, 5
        %v1852 = vsel %vm1598, %v1847, %v1851
        %v1853 = vshrl.u32 %v1579, 16
        %v1855 = vrot.slane %v1853, 4
        %v1856 = vor.u32 %v1855, %v1851
        %v1857 = vrot.slane %v1856, 4
        %v1859 = vshll.u32 %v1580, 16
        %v1861 = vrot.slane %v1859, 5
        %v1862 = vsel %vm1598, %v1857, %v1861
        %v1864 = vshrl.u32 %v1581, 16
        %v1866 = vrot.slane %v1864, 4
        %v1867 = vshll.u32 %v1581, 16
        %v1869 = vrot.slane %v1867, 5
        %v1870 = vor.u32 %v1866, %v1869
        %v1871 = vrot.slane %v1870, 4
        %v1873 = vshll.u32 %v1582, 16
        %v1875 = vrot.slane %v1873, 5
        %v1876 = vsel %vm1598, %v1871, %v1875
        %v1877 = vshrl.u32 %v1582, 16
        %v1879 = vrot.slane %v1877, 4
        %v1880 = vor.u32 %v1879, %v1875
        %v1881 = vrot.slane %v1880, 4
        %v1883 = vshll.u32 %v1583, 16
        %v1885 = vrot.slane %v1883, 5
        %v1886 = vsel %vm1598, %v1881, %v1885
        %v1888 = vshrl.u32 %v1584, 16
        %v1890 = vrot.slane %v1888, 4
        %v1891 = vshll.u32 %v1584, 16
        %v1893 = vrot.slane %v1891, 5
        %v1894 = vor.u32 %v1890, %v1893
        %v1895 = vrot.slane %v1894, 4
        %v1897 = vshll.u32 %v1585, 16
        %v1899 = vrot.slane %v1897, 5
        %v1900 = vsel %vm1598, %v1895, %v1899
        %v1901 = vshrl.u32 %v1585, 16
        %v1903 = vrot.slane %v1901, 4
        %v1904 = vor.u32 %v1903, %v1899
        %v1905 = vrot.slane %v1904, 4
        %v1907 = vshll.u32 %v1586, 16
        %v1909 = vrot.slane %v1907, 5
        %v1910 = vsel %vm1598, %v1905, %v1909
        %v1912 = vshrl.u32 %v1587, 16
        %v1914 = vrot.slane %v1912, 4
        %v1915 = vshll.u32 %v1587, 16
        %v1917 = vrot.slane %v1915, 5
        %v1918 = vor.u32 %v1914, %v1917
        %v1919 = vrot.slane %v1918, 4
        %v1921 = vshll.u32 %v1588, 16
        %v1923 = vrot.slane %v1921, 5
        %v1924 = vsel %vm1598, %v1919, %v1923
        %v1925 = vshrl.u32 %v1588, 16
        %v1927 = vrot.slane %v1925, 4
        %v1928 = vor.u32 %v1927, %v1923
        %v1929 = vrot.slane %v1928, 4
        %v1931 = vshll.u32 %v1589, 16
        %v1933 = vrot.slane %v1931, 5
        %v1934 = vsel %vm1598, %v1929, %v1933
        %v1936 = vshrl.u32 %v1590, 16
        %v1938 = vrot.slane %v1936, 4
        %v1939 = vshll.u32 %v1590, 16
        %v1941 = vrot.slane %v1939, 5
        %v1942 = vor.u32 %v1938, %v1941
        %v1943 = vrot.slane %v1942, 4
        %v1945 = vshll.u32 %v1591, 16
        %v1947 = vrot.slane %v1945, 5
        %v1948 = vsel %vm1598, %v1943, %v1947
        %v1949 = vshrl.u32 %v1591, 16
        %v1951 = vrot.slane %v1949, 4
        %v1952 = vor.u32 %v1951, %v1947
        %v1953 = vrot.slane %v1952, 4
        %v1955 = vshll.u32 %v1592, 16
        %v1957 = vrot.slane %v1955, 5
        %v1958 = vsel %vm1598, %v1953, %v1957
        %v1960 = vshrl.u32 %v1593, 16
        %v1962 = vrot.slane %v1960, 4
        %v1963 = vshll.u32 %v1593, 16
        %v1965 = vrot.slane %v1963, 5
        %v1966 = vor.u32 %v1962, %v1965
        %v1967 = vrot.slane %v1966, 4
        %v1969 = vshll.u32 %v1594, 16
        %v1971 = vrot.slane %v1969, 5
        %v1972 = vsel %vm1598, %v1967, %v1971
        %v1973 = vshrl.u32 %v1594, 16
        %v1975 = vrot.slane %v1973, 4
        %v1976 = vor.u32 %v1975, %v1971
        %v1977 = vrot.slane %v1976, 4
        %v1979 = vshll.u32 %v1595, 16
        %v1981 = vrot.slane %v1979, 5
        %v1982 = vsel %vm1598, %v1977, %v1981
        %2015 = vst [vmem:[#allocation3 + $0x4] sm:$0xf] %v1612
        %2016 = vst [vmem:[#allocation3 + $0x28] sm:$0xf] %v1622
        %2017 = vst [vmem:[#allocation3 + $0x4c] sm:$0xf] %v1636
        %2018 = vst [vmem:[#allocation3 + $0x70] sm:$0xf] %v1646
        %2019 = vst [vmem:[#allocation3 + $0x94] sm:$0xf] %v1660
        %2020 = vst [vmem:[#allocation3 + $0xb8] sm:$0xf] %v1670
        %2021 = vst [vmem:[#allocation3 + $0xdc] sm:$0xf] %v1684
        %2022 = vst [vmem:[#allocation3 + $0x100] sm:$0xf] %v1694
        %2023 = vst [vmem:[#allocation3 + $0x124] sm:$0xf] %v1708
        %2024 = vst [vmem:[#allocation3 + $0x148] sm:$0xf] %v1718
        %2025 = vst [vmem:[#allocation3 + $0x16c] sm:$0xf] %v1732
        %2026 = vst [vmem:[#allocation3 + $0x190] sm:$0xf] %v1742
        %2027 = vst [vmem:[#allocation3 + $0x1b4] sm:$0xf] %v1756
        %2028 = vst [vmem:[#allocation3 + $0x1d8] sm:$0xf] %v1766
        %2029 = vst [vmem:[#allocation3 + $0x1fc] sm:$0xf] %v1780
        %2030 = vst [vmem:[#allocation3 + $0x220] sm:$0xf] %v1790
        %2031 = vst [vmem:[#allocation3 + $0x244] sm:$0xf] %v1804
        %2032 = vst [vmem:[#allocation3 + $0x268] sm:$0xf] %v1814
        %2033 = vst [vmem:[#allocation3 + $0x28c] sm:$0xf] %v1828
        %2034 = vst [vmem:[#allocation3 + $0x2b0] sm:$0xf] %v1838
        %2035 = vst [vmem:[#allocation3 + $0x2d4] sm:$0xf] %v1852
        %2036 = vst [vmem:[#allocation3 + $0x2f8] sm:$0xf] %v1862
        %2037 = vst [vmem:[#allocation3 + $0x31c] sm:$0xf] %v1876
        %2038 = vst [vmem:[#allocation3 + $0x340] sm:$0xf] %v1886
        %2039 = vst [vmem:[#allocation3 + $0x364] sm:$0xf] %v1900
        %2040 = vst [vmem:[#allocation3 + $0x388] sm:$0xf] %v1910
        %2041 = vst [vmem:[#allocation3 + $0x3ac] sm:$0xf] %v1924
        %2042 = vst [vmem:[#allocation3 + $0x3d0] sm:$0xf] %v1934
        %2043 = vst [vmem:[#allocation3 + $0x3f4] sm:$0xf] %v1948
        %2044 = vst [vmem:[#allocation3 + $0x418] sm:$0xf] %v1958
        %2045 = vst [vmem:[#allocation3 + $0x43c] sm:$0xf] %v1972
        %2046 = vst [vmem:[#allocation3 + $0x460] sm:$0xf] %v1982
        %v2047 = vld [vmem:[#allocation2] sm:$0xe]
        %v2048 = vld [vmem:[#allocation2 + $0x4] sm:$0xf]
        %v2049 = vld [vmem:[#allocation2 + $0x8] sm:$0x1]
        %v2050 = vld [vmem:[#allocation2 + $0xc] sm:$0xe]
        %v2051 = vld [vmem:[#allocation2 + $0x10] sm:$0xf]
        %v2052 = vld [vmem:[#allocation2 + $0x14] sm:$0x1]
        %v2053 = vld [vmem:[#allocation2 + $0x18] sm:$0xe]
        %v2054 = vld [vmem:[#allocation2 + $0x1c] sm:$0xf]
        %v2055 = vld [vmem:[#allocation2 + $0x20] sm:$0x1]
        %v2056 = vld [vmem:[#allocation2 + $0x24] sm:$0xe]
        %v2057 = vld [vmem:[#allocation2 + $0x28] sm:$0xf]
        %v2058 = vld [vmem:[#allocation2 + $0x2c] sm:$0x1]
        %v2059 = vld [vmem:[#allocation2 + $0x30] sm:$0xe]
        %v2060 = vld [vmem:[#allocation2 + $0x34] sm:$0xf]
        %v2061 = vld [vmem:[#allocation2 + $0x38] sm:$0x1]
        %v2062 = vld [vmem:[#allocation2 + $0x3c] sm:$0xe]
        %v2063 = vld [vmem:[#allocation2 + $0x40] sm:$0xf]
        %v2064 = vld [vmem:[#allocation2 + $0x44] sm:$0x1]
        %v2065 = vld [vmem:[#allocation2 + $0x48] sm:$0xe]
        %v2066 = vld [vmem:[#allocation2 + $0x4c] sm:$0xf]
        %v2067 = vld [vmem:[#allocation2 + $0x50] sm:$0x1]
        %v2068 = vld [vmem:[#allocation2 + $0x54] sm:$0xe]
        %v2069 = vld [vmem:[#allocation2 + $0x58] sm:$0xf]
        %v2070 = vld [vmem:[#allocation2 + $0x5c] sm:$0x1]
        %v2071 = vld [vmem:[#allocation2 + $0x60] sm:$0xe]
        %v2072 = vld [vmem:[#allocation2 + $0x64] sm:$0xf]
        %v2073 = vld [vmem:[#allocation2 + $0x68] sm:$0x1]
        %v2074 = vld [vmem:[#allocation2 + $0x6c] sm:$0xe]
        %v2075 = vld [vmem:[#allocation2 + $0x70] sm:$0xf]
        %v2076 = vld [vmem:[#allocation2 + $0x74] sm:$0x1]
        %v2077 = vld [vmem:[#allocation2 + $0x78] sm:$0xe]
        %v2078 = vld [vmem:[#allocation2 + $0x7c] sm:$0xf]
        %v2079 = vld [vmem:[#allocation2 + $0x80] sm:$0x1]
        %v2080 = vld [vmem:[#allocation2 + $0x84] sm:$0xe]
        %v2081 = vld [vmem:[#allocation2 + $0x88] sm:$0xf]
        %v2082 = vld [vmem:[#allocation2 + $0x8c] sm:$0x1]
        %v2083 = vld [vmem:[#allocation2 + $0x90] sm:$0xe]
        %v2084 = vld [vmem:[#allocation2 + $0x94] sm:$0xf]
        %v2085 = vld [vmem:[#allocation2 + $0x98] sm:$0x1]
        %v2086 = vld [vmem:[#allocation2 + $0x9c] sm:$0xe]
        %v2087 = vld [vmem:[#allocation2 + $0xa0] sm:$0xf]
        %v2088 = vld [vmem:[#allocation2 + $0xa4] sm:$0x1]
        %v2089 = vld [vmem:[#allocation2 + $0xa8] sm:$0xe]
        %v2090 = vld [vmem:[#allocation2 + $0xac] sm:$0xf]
        %v2091 = vld [vmem:[#allocation2 + $0xb0] sm:$0x1]
        %v2092 = vld [vmem:[#allocation2 + $0xb4] sm:$0xe]
        %v2093 = vld [vmem:[#allocation2 + $0xb8] sm:$0xf]
        %v2094 = vld [vmem:[#allocation2 + $0xbc] sm:$0x1]
        %vm2143 = vcmask 1042432
        %vm2144 = vcmask 1046532
        %vm2145 = vmor %vm2143, %vm2144
        %v2146 = vrot.slane %v2047, 5
        %v2147 = vrot.slane %v2146, 4
        %v2148 = vrot.slane %v2048, 5
        %v2149 = vsel %vm2145, %v2147, %v2148
        %v2150 = vrot.slane %v2148, 4
        %v2151 = vrot.slane %v2049, 5
        %v2152 = vsel %vm2145, %v2150, %v2151
        %v2153 = vrot.slane %v2050, 5
        %v2154 = vrot.slane %v2153, 4
        %v2155 = vrot.slane %v2051, 5
        %v2156 = vsel %vm2145, %v2154, %v2155
        %v2157 = vrot.slane %v2155, 4
        %v2158 = vrot.slane %v2052, 5
        %v2159 = vsel %vm2145, %v2157, %v2158
        %v2160 = vrot.slane %v2053, 5
        %v2161 = vrot.slane %v2160, 4
        %v2162 = vrot.slane %v2054, 5
        %v2163 = vsel %vm2145, %v2161, %v2162
        %v2164 = vrot.slane %v2162, 4
        %v2165 = vrot.slane %v2055, 5
        %v2166 = vsel %vm2145, %v2164, %v2165
        %v2167 = vrot.slane %v2056, 5
        %v2168 = vrot.slane %v2167, 4
        %v2169 = vrot.slane %v2057, 5
        %v2170 = vsel %vm2145, %v2168, %v2169
        %v2171 = vrot.slane %v2169, 4
        %v2172 = vrot.slane %v2058, 5
        %v2173 = vsel %vm2145, %v2171, %v2172
        %v2174 = vrot.slane %v2059, 5
        %v2175 = vrot.slane %v2174, 4
        %v2176 = vrot.slane %v2060, 5
        %v2177 = vsel %vm2145, %v2175, %v2176
        %v2178 = vrot.slane %v2176, 4
        %v2179 = vrot.slane %v2061, 5
        %v2180 = vsel %vm2145, %v2178, %v2179
        %v2181 = vrot.slane %v2062, 5
        %v2182 = vrot.slane %v2181, 4
        %v2183 = vrot.slane %v2063, 5
        %v2184 = vsel %vm2145, %v2182, %v2183
        %v2185 = vrot.slane %v2183, 4
        %v2186 = vrot.slane %v2064, 5
        %v2187 = vsel %vm2145, %v2185, %v2186
        %v2188 = vrot.slane %v2065, 5
        %v2189 = vrot.slane %v2188, 4
        %v2190 = vrot.slane %v2066, 5
        %v2191 = vsel %vm2145, %v2189, %v2190
        %v2192 = vrot.slane %v2190, 4
        %v2193 = vrot.slane %v2067, 5
        %v2194 = vsel %vm2145, %v2192, %v2193
        %v2195 = vrot.slane %v2068, 5
        %v2196 = vrot.slane %v2195, 4
        %v2197 = vrot.slane %v2069, 5
        %v2198 = vsel %vm2145, %v2196, %v2197
        %v2199 = vrot.slane %v2197, 4
        %v2200 = vrot.slane %v2070, 5
        %v2201 = vsel %vm2145, %v2199, %v2200
        %v2202 = vrot.slane %v2071, 5
        %v2203 = vrot.slane %v2202, 4
        %v2204 = vrot.slane %v2072, 5
        %v2205 = vsel %vm2145, %v2203, %v2204
        %v2206 = vrot.slane %v2204, 4
        %v2207 = vrot.slane %v2073, 5
        %v2208 = vsel %vm2145, %v2206, %v2207
        %v2209 = vrot.slane %v2074, 5
        %v2210 = vrot.slane %v2209, 4
        %v2211 = vrot.slane %v2075, 5
        %v2212 = vsel %vm2145, %v2210, %v2211
        %v2213 = vrot.slane %v2211, 4
        %v2214 = vrot.slane %v2076, 5
        %v2215 = vsel %vm2145, %v2213, %v2214
        %v2216 = vrot.slane %v2077, 5
        %v2217 = vrot.slane %v2216, 4
        %v2218 = vrot.slane %v2078, 5
        %v2219 = vsel %vm2145, %v2217, %v2218
        %v2220 = vrot.slane %v2218, 4
        %v2221 = vrot.slane %v2079, 5
        %v2222 = vsel %vm2145, %v2220, %v2221
        %v2223 = vrot.slane %v2080, 5
        %v2224 = vrot.slane %v2223, 4
        %v2225 = vrot.slane %v2081, 5
        %v2226 = vsel %vm2145, %v2224, %v2225
        %v2227 = vrot.slane %v2225, 4
        %v2228 = vrot.slane %v2082, 5
        %v2229 = vsel %vm2145, %v2227, %v2228
        %v2230 = vrot.slane %v2083, 5
        %v2231 = vrot.slane %v2230, 4
        %v2232 = vrot.slane %v2084, 5
        %v2233 = vsel %vm2145, %v2231, %v2232
        %v2234 = vrot.slane %v2232, 4
        %v2235 = vrot.slane %v2085, 5
        %v2236 = vsel %vm2145, %v2234, %v2235
        %v2237 = vrot.slane %v2086, 5
        %v2238 = vrot.slane %v2237, 4
        %v2239 = vrot.slane %v2087, 5
        %v2240 = vsel %vm2145, %v2238, %v2239
        %v2241 = vrot.slane %v2239, 4
        %v2242 = vrot.slane %v2088, 5
        %v2243 = vsel %vm2145, %v2241, %v2242
        %v2244 = vrot.slane %v2089, 5
        %v2245 = vrot.slane %v2244, 4
        %v2246 = vrot.slane %v2090, 5
        %v2247 = vsel %vm2145, %v2245, %v2246
        %v2248 = vrot.slane %v2246, 4
        %v2249 = vrot.slane %v2091, 5
        %v2250 = vsel %vm2145, %v2248, %v2249
        %v2251 = vrot.slane %v2092, 5
        %v2252 = vrot.slane %v2251, 4
        %v2253 = vrot.slane %v2093, 5
        %v2254 = vsel %vm2145, %v2252, %v2253
        %v2255 = vrot.slane %v2253, 4
        %v2256 = vrot.slane %v2094, 5
        %v2257 = vsel %vm2145, %v2255, %v2256
        %2290 = vst [vmem:[#allocation3 + $0x8] sm:$0xf] %v2149
        %2291 = vst [vmem:[#allocation3 + $0x2c] sm:$0xf] %v2152
        %2292 = vst [vmem:[#allocation3 + $0x50] sm:$0xf] %v2156
        %2293 = vst [vmem:[#allocation3 + $0x74] sm:$0xf] %v2159
        %2294 = vst [vmem:[#allocation3 + $0x98] sm:$0xf] %v2163
        %2295 = vst [vmem:[#allocation3 + $0xbc] sm:$0xf] %v2166
        %2296 = vst [vmem:[#allocation3 + $0xe0] sm:$0xf] %v2170
        %2297 = vst [vmem:[#allocation3 + $0x104] sm:$0xf] %v2173
        %2298 = vst [vmem:[#allocation3 + $0x128] sm:$0xf] %v2177
        %2299 = vst [vmem:[#allocation3 + $0x14c] sm:$0xf] %v2180
        %2300 = vst [vmem:[#allocation3 + $0x170] sm:$0xf] %v2184
        %2301 = vst [vmem:[#allocation3 + $0x194] sm:$0xf] %v2187
        %2302 = vst [vmem:[#allocation3 + $0x1b8] sm:$0xf] %v2191
        %2303 = vst [vmem:[#allocation3 + $0x1dc] sm:$0xf] %v2194
        %2304 = vst [vmem:[#allocation3 + $0x200] sm:$0xf] %v2198
        %2305 = vst [vmem:[#allocation3 + $0x224] sm:$0xf] %v2201
        %2306 = vst [vmem:[#allocation3 + $0x248] sm:$0xf] %v2205
        %2307 = vst [vmem:[#allocation3 + $0x26c] sm:$0xf] %v2208
        %2308 = vst [vmem:[#allocation3 + $0x290] sm:$0xf] %v2212
        %2309 = vst [vmem:[#allocation3 + $0x2b4] sm:$0xf] %v2215
        %2310 = vst [vmem:[#allocation3 + $0x2d8] sm:$0xf] %v2219
        %2311 = vst [vmem:[#allocation3 + $0x2fc] sm:$0xf] %v2222
        %2312 = vst [vmem:[#allocation3 + $0x320] sm:$0xf] %v2226
        %2313 = vst [vmem:[#allocation3 + $0x344] sm:$0xf] %v2229
        %2314 = vst [vmem:[#allocation3 + $0x368] sm:$0xf] %v2233
        %2315 = vst [vmem:[#allocation3 + $0x38c] sm:$0xf] %v2236
        %2316 = vst [vmem:[#allocation3 + $0x3b0] sm:$0xf] %v2240
        %2317 = vst [vmem:[#allocation3 + $0x3d4] sm:$0xf] %v2243
        %2318 = vst [vmem:[#allocation3 + $0x3f8] sm:$0xf] %v2247
        %2319 = vst [vmem:[#allocation3 + $0x41c] sm:$0xf] %v2250
        %2320 = vst [vmem:[#allocation3 + $0x440] sm:$0xf] %v2254
        %2321 = vst [vmem:[#allocation3 + $0x464] sm:$0xf] %v2257
        %v2322 = vld [vmem:[%s914] sm:$0xf]
        %v2323 = vld [vmem:[%s914 + $0x4] sm:$0xf]
        %v2324 = vld [vmem:[%s914 + $0xc] sm:$0xf]
        %v2325 = vld [vmem:[%s914 + $0x10] sm:$0xf]
        %v2326 = vld [vmem:[%s914 + $0x18] sm:$0xf]
        %v2327 = vld [vmem:[%s914 + $0x1c] sm:$0xf]
        %v2328 = vld [vmem:[%s914 + $0x24] sm:$0xf]
        %v2329 = vld [vmem:[%s914 + $0x28] sm:$0xf]
        %v2330 = vld [vmem:[%s914 + $0x30] sm:$0xf]
        %v2331 = vld [vmem:[%s914 + $0x34] sm:$0xf]
        %v2332 = vld [vmem:[%s914 + $0x3c] sm:$0xf]
        %v2333 = vld [vmem:[%s914 + $0x40] sm:$0xf]
        %v2334 = vld [vmem:[%s914 + $0x48] sm:$0xf]
        %v2335 = vld [vmem:[%s914 + $0x4c] sm:$0xf]
        %v2336 = vld [vmem:[%s914 + $0x54] sm:$0xf]
        %v2337 = vld [vmem:[%s914 + $0x58] sm:$0xf]
        %v2338 = vld [vmem:[%s914 + $0x60] sm:$0xf]
        %v2339 = vld [vmem:[%s914 + $0x64] sm:$0xf]
        %v2340 = vld [vmem:[%s914 + $0x6c] sm:$0xf]
        %v2341 = vld [vmem:[%s914 + $0x70] sm:$0xf]
        %v2342 = vld [vmem:[%s914 + $0x78] sm:$0xf]
        %v2343 = vld [vmem:[%s914 + $0x7c] sm:$0xf]
        %v2344 = vld [vmem:[%s914 + $0x84] sm:$0xf]
        %v2345 = vld [vmem:[%s914 + $0x88] sm:$0xf]
        %v2346 = vld [vmem:[%s914 + $0x90] sm:$0xf]
        %v2347 = vld [vmem:[%s914 + $0x94] sm:$0xf]
        %v2348 = vld [vmem:[%s914 + $0x9c] sm:$0xf]
        %v2349 = vld [vmem:[%s914 + $0xa0] sm:$0xf]
        %v2350 = vld [vmem:[%s914 + $0xa8] sm:$0xf]
        %v2351 = vld [vmem:[%s914 + $0xac] sm:$0xf]
        %v2352 = vld [vmem:[%s914 + $0xb4] sm:$0xf]
        %v2353 = vld [vmem:[%s914 + $0xb8] sm:$0xf]
        %2354 = vst [vmem:[#allocation3 + $0xc] sm:$0xf] %v2322
        %2355 = vst [vmem:[#allocation3 + $0x30] sm:$0xf] %v2323
        %2356 = vst [vmem:[#allocation3 + $0x54] sm:$0xf] %v2324
        %2357 = vst [vmem:[#allocation3 + $0x78] sm:$0xf] %v2325
        %2358 = vst [vmem:[#allocation3 + $0x9c] sm:$0xf] %v2326
        %2359 = vst [vmem:[#allocation3 + $0xc0] sm:$0xf] %v2327
        %2360 = vst [vmem:[#allocation3 + $0xe4] sm:$0xf] %v2328
        %2361 = vst [vmem:[#allocation3 + $0x108] sm:$0xf] %v2329
        %2362 = vst [vmem:[#allocation3 + $0x12c] sm:$0xf] %v2330
        %2363 = vst [vmem:[#allocation3 + $0x150] sm:$0xf] %v2331
        %2364 = vst [vmem:[#allocation3 + $0x174] sm:$0xf] %v2332
        %2365 = vst [vmem:[#allocation3 + $0x198] sm:$0xf] %v2333
        %2366 = vst [vmem:[#allocation3 + $0x1bc] sm:$0xf] %v2334
        %2367 = vst [vmem:[#allocation3 + $0x1e0] sm:$0xf] %v2335
        %2368 = vst [vmem:[#allocation3 + $0x204] sm:$0xf] %v2336
        %2369 = vst [vmem:[#allocation3 + $0x228] sm:$0xf] %v2337
        %2370 = vst [vmem:[#allocation3 + $0x24c] sm:$0xf] %v2338
        %2371 = vst [vmem:[#allocation3 + $0x270] sm:$0xf] %v2339
        %2372 = vst [vmem:[#allocation3 + $0x294] sm:$0xf] %v2340
        %2373 = vst [vmem:[#allocation3 + $0x2b8] sm:$0xf] %v2341
        %2374 = vst [vmem:[#allocation3 + $0x2dc] sm:$0xf] %v2342
        %2375 = vst [vmem:[#allocation3 + $0x300] sm:$0xf] %v2343
        %2376 = vst [vmem:[#allocation3 + $0x324] sm:$0xf] %v2344
        %2377 = vst [vmem:[#allocation3 + $0x348] sm:$0xf] %v2345
        %2378 = vst [vmem:[#allocation3 + $0x36c] sm:$0xf] %v2346
        %2379 = vst [vmem:[#allocation3 + $0x390] sm:$0xf] %v2347
        %2380 = vst [vmem:[#allocation3 + $0x3b4] sm:$0xf] %v2348
        %2381 = vst [vmem:[#allocation3 + $0x3d8] sm:$0xf] %v2349
        %2382 = vst [vmem:[#allocation3 + $0x3fc] sm:$0xf] %v2350
        %2383 = vst [vmem:[#allocation3 + $0x420] sm:$0xf] %v2351
        %2384 = vst [vmem:[#allocation3 + $0x444] sm:$0xf] %v2352
        %2385 = vst [vmem:[#allocation3 + $0x468] sm:$0xf] %v2353
        %v2386 = vld [vmem:[%s914] sm:$0xf]
        %v2387 = vld [vmem:[%s914 + $0x4] sm:$0xf]
        %v2388 = vld [vmem:[%s914 + $0x8] sm:$0x1]
        %v2389 = vld [vmem:[%s914 + $0xc] sm:$0xf]
        %v2390 = vld [vmem:[%s914 + $0x10] sm:$0xf]
        %v2391 = vld [vmem:[%s914 + $0x14] sm:$0x1]
        %v2392 = vld [vmem:[%s914 + $0x18] sm:$0xf]
        %v2393 = vld [vmem:[%s914 + $0x1c] sm:$0xf]
        %v2394 = vld [vmem:[%s914 + $0x20] sm:$0x1]
        %v2395 = vld [vmem:[%s914 + $0x24] sm:$0xf]
        %v2396 = vld [vmem:[%s914 + $0x28] sm:$0xf]
        %v2397 = vld [vmem:[%s914 + $0x2c] sm:$0x1]
        %v2398 = vld [vmem:[%s914 + $0x30] sm:$0xf]
        %v2399 = vld [vmem:[%s914 + $0x34] sm:$0xf]
        %v2400 = vld [vmem:[%s914 + $0x38] sm:$0x1]
        %v2401 = vld [vmem:[%s914 + $0x3c] sm:$0xf]
        %v2402 = vld [vmem:[%s914 + $0x40] sm:$0xf]
        %v2403 = vld [vmem:[%s914 + $0x44] sm:$0x1]
        %v2404 = vld [vmem:[%s914 + $0x48] sm:$0xf]
        %v2405 = vld [vmem:[%s914 + $0x4c] sm:$0xf]
        %v2406 = vld [vmem:[%s914 + $0x50] sm:$0x1]
        %v2407 = vld [vmem:[%s914 + $0x54] sm:$0xf]
        %v2408 = vld [vmem:[%s914 + $0x58] sm:$0xf]
        %v2409 = vld [vmem:[%s914 + $0x5c] sm:$0x1]
        %v2410 = vld [vmem:[%s914 + $0x60] sm:$0xf]
        %v2411 = vld [vmem:[%s914 + $0x64] sm:$0xf]
        %v2412 = vld [vmem:[%s914 + $0x68] sm:$0x1]
        %v2413 = vld [vmem:[%s914 + $0x6c] sm:$0xf]
        %v2414 = vld [vmem:[%s914 + $0x70] sm:$0xf]
        %v2415 = vld [vmem:[%s914 + $0x74] sm:$0x1]
        %v2416 = vld [vmem:[%s914 + $0x78] sm:$0xf]
        %v2417 = vld [vmem:[%s914 + $0x7c] sm:$0xf]
        %v2418 = vld [vmem:[%s914 + $0x80] sm:$0x1]
        %v2419 = vld [vmem:[%s914 + $0x84] sm:$0xf]
        %v2420 = vld [vmem:[%s914 + $0x88] sm:$0xf]
        %v2421 = vld [vmem:[%s914 + $0x8c] sm:$0x1]
        %v2422 = vld [vmem:[%s914 + $0x90] sm:$0xf]
        %v2423 = vld [vmem:[%s914 + $0x94] sm:$0xf]
        %v2424 = vld [vmem:[%s914 + $0x98] sm:$0x1]
        %v2425 = vld [vmem:[%s914 + $0x9c] sm:$0xf]
        %v2426 = vld [vmem:[%s914 + $0xa0] sm:$0xf]
        %v2427 = vld [vmem:[%s914 + $0xa4] sm:$0x1]
        %v2428 = vld [vmem:[%s914 + $0xa8] sm:$0xf]
        %v2429 = vld [vmem:[%s914 + $0xac] sm:$0xf]
        %v2430 = vld [vmem:[%s914 + $0xb0] sm:$0x1]
        %v2431 = vld [vmem:[%s914 + $0xb4] sm:$0xf]
        %v2432 = vld [vmem:[%s914 + $0xb8] sm:$0xf]
        %v2433 = vld [vmem:[%s914 + $0xbc] sm:$0x1]
        %v2435 = vshrl.u32 %v2386, 16
        %v2437 = vrot.slane %v2435, 4
        %v2438 = vshll.u32 %v2386, 16
        %v2440 = vrot.slane %v2438, 5
        %v2441 = vor.u32 %v2437, %v2440
        %v2442 = vrot.slane %v2441, 4
        %v2444 = vshll.u32 %v2387, 16
        %v2446 = vrot.slane %v2444, 5
        %v2447 = vsel %vm1598, %v2442, %v2446
        %v2448 = vshrl.u32 %v2387, 16
        %v2450 = vrot.slane %v2448, 4
        %v2451 = vor.u32 %v2450, %v2446
        %v2452 = vrot.slane %v2451, 4
        %v2454 = vshll.u32 %v2388, 16
        %v2456 = vrot.slane %v2454, 5
        %v2457 = vsel %vm1598, %v2452, %v2456
        %v2459 = vshrl.u32 %v2389, 16
        %v2461 = vrot.slane %v2459, 4
        %v2462 = vshll.u32 %v2389, 16
        %v2464 = vrot.slane %v2462, 5
        %v2465 = vor.u32 %v2461, %v2464
        %v2466 = vrot.slane %v2465, 4
        %v2468 = vshll.u32 %v2390, 16
        %v2470 = vrot.slane %v2468, 5
        %v2471 = vsel %vm1598, %v2466, %v2470
        %v2472 = vshrl.u32 %v2390, 16
        %v2474 = vrot.slane %v2472, 4
        %v2475 = vor.u32 %v2474, %v2470
        %v2476 = vrot.slane %v2475, 4
        %v2478 = vshll.u32 %v2391, 16
        %v2480 = vrot.slane %v2478, 5
        %v2481 = vsel %vm1598, %v2476, %v2480
        %v2483 = vshrl.u32 %v2392, 16
        %v2485 = vrot.slane %v2483, 4
        %v2486 = vshll.u32 %v2392, 16
        %v2488 = vrot.slane %v2486, 5
        %v2489 = vor.u32 %v2485, %v2488
        %v2490 = vrot.slane %v2489, 4
        %v2492 = vshll.u32 %v2393, 16
        %v2494 = vrot.slane %v2492, 5
        %v2495 = vsel %vm1598, %v2490, %v2494
        %v2496 = vshrl.u32 %v2393, 16
        %v2498 = vrot.slane %v2496, 4
        %v2499 = vor.u32 %v2498, %v2494
        %v2500 = vrot.slane %v2499, 4
        %v2502 = vshll.u32 %v2394, 16
        %v2504 = vrot.slane %v2502, 5
        %v2505 = vsel %vm1598, %v2500, %v2504
        %v2507 = vshrl.u32 %v2395, 16
        %v2509 = vrot.slane %v2507, 4
        %v2510 = vshll.u32 %v2395, 16
        %v2512 = vrot.slane %v2510, 5
        %v2513 = vor.u32 %v2509, %v2512
        %v2514 = vrot.slane %v2513, 4
        %v2516 = vshll.u32 %v2396, 16
        %v2518 = vrot.slane %v2516, 5
        %v2519 = vsel %vm1598, %v2514, %v2518
        %v2520 = vshrl.u32 %v2396, 16
        %v2522 = vrot.slane %v2520, 4
        %v2523 = vor.u32 %v2522, %v2518
        %v2524 = vrot.slane %v2523, 4
        %v2526 = vshll.u32 %v2397, 16
        %v2528 = vrot.slane %v2526, 5
        %v2529 = vsel %vm1598, %v2524, %v2528
        %v2531 = vshrl.u32 %v2398, 16
        %v2533 = vrot.slane %v2531, 4
        %v2534 = vshll.u32 %v2398, 16
        %v2536 = vrot.slane %v2534, 5
        %v2537 = vor.u32 %v2533, %v2536
        %v2538 = vrot.slane %v2537, 4
        %v2540 = vshll.u32 %v2399, 16
        %v2542 = vrot.slane %v2540, 5
        %v2543 = vsel %vm1598, %v2538, %v2542
        %v2544 = vshrl.u32 %v2399, 16
        %v2546 = vrot.slane %v2544, 4
        %v2547 = vor.u32 %v2546, %v2542
        %v2548 = vrot.slane %v2547, 4
        %v2550 = vshll.u32 %v2400, 16
        %v2552 = vrot.slane %v2550, 5
        %v2553 = vsel %vm1598, %v2548, %v2552
        %v2555 = vshrl.u32 %v2401, 16
        %v2557 = vrot.slane %v2555, 4
        %v2558 = vshll.u32 %v2401, 16
        %v2560 = vrot.slane %v2558, 5
        %v2561 = vor.u32 %v2557, %v2560
        %v2562 = vrot.slane %v2561, 4
        %v2564 = vshll.u32 %v2402, 16
        %v2566 = vrot.slane %v2564, 5
        %v2567 = vsel %vm1598, %v2562, %v2566
        %v2568 = vshrl.u32 %v2402, 16
        %v2570 = vrot.slane %v2568, 4
        %v2571 = vor.u32 %v2570, %v2566
        %v2572 = vrot.slane %v2571, 4
        %v2574 = vshll.u32 %v2403, 16
        %v2576 = vrot.slane %v2574, 5
        %v2577 = vsel %vm1598, %v2572, %v2576
        %v2579 = vshrl.u32 %v2404, 16
        %v2581 = vrot.slane %v2579, 4
        %v2582 = vshll.u32 %v2404, 16
        %v2584 = vrot.slane %v2582, 5
        %v2585 = vor.u32 %v2581, %v2584
        %v2586 = vrot.slane %v2585, 4
        %v2588 = vshll.u32 %v2405, 16
        %v2590 = vrot.slane %v2588, 5
        %v2591 = vsel %vm1598, %v2586, %v2590
        %v2592 = vshrl.u32 %v2405, 16
        %v2594 = vrot.slane %v2592, 4
        %v2595 = vor.u32 %v2594, %v2590
        %v2596 = vrot.slane %v2595, 4
        %v2598 = vshll.u32 %v2406, 16
        %v2600 = vrot.slane %v2598, 5
        %v2601 = vsel %vm1598, %v2596, %v2600
        %v2603 = vshrl.u32 %v2407, 16
        %v2605 = vrot.slane %v2603, 4
        %v2606 = vshll.u32 %v2407, 16
        %v2608 = vrot.slane %v2606, 5
        %v2609 = vor.u32 %v2605, %v2608
        %v2610 = vrot.slane %v2609, 4
        %v2612 = vshll.u32 %v2408, 16
        %v2614 = vrot.slane %v2612, 5
        %v2615 = vsel %vm1598, %v2610, %v2614
        %v2616 = vshrl.u32 %v2408, 16
        %v2618 = vrot.slane %v2616, 4
        %v2619 = vor.u32 %v2618, %v2614
        %v2620 = vrot.slane %v2619, 4
        %v2622 = vshll.u32 %v2409, 16
        %v2624 = vrot.slane %v2622, 5
        %v2625 = vsel %vm1598, %v2620, %v2624
        %v2627 = vshrl.u32 %v2410, 16
        %v2629 = vrot.slane %v2627, 4
        %v2630 = vshll.u32 %v2410, 16
        %v2632 = vrot.slane %v2630, 5
        %v2633 = vor.u32 %v2629, %v2632
        %v2634 = vrot.slane %v2633, 4
        %v2636 = vshll.u32 %v2411, 16
        %v2638 = vrot.slane %v2636, 5
        %v2639 = vsel %vm1598, %v2634, %v2638
        %v2640 = vshrl.u32 %v2411, 16
        %v2642 = vrot.slane %v2640, 4
        %v2643 = vor.u32 %v2642, %v2638
        %v2644 = vrot.slane %v2643, 4
        %v2646 = vshll.u32 %v2412, 16
        %v2648 = vrot.slane %v2646, 5
        %v2649 = vsel %vm1598, %v2644, %v2648
        %v2651 = vshrl.u32 %v2413, 16
        %v2653 = vrot.slane %v2651, 4
        %v2654 = vshll.u32 %v2413, 16
        %v2656 = vrot.slane %v2654, 5
        %v2657 = vor.u32 %v2653, %v2656
        %v2658 = vrot.slane %v2657, 4
        %v2660 = vshll.u32 %v2414, 16
        %v2662 = vrot.slane %v2660, 5
        %v2663 = vsel %vm1598, %v2658, %v2662
        %v2664 = vshrl.u32 %v2414, 16
        %v2666 = vrot.slane %v2664, 4
        %v2667 = vor.u32 %v2666, %v2662
        %v2668 = vrot.slane %v2667, 4
        %v2670 = vshll.u32 %v2415, 16
        %v2672 = vrot.slane %v2670, 5
        %v2673 = vsel %vm1598, %v2668, %v2672
        %v2675 = vshrl.u32 %v2416, 16
        %v2677 = vrot.slane %v2675, 4
        %v2678 = vshll.u32 %v2416, 16
        %v2680 = vrot.slane %v2678, 5
        %v2681 = vor.u32 %v2677, %v2680
        %v2682 = vrot.slane %v2681, 4
        %v2684 = vshll.u32 %v2417, 16
        %v2686 = vrot.slane %v2684, 5
        %v2687 = vsel %vm1598, %v2682, %v2686
        %v2688 = vshrl.u32 %v2417, 16
        %v2690 = vrot.slane %v2688, 4
        %v2691 = vor.u32 %v2690, %v2686
        %v2692 = vrot.slane %v2691, 4
        %v2694 = vshll.u32 %v2418, 16
        %v2696 = vrot.slane %v2694, 5
        %v2697 = vsel %vm1598, %v2692, %v2696
        %v2699 = vshrl.u32 %v2419, 16
        %v2701 = vrot.slane %v2699, 4
        %v2702 = vshll.u32 %v2419, 16
        %v2704 = vrot.slane %v2702, 5
        %v2705 = vor.u32 %v2701, %v2704
        %v2706 = vrot.slane %v2705, 4
        %v2708 = vshll.u32 %v2420, 16
        %v2710 = vrot.slane %v2708, 5
        %v2711 = vsel %vm1598, %v2706, %v2710
        %v2712 = vshrl.u32 %v2420, 16
        %v2714 = vrot.slane %v2712, 4
        %v2715 = vor.u32 %v2714, %v2710
        %v2716 = vrot.slane %v2715, 4
        %v2718 = vshll.u32 %v2421, 16
        %v2720 = vrot.slane %v2718, 5
        %v2721 = vsel %vm1598, %v2716, %v2720
        %v2723 = vshrl.u32 %v2422, 16
        %v2725 = vrot.slane %v2723, 4
        %v2726 = vshll.u32 %v2422, 16
        %v2728 = vrot.slane %v2726, 5
        %v2729 = vor.u32 %v2725, %v2728
        %v2730 = vrot.slane %v2729, 4
        %v2732 = vshll.u32 %v2423, 16
        %v2734 = vrot.slane %v2732, 5
        %v2735 = vsel %vm1598, %v2730, %v2734
        %v2736 = vshrl.u32 %v2423, 16
        %v2738 = vrot.slane %v2736, 4
        %v2739 = vor.u32 %v2738, %v2734
        %v2740 = vrot.slane %v2739, 4
        %v2742 = vshll.u32 %v2424, 16
        %v2744 = vrot.slane %v2742, 5
        %v2745 = vsel %vm1598, %v2740, %v2744
        %v2747 = vshrl.u32 %v2425, 16
        %v2749 = vrot.slane %v2747, 4
        %v2750 = vshll.u32 %v2425, 16
        %v2752 = vrot.slane %v2750, 5
        %v2753 = vor.u32 %v2749, %v2752
        %v2754 = vrot.slane %v2753, 4
        %v2756 = vshll.u32 %v2426, 16
        %v2758 = vrot.slane %v2756, 5
        %v2759 = vsel %vm1598, %v2754, %v2758
        %v2760 = vshrl.u32 %v2426, 16
        %v2762 = vrot.slane %v2760, 4
        %v2763 = vor.u32 %v2762, %v2758
        %v2764 = vrot.slane %v2763, 4
        %v2766 = vshll.u32 %v2427, 16
        %v2768 = vrot.slane %v2766, 5
        %v2769 = vsel %vm1598, %v2764, %v2768
        %v2771 = vshrl.u32 %v2428, 16
        %v2773 = vrot.slane %v2771, 4
        %v2774 = vshll.u32 %v2428, 16
        %v2776 = vrot.slane %v2774, 5
        %v2777 = vor.u32 %v2773, %v2776
        %v2778 = vrot.slane %v2777, 4
        %v2780 = vshll.u32 %v2429, 16
        %v2782 = vrot.slane %v2780, 5
        %v2783 = vsel %vm1598, %v2778, %v2782
        %v2784 = vshrl.u32 %v2429, 16
        %v2786 = vrot.slane %v2784, 4
        %v2787 = vor.u32 %v2786, %v2782
        %v2788 = vrot.slane %v2787, 4
        %v2790 = vshll.u32 %v2430, 16
        %v2792 = vrot.slane %v2790, 5
        %v2793 = vsel %vm1598, %v2788, %v2792
        %v2795 = vshrl.u32 %v2431, 16
        %v2797 = vrot.slane %v2795, 4
        %v2798 = vshll.u32 %v2431, 16
        %v2800 = vrot.slane %v2798, 5
        %v2801 = vor.u32 %v2797, %v2800
        %v2802 = vrot.slane %v2801, 4
        %v2804 = vshll.u32 %v2432, 16
        %v2806 = vrot.slane %v2804, 5
        %v2807 = vsel %vm1598, %v2802, %v2806
        %v2808 = vshrl.u32 %v2432, 16
        %v2810 = vrot.slane %v2808, 4
        %v2811 = vor.u32 %v2810, %v2806
        %v2812 = vrot.slane %v2811, 4
        %v2814 = vshll.u32 %v2433, 16
        %v2816 = vrot.slane %v2814, 5
        %v2817 = vsel %vm1598, %v2812, %v2816
        %2850 = vst [vmem:[#allocation3 + $0x10] sm:$0xf] %v2447
        %2851 = vst [vmem:[#allocation3 + $0x34] sm:$0xf] %v2457
        %2852 = vst [vmem:[#allocation3 + $0x58] sm:$0xf] %v2471
        %2853 = vst [vmem:[#allocation3 + $0x7c] sm:$0xf] %v2481
        %2854 = vst [vmem:[#allocation3 + $0xa0] sm:$0xf] %v2495
        %2855 = vst [vmem:[#allocation3 + $0xc4] sm:$0xf] %v2505
        %2856 = vst [vmem:[#allocation3 + $0xe8] sm:$0xf] %v2519
        %2857 = vst [vmem:[#allocation3 + $0x10c] sm:$0xf] %v2529
        %2858 = vst [vmem:[#allocation3 + $0x130] sm:$0xf] %v2543
        %2859 = vst [vmem:[#allocation3 + $0x154] sm:$0xf] %v2553
        %2860 = vst [vmem:[#allocation3 + $0x178] sm:$0xf] %v2567
        %2861 = vst [vmem:[#allocation3 + $0x19c] sm:$0xf] %v2577
        %2862 = vst [vmem:[#allocation3 + $0x1c0] sm:$0xf] %v2591
        %2863 = vst [vmem:[#allocation3 + $0x1e4] sm:$0xf] %v2601
        %2864 = vst [vmem:[#allocation3 + $0x208] sm:$0xf] %v2615
        %2865 = vst [vmem:[#allocation3 + $0x22c] sm:$0xf] %v2625
        %2866 = vst [vmem:[#allocation3 + $0x250] sm:$0xf] %v2639
        %2867 = vst [vmem:[#allocation3 + $0x274] sm:$0xf] %v2649
        %2868 = vst [vmem:[#allocation3 + $0x298] sm:$0xf] %v2663
        %2869 = vst [vmem:[#allocation3 + $0x2bc] sm:$0xf] %v2673
        %2870 = vst [vmem:[#allocation3 + $0x2e0] sm:$0xf] %v2687
        %2871 = vst [vmem:[#allocation3 + $0x304] sm:$0xf] %v2697
        %2872 = vst [vmem:[#allocation3 + $0x328] sm:$0xf] %v2711
        %2873 = vst [vmem:[#allocation3 + $0x34c] sm:$0xf] %v2721
        %2874 = vst [vmem:[#allocation3 + $0x370] sm:$0xf] %v2735
        %2875 = vst [vmem:[#allocation3 + $0x394] sm:$0xf] %v2745
        %2876 = vst [vmem:[#allocation3 + $0x3b8] sm:$0xf] %v2759
        %2877 = vst [vmem:[#allocation3 + $0x3dc] sm:$0xf] %v2769
        %2878 = vst [vmem:[#allocation3 + $0x400] sm:$0xf] %v2783
        %2879 = vst [vmem:[#allocation3 + $0x424] sm:$0xf] %v2793
        %2880 = vst [vmem:[#allocation3 + $0x448] sm:$0xf] %v2807
        %2881 = vst [vmem:[#allocation3 + $0x46c] sm:$0xf] %v2817
        %v2882 = vld [vmem:[%s914] sm:$0xe]
        %v2883 = vld [vmem:[%s914 + $0x4] sm:$0xf]
        %v2884 = vld [vmem:[%s914 + $0x8] sm:$0x1]
        %v2885 = vld [vmem:[%s914 + $0xc] sm:$0xe]
        %v2886 = vld [vmem:[%s914 + $0x10] sm:$0xf]
        %v2887 = vld [vmem:[%s914 + $0x14] sm:$0x1]
        %v2888 = vld [vmem:[%s914 + $0x18] sm:$0xe]
        %v2889 = vld [vmem:[%s914 + $0x1c] sm:$0xf]
        %v2890 = vld [vmem:[%s914 + $0x20] sm:$0x1]
        %v2891 = vld [vmem:[%s914 + $0x24] sm:$0xe]
        %v2892 = vld [vmem:[%s914 + $0x28] sm:$0xf]
        %v2893 = vld [vmem:[%s914 + $0x2c] sm:$0x1]
        %v2894 = vld [vmem:[%s914 + $0x30] sm:$0xe]
        %v2895 = vld [vmem:[%s914 + $0x34] sm:$0xf]
        %v2896 = vld [vmem:[%s914 + $0x38] sm:$0x1]
        %v2897 = vld [vmem:[%s914 + $0x3c] sm:$0xe]
        %v2898 = vld [vmem:[%s914 + $0x40] sm:$0xf]
        %v2899 = vld [vmem:[%s914 + $0x44] sm:$0x1]
        %v2900 = vld [vmem:[%s914 + $0x48] sm:$0xe]
        %v2901 = vld [vmem:[%s914 + $0x4c] sm:$0xf]
        %v2902 = vld [vmem:[%s914 + $0x50] sm:$0x1]
        %v2903 = vld [vmem:[%s914 + $0x54] sm:$0xe]
        %v2904 = vld [vmem:[%s914 + $0x58] sm:$0xf]
        %v2905 = vld [vmem:[%s914 + $0x5c] sm:$0x1]
        %v2906 = vld [vmem:[%s914 + $0x60] sm:$0xe]
        %v2907 = vld [vmem:[%s914 + $0x64] sm:$0xf]
        %v2908 = vld [vmem:[%s914 + $0x68] sm:$0x1]
        %v2909 = vld [vmem:[%s914 + $0x6c] sm:$0xe]
        %v2910 = vld [vmem:[%s914 + $0x70] sm:$0xf]
        %v2911 = vld [vmem:[%s914 + $0x74] sm:$0x1]
        %v2912 = vld [vmem:[%s914 + $0x78] sm:$0xe]
        %v2913 = vld [vmem:[%s914 + $0x7c] sm:$0xf]
        %v2914 = vld [vmem:[%s914 + $0x80] sm:$0x1]
        %v2915 = vld [vmem:[%s914 + $0x84] sm:$0xe]
        %v2916 = vld [vmem:[%s914 + $0x88] sm:$0xf]
        %v2917 = vld [vmem:[%s914 + $0x8c] sm:$0x1]
        %v2918 = vld [vmem:[%s914 + $0x90] sm:$0xe]
        %v2919 = vld [vmem:[%s914 + $0x94] sm:$0xf]
        %v2920 = vld [vmem:[%s914 + $0x98] sm:$0x1]
        %v2921 = vld [vmem:[%s914 + $0x9c] sm:$0xe]
        %v2922 = vld [vmem:[%s914 + $0xa0] sm:$0xf]
        %v2923 = vld [vmem:[%s914 + $0xa4] sm:$0x1]
        %v2924 = vld [vmem:[%s914 + $0xa8] sm:$0xe]
        %v2925 = vld [vmem:[%s914 + $0xac] sm:$0xf]
        %v2926 = vld [vmem:[%s914 + $0xb0] sm:$0x1]
        %v2927 = vld [vmem:[%s914 + $0xb4] sm:$0xe]
        %v2928 = vld [vmem:[%s914 + $0xb8] sm:$0xf]
        %v2929 = vld [vmem:[%s914 + $0xbc] sm:$0x1]
        %v2978 = vrot.slane %v2882, 5
        %v2979 = vrot.slane %v2978, 4
        %v2980 = vrot.slane %v2883, 5
        %v2981 = vsel %vm2145, %v2979, %v2980
        %v2982 = vrot.slane %v2980, 4
        %v2983 = vrot.slane %v2884, 5
        %v2984 = vsel %vm2145, %v2982, %v2983
        %v2985 = vrot.slane %v2885, 5
        %v2986 = vrot.slane %v2985, 4
        %v2987 = vrot.slane %v2886, 5
        %v2988 = vsel %vm2145, %v2986, %v2987
        %v2989 = vrot.slane %v2987, 4
        %v2990 = vrot.slane %v2887, 5
        %v2991 = vsel %vm2145, %v2989, %v2990
        %v2992 = vrot.slane %v2888, 5
        %v2993 = vrot.slane %v2992, 4
        %v2994 = vrot.slane %v2889, 5
        %v2995 = vsel %vm2145, %v2993, %v2994
        %v2996 = vrot.slane %v2994, 4
        %v2997 = vrot.slane %v2890, 5
        %v2998 = vsel %vm2145, %v2996, %v2997
        %v2999 = vrot.slane %v2891, 5
        %v3000 = vrot.slane %v2999, 4
        %v3001 = vrot.slane %v2892, 5
        %v3002 = vsel %vm2145, %v3000, %v3001
        %v3003 = vrot.slane %v3001, 4
        %v3004 = vrot.slane %v2893, 5
        %v3005 = vsel %vm2145, %v3003, %v3004
        %v3006 = vrot.slane %v2894, 5
        %v3007 = vrot.slane %v3006, 4
        %v3008 = vrot.slane %v2895, 5
        %v3009 = vsel %vm2145, %v3007, %v3008
        %v3010 = vrot.slane %v3008, 4
        %v3011 = vrot.slane %v2896, 5
        %v3012 = vsel %vm2145, %v3010, %v3011
        %v3013 = vrot.slane %v2897, 5
        %v3014 = vrot.slane %v3013, 4
        %v3015 = vrot.slane %v2898, 5
        %v3016 = vsel %vm2145, %v3014, %v3015
        %v3017 = vrot.slane %v3015, 4
        %v3018 = vrot.slane %v2899, 5
        %v3019 = vsel %vm2145, %v3017, %v3018
        %v3020 = vrot.slane %v2900, 5
        %v3021 = vrot.slane %v3020, 4
        %v3022 = vrot.slane %v2901, 5
        %v3023 = vsel %vm2145, %v3021, %v3022
        %v3024 = vrot.slane %v3022, 4
        %v3025 = vrot.slane %v2902, 5
        %v3026 = vsel %vm2145, %v3024, %v3025
        %v3027 = vrot.slane %v2903, 5
        %v3028 = vrot.slane %v3027, 4
        %v3029 = vrot.slane %v2904, 5
        %v3030 = vsel %vm2145, %v3028, %v3029
        %v3031 = vrot.slane %v3029, 4
        %v3032 = vrot.slane %v2905, 5
        %v3033 = vsel %vm2145, %v3031, %v3032
        %v3034 = vrot.slane %v2906, 5
        %v3035 = vrot.slane %v3034, 4
        %v3036 = vrot.slane %v2907, 5
        %v3037 = vsel %vm2145, %v3035, %v3036
        %v3038 = vrot.slane %v3036, 4
        %v3039 = vrot.slane %v2908, 5
        %v3040 = vsel %vm2145, %v3038, %v3039
        %v3041 = vrot.slane %v2909, 5
        %v3042 = vrot.slane %v3041, 4
        %v3043 = vrot.slane %v2910, 5
        %v3044 = vsel %vm2145, %v3042, %v3043
        %v3045 = vrot.slane %v3043, 4
        %v3046 = vrot.slane %v2911, 5
        %v3047 = vsel %vm2145, %v3045, %v3046
        %v3048 = vrot.slane %v2912, 5
        %v3049 = vrot.slane %v3048, 4
        %v3050 = vrot.slane %v2913, 5
        %v3051 = vsel %vm2145, %v3049, %v3050
        %v3052 = vrot.slane %v3050, 4
        %v3053 = vrot.slane %v2914, 5
        %v3054 = vsel %vm2145, %v3052, %v3053
        %v3055 = vrot.slane %v2915, 5
        %v3056 = vrot.slane %v3055, 4
        %v3057 = vrot.slane %v2916, 5
        %v3058 = vsel %vm2145, %v3056, %v3057
        %v3059 = vrot.slane %v3057, 4
        %v3060 = vrot.slane %v2917, 5
        %v3061 = vsel %vm2145, %v3059, %v3060
        %v3062 = vrot.slane %v2918, 5
        %v3063 = vrot.slane %v3062, 4
        %v3064 = vrot.slane %v2919, 5
        %v3065 = vsel %vm2145, %v3063, %v3064
        %v3066 = vrot.slane %v3064, 4
        %v3067 = vrot.slane %v2920, 5
        %v3068 = vsel %vm2145, %v3066, %v3067
        %v3069 = vrot.slane %v2921, 5
        %v3070 = vrot.slane %v3069, 4
        %v3071 = vrot.slane %v2922, 5
        %v3072 = vsel %vm2145, %v3070, %v3071
        %v3073 = vrot.slane %v3071, 4
        %v3074 = vrot.slane %v2923, 5
        %v3075 = vsel %vm2145, %v3073, %v3074
        %v3076 = vrot.slane %v2924, 5
        %v3077 = vrot.slane %v3076, 4
        %v3078 = vrot.slane %v2925, 5
        %v3079 = vsel %vm2145, %v3077, %v3078
        %v3080 = vrot.slane %v3078, 4
        %v3081 = vrot.slane %v2926, 5
        %v3082 = vsel %vm2145, %v3080, %v3081
        %v3083 = vrot.slane %v2927, 5
        %v3084 = vrot.slane %v3083, 4
        %v3085 = vrot.slane %v2928, 5
        %v3086 = vsel %vm2145, %v3084, %v3085
        %v3087 = vrot.slane %v3085, 4
        %v3088 = vrot.slane %v2929, 5
        %v3089 = vsel %vm2145, %v3087, %v3088
        %3122 = vst [vmem:[#allocation3 + $0x14] sm:$0xf] %v2981
        %3123 = vst [vmem:[#allocation3 + $0x38] sm:$0xf] %v2984
        %3124 = vst [vmem:[#allocation3 + $0x5c] sm:$0xf] %v2988
        %3125 = vst [vmem:[#allocation3 + $0x80] sm:$0xf] %v2991
        %3126 = vst [vmem:[#allocation3 + $0xa4] sm:$0xf] %v2995
        %3127 = vst [vmem:[#allocation3 + $0xc8] sm:$0xf] %v2998
        %3128 = vst [vmem:[#allocation3 + $0xec] sm:$0xf] %v3002
        %3129 = vst [vmem:[#allocation3 + $0x110] sm:$0xf] %v3005
        %3130 = vst [vmem:[#allocation3 + $0x134] sm:$0xf] %v3009
        %3131 = vst [vmem:[#allocation3 + $0x158] sm:$0xf] %v3012
        %3132 = vst [vmem:[#allocation3 + $0x17c] sm:$0xf] %v3016
        %3133 = vst [vmem:[#allocation3 + $0x1a0] sm:$0xf] %v3019
        %3134 = vst [vmem:[#allocation3 + $0x1c4] sm:$0xf] %v3023
        %3135 = vst [vmem:[#allocation3 + $0x1e8] sm:$0xf] %v3026
        %3136 = vst [vmem:[#allocation3 + $0x20c] sm:$0xf] %v3030
        %3137 = vst [vmem:[#allocation3 + $0x230] sm:$0xf] %v3033
        %3138 = vst [vmem:[#allocation3 + $0x254] sm:$0xf] %v3037
        %3139 = vst [vmem:[#allocation3 + $0x278] sm:$0xf] %v3040
        %3140 = vst [vmem:[#allocation3 + $0x29c] sm:$0xf] %v3044
        %3141 = vst [vmem:[#allocation3 + $0x2c0] sm:$0xf] %v3047
        %3142 = vst [vmem:[#allocation3 + $0x2e4] sm:$0xf] %v3051
        %3143 = vst [vmem:[#allocation3 + $0x308] sm:$0xf] %v3054
        %3144 = vst [vmem:[#allocation3 + $0x32c] sm:$0xf] %v3058
        %3145 = vst [vmem:[#allocation3 + $0x350] sm:$0xf] %v3061
        %3146 = vst [vmem:[#allocation3 + $0x374] sm:$0xf] %v3065
        %3147 = vst [vmem:[#allocation3 + $0x398] sm:$0xf] %v3068
        %3148 = vst [vmem:[#allocation3 + $0x3bc] sm:$0xf] %v3072
        %3149 = vst [vmem:[#allocation3 + $0x3e0] sm:$0xf] %v3075
        %3150 = vst [vmem:[#allocation3 + $0x404] sm:$0xf] %v3079
        %3151 = vst [vmem:[#allocation3 + $0x428] sm:$0xf] %v3082
        %3152 = vst [vmem:[#allocation3 + $0x44c] sm:$0xf] %v3086
        %3153 = vst [vmem:[#allocation3 + $0x470] sm:$0xf] %v3089
        %s3154 = scalar_lea.vmem [#allocation2], 24
        %v3155 = vld [vmem:[%s3154] sm:$0xf]
        %v3156 = vld [vmem:[%s3154 + $0x4] sm:$0xf]
        %v3157 = vld [vmem:[%s3154 + $0xc] sm:$0xf]
        %v3158 = vld [vmem:[%s3154 + $0x10] sm:$0xf]
        %v3159 = vld [vmem:[%s3154 + $0x18] sm:$0xf]
        %v3160 = vld [vmem:[%s3154 + $0x1c] sm:$0xf]
        %v3161 = vld [vmem:[%s3154 + $0x24] sm:$0xf]
        %v3162 = vld [vmem:[%s3154 + $0x28] sm:$0xf]
        %v3163 = vld [vmem:[%s3154 + $0x30] sm:$0xf]
        %v3164 = vld [vmem:[%s3154 + $0x34] sm:$0xf]
        %v3165 = vld [vmem:[%s3154 + $0x3c] sm:$0xf]
        %v3166 = vld [vmem:[%s3154 + $0x40] sm:$0xf]
        %v3167 = vld [vmem:[%s3154 + $0x48] sm:$0xf]
        %v3168 = vld [vmem:[%s3154 + $0x4c] sm:$0xf]
        %v3169 = vld [vmem:[%s3154 + $0x54] sm:$0xf]
        %v3170 = vld [vmem:[%s3154 + $0x58] sm:$0xf]
        %v3171 = vld [vmem:[%s3154 + $0x60] sm:$0xf]
        %v3172 = vld [vmem:[%s3154 + $0x64] sm:$0xf]
        %v3173 = vld [vmem:[%s3154 + $0x6c] sm:$0xf]
        %v3174 = vld [vmem:[%s3154 + $0x70] sm:$0xf]
        %v3175 = vld [vmem:[%s3154 + $0x78] sm:$0xf]
        %v3176 = vld [vmem:[%s3154 + $0x7c] sm:$0xf]
        %v3177 = vld [vmem:[%s3154 + $0x84] sm:$0xf]
        %v3178 = vld [vmem:[%s3154 + $0x88] sm:$0xf]
        %v3179 = vld [vmem:[%s3154 + $0x90] sm:$0xf]
        %v3180 = vld [vmem:[%s3154 + $0x94] sm:$0xf]
        %v3181 = vld [vmem:[%s3154 + $0x9c] sm:$0xf]
        %v3182 = vld [vmem:[%s3154 + $0xa0] sm:$0xf]
        %v3183 = vld [vmem:[%s3154 + $0xa8] sm:$0xf]
        %v3184 = vld [vmem:[%s3154 + $0xac] sm:$0xf]
        %v3185 = vld [vmem:[%s3154 + $0xb4] sm:$0xf]
        %v3186 = vld [vmem:[%s3154 + $0xb8] sm:$0xf]
        %3187 = vst [vmem:[#allocation3 + $0x18] sm:$0xf] %v3155
        %3188 = vst [vmem:[#allocation3 + $0x3c] sm:$0xf] %v3156
        %3189 = vst [vmem:[#allocation3 + $0x60] sm:$0xf] %v3157
        %3190 = vst [vmem:[#allocation3 + $0x84] sm:$0xf] %v3158
        %3191 = vst [vmem:[#allocation3 + $0xa8] sm:$0xf] %v3159
        %3192 = vst [vmem:[#allocation3 + $0xcc] sm:$0xf] %v3160
        %3193 = vst [vmem:[#allocation3 + $0xf0] sm:$0xf] %v3161
        %3194 = vst [vmem:[#allocation3 + $0x114] sm:$0xf] %v3162
        %3195 = vst [vmem:[#allocation3 + $0x138] sm:$0xf] %v3163
        %3196 = vst [vmem:[#allocation3 + $0x15c] sm:$0xf] %v3164
        %3197 = vst [vmem:[#allocation3 + $0x180] sm:$0xf] %v3165
        %3198 = vst [vmem:[#allocation3 + $0x1a4] sm:$0xf] %v3166
        %3199 = vst [vmem:[#allocation3 + $0x1c8] sm:$0xf] %v3167
        %3200 = vst [vmem:[#allocation3 + $0x1ec] sm:$0xf] %v3168
        %3201 = vst [vmem:[#allocation3 + $0x210] sm:$0xf] %v3169
        %3202 = vst [vmem:[#allocation3 + $0x234] sm:$0xf] %v3170
        %3203 = vst [vmem:[#allocation3 + $0x258] sm:$0xf] %v3171
        %3204 = vst [vmem:[#allocation3 + $0x27c] sm:$0xf] %v3172
        %3205 = vst [vmem:[#allocation3 + $0x2a0] sm:$0xf] %v3173
        %3206 = vst [vmem:[#allocation3 + $0x2c4] sm:$0xf] %v3174
        %3207 = vst [vmem:[#allocation3 + $0x2e8] sm:$0xf] %v3175
        %3208 = vst [vmem:[#allocation3 + $0x30c] sm:$0xf] %v3176
        %3209 = vst [vmem:[#allocation3 + $0x330] sm:$0xf] %v3177
        %3210 = vst [vmem:[#allocation3 + $0x354] sm:$0xf] %v3178
        %3211 = vst [vmem:[#allocation3 + $0x378] sm:$0xf] %v3179
        %3212 = vst [vmem:[#allocation3 + $0x39c] sm:$0xf] %v3180
        %3213 = vst [vmem:[#allocation3 + $0x3c0] sm:$0xf] %v3181
        %3214 = vst [vmem:[#allocation3 + $0x3e4] sm:$0xf] %v3182
        %3215 = vst [vmem:[#allocation3 + $0x408] sm:$0xf] %v3183
        %3216 = vst [vmem:[#allocation3 + $0x42c] sm:$0xf] %v3184
        %3217 = vst [vmem:[#allocation3 + $0x450] sm:$0xf] %v3185
        %3218 = vst [vmem:[#allocation3 + $0x474] sm:$0xf] %v3186
        %v3219 = vld [vmem:[%s3154] sm:$0xf]
        %v3220 = vld [vmem:[%s3154 + $0x4] sm:$0xf]
        %v3221 = vld [vmem:[%s3154 + $0x8] sm:$0x1]
        %v3222 = vld [vmem:[%s3154 + $0xc] sm:$0xf]
        %v3223 = vld [vmem:[%s3154 + $0x10] sm:$0xf]
        %v3224 = vld [vmem:[%s3154 + $0x14] sm:$0x1]
        %v3225 = vld [vmem:[%s3154 + $0x18] sm:$0xf]
        %v3226 = vld [vmem:[%s3154 + $0x1c] sm:$0xf]
        %v3227 = vld [vmem:[%s3154 + $0x20] sm:$0x1]
        %v3228 = vld [vmem:[%s3154 + $0x24] sm:$0xf]
        %v3229 = vld [vmem:[%s3154 + $0x28] sm:$0xf]
        %v3230 = vld [vmem:[%s3154 + $0x2c] sm:$0x1]
        %v3231 = vld [vmem:[%s3154 + $0x30] sm:$0xf]
        %v3232 = vld [vmem:[%s3154 + $0x34] sm:$0xf]
        %v3233 = vld [vmem:[%s3154 + $0x38] sm:$0x1]
        %v3234 = vld [vmem:[%s3154 + $0x3c] sm:$0xf]
        %v3235 = vld [vmem:[%s3154 + $0x40] sm:$0xf]
        %v3236 = vld [vmem:[%s3154 + $0x44] sm:$0x1]
        %v3237 = vld [vmem:[%s3154 + $0x48] sm:$0xf]
        %v3238 = vld [vmem:[%s3154 + $0x4c] sm:$0xf]
        %v3239 = vld [vmem:[%s3154 + $0x50] sm:$0x1]
        %v3240 = vld [vmem:[%s3154 + $0x54] sm:$0xf]
        %v3241 = vld [vmem:[%s3154 + $0x58] sm:$0xf]
        %v3242 = vld [vmem:[%s3154 + $0x5c] sm:$0x1]
        %v3243 = vld [vmem:[%s3154 + $0x60] sm:$0xf]
        %v3244 = vld [vmem:[%s3154 + $0x64] sm:$0xf]
        %v3245 = vld [vmem:[%s3154 + $0x68] sm:$0x1]
        %v3246 = vld [vmem:[%s3154 + $0x6c] sm:$0xf]
        %v3247 = vld [vmem:[%s3154 + $0x70] sm:$0xf]
        %v3248 = vld [vmem:[%s3154 + $0x74] sm:$0x1]
        %v3249 = vld [vmem:[%s3154 + $0x78] sm:$0xf]
        %v3250 = vld [vmem:[%s3154 + $0x7c] sm:$0xf]
        %v3251 = vld [vmem:[%s3154 + $0x80] sm:$0x1]
        %v3252 = vld [vmem:[%s3154 + $0x84] sm:$0xf]
        %v3253 = vld [vmem:[%s3154 + $0x88] sm:$0xf]
        %v3254 = vld [vmem:[%s3154 + $0x8c] sm:$0x1]
        %v3255 = vld [vmem:[%s3154 + $0x90] sm:$0xf]
        %v3256 = vld [vmem:[%s3154 + $0x94] sm:$0xf]
        %v3257 = vld [vmem:[%s3154 + $0x98] sm:$0x1]
        %v3258 = vld [vmem:[%s3154 + $0x9c] sm:$0xf]
        %v3259 = vld [vmem:[%s3154 + $0xa0] sm:$0xf]
        %v3260 = vld [vmem:[%s3154 + $0xa4] sm:$0x1]
        %v3261 = vld [vmem:[%s3154 + $0xa8] sm:$0xf]
        %v3262 = vld [vmem:[%s3154 + $0xac] sm:$0xf]
        %v3263 = vld [vmem:[%s3154 + $0xb0] sm:$0x1]
        %v3264 = vld [vmem:[%s3154 + $0xb4] sm:$0xf]
        %v3265 = vld [vmem:[%s3154 + $0xb8] sm:$0xf]
        %v3266 = vld [vmem:[%s3154 + $0xbc] sm:$0x1]
        %v3268 = vshrl.u32 %v3219, 16
        %v3270 = vrot.slane %v3268, 4
        %v3271 = vshll.u32 %v3219, 16
        %v3273 = vrot.slane %v3271, 5
        %v3274 = vor.u32 %v3270, %v3273
        %v3275 = vrot.slane %v3274, 4
        %v3277 = vshll.u32 %v3220, 16
        %v3279 = vrot.slane %v3277, 5
        %v3280 = vsel %vm1598, %v3275, %v3279
        %v3281 = vshrl.u32 %v3220, 16
        %v3283 = vrot.slane %v3281, 4
        %v3284 = vor.u32 %v3283, %v3279
        %v3285 = vrot.slane %v3284, 4
        %v3287 = vshll.u32 %v3221, 16
        %v3289 = vrot.slane %v3287, 5
        %v3290 = vsel %vm1598, %v3285, %v3289
        %v3292 = vshrl.u32 %v3222, 16
        %v3294 = vrot.slane %v3292, 4
        %v3295 = vshll.u32 %v3222, 16
        %v3297 = vrot.slane %v3295, 5
        %v3298 = vor.u32 %v3294, %v3297
        %v3299 = vrot.slane %v3298, 4
        %v3301 = vshll.u32 %v3223, 16
        %v3303 = vrot.slane %v3301, 5
        %v3304 = vsel %vm1598, %v3299, %v3303
        %v3305 = vshrl.u32 %v3223, 16
        %v3307 = vrot.slane %v3305, 4
        %v3308 = vor.u32 %v3307, %v3303
        %v3309 = vrot.slane %v3308, 4
        %v3311 = vshll.u32 %v3224, 16
        %v3313 = vrot.slane %v3311, 5
        %v3314 = vsel %vm1598, %v3309, %v3313
        %v3316 = vshrl.u32 %v3225, 16
        %v3318 = vrot.slane %v3316, 4
        %v3319 = vshll.u32 %v3225, 16
        %v3321 = vrot.slane %v3319, 5
        %v3322 = vor.u32 %v3318, %v3321
        %v3323 = vrot.slane %v3322, 4
        %v3325 = vshll.u32 %v3226, 16
        %v3327 = vrot.slane %v3325, 5
        %v3328 = vsel %vm1598, %v3323, %v3327
        %v3329 = vshrl.u32 %v3226, 16
        %v3331 = vrot.slane %v3329, 4
        %v3332 = vor.u32 %v3331, %v3327
        %v3333 = vrot.slane %v3332, 4
        %v3335 = vshll.u32 %v3227, 16
        %v3337 = vrot.slane %v3335, 5
        %v3338 = vsel %vm1598, %v3333, %v3337
        %v3340 = vshrl.u32 %v3228, 16
        %v3342 = vrot.slane %v3340, 4
        %v3343 = vshll.u32 %v3228, 16
        %v3345 = vrot.slane %v3343, 5
        %v3346 = vor.u32 %v3342, %v3345
        %v3347 = vrot.slane %v3346, 4
        %v3349 = vshll.u32 %v3229, 16
        %v3351 = vrot.slane %v3349, 5
        %v3352 = vsel %vm1598, %v3347, %v3351
        %v3353 = vshrl.u32 %v3229, 16
        %v3355 = vrot.slane %v3353, 4
        %v3356 = vor.u32 %v3355, %v3351
        %v3357 = vrot.slane %v3356, 4
        %v3359 = vshll.u32 %v3230, 16
        %v3361 = vrot.slane %v3359, 5
        %v3362 = vsel %vm1598, %v3357, %v3361
        %v3364 = vshrl.u32 %v3231, 16
        %v3366 = vrot.slane %v3364, 4
        %v3367 = vshll.u32 %v3231, 16
        %v3369 = vrot.slane %v3367, 5
        %v3370 = vor.u32 %v3366, %v3369
        %v3371 = vrot.slane %v3370, 4
        %v3373 = vshll.u32 %v3232, 16
        %v3375 = vrot.slane %v3373, 5
        %v3376 = vsel %vm1598, %v3371, %v3375
        %v3377 = vshrl.u32 %v3232, 16
        %v3379 = vrot.slane %v3377, 4
        %v3380 = vor.u32 %v3379, %v3375
        %v3381 = vrot.slane %v3380, 4
        %v3383 = vshll.u32 %v3233, 16
        %v3385 = vrot.slane %v3383, 5
        %v3386 = vsel %vm1598, %v3381, %v3385
        %v3388 = vshrl.u32 %v3234, 16
        %v3390 = vrot.slane %v3388, 4
        %v3391 = vshll.u32 %v3234, 16
        %v3393 = vrot.slane %v3391, 5
        %v3394 = vor.u32 %v3390, %v3393
        %v3395 = vrot.slane %v3394, 4
        %v3397 = vshll.u32 %v3235, 16
        %v3399 = vrot.slane %v3397, 5
        %v3400 = vsel %vm1598, %v3395, %v3399
        %v3401 = vshrl.u32 %v3235, 16
        %v3403 = vrot.slane %v3401, 4
        %v3404 = vor.u32 %v3403, %v3399
        %v3405 = vrot.slane %v3404, 4
        %v3407 = vshll.u32 %v3236, 16
        %v3409 = vrot.slane %v3407, 5
        %v3410 = vsel %vm1598, %v3405, %v3409
        %v3412 = vshrl.u32 %v3237, 16
        %v3414 = vrot.slane %v3412, 4
        %v3415 = vshll.u32 %v3237, 16
        %v3417 = vrot.slane %v3415, 5
        %v3418 = vor.u32 %v3414, %v3417
        %v3419 = vrot.slane %v3418, 4
        %v3421 = vshll.u32 %v3238, 16
        %v3423 = vrot.slane %v3421, 5
        %v3424 = vsel %vm1598, %v3419, %v3423
        %v3425 = vshrl.u32 %v3238, 16
        %v3427 = vrot.slane %v3425, 4
        %v3428 = vor.u32 %v3427, %v3423
        %v3429 = vrot.slane %v3428, 4
        %v3431 = vshll.u32 %v3239, 16
        %v3433 = vrot.slane %v3431, 5
        %v3434 = vsel %vm1598, %v3429, %v3433
        %v3436 = vshrl.u32 %v3240, 16
        %v3438 = vrot.slane %v3436, 4
        %v3439 = vshll.u32 %v3240, 16
        %v3441 = vrot.slane %v3439, 5
        %v3442 = vor.u32 %v3438, %v3441
        %v3443 = vrot.slane %v3442, 4
        %v3445 = vshll.u32 %v3241, 16
        %v3447 = vrot.slane %v3445, 5
        %v3448 = vsel %vm1598, %v3443, %v3447
        %v3449 = vshrl.u32 %v3241, 16
        %v3451 = vrot.slane %v3449, 4
        %v3452 = vor.u32 %v3451, %v3447
        %v3453 = vrot.slane %v3452, 4
        %v3455 = vshll.u32 %v3242, 16
        %v3457 = vrot.slane %v3455, 5
        %v3458 = vsel %vm1598, %v3453, %v3457
        %v3460 = vshrl.u32 %v3243, 16
        %v3462 = vrot.slane %v3460, 4
        %v3463 = vshll.u32 %v3243, 16
        %v3465 = vrot.slane %v3463, 5
        %v3466 = vor.u32 %v3462, %v3465
        %v3467 = vrot.slane %v3466, 4
        %v3469 = vshll.u32 %v3244, 16
        %v3471 = vrot.slane %v3469, 5
        %v3472 = vsel %vm1598, %v3467, %v3471
        %v3473 = vshrl.u32 %v3244, 16
        %v3475 = vrot.slane %v3473, 4
        %v3476 = vor.u32 %v3475, %v3471
        %v3477 = vrot.slane %v3476, 4
        %v3479 = vshll.u32 %v3245, 16
        %v3481 = vrot.slane %v3479, 5
        %v3482 = vsel %vm1598, %v3477, %v3481
        %v3484 = vshrl.u32 %v3246, 16
        %v3486 = vrot.slane %v3484, 4
        %v3487 = vshll.u32 %v3246, 16
        %v3489 = vrot.slane %v3487, 5
        %v3490 = vor.u32 %v3486, %v3489
        %v3491 = vrot.slane %v3490, 4
        %v3493 = vshll.u32 %v3247, 16
        %v3495 = vrot.slane %v3493, 5
        %v3496 = vsel %vm1598, %v3491, %v3495
        %v3497 = vshrl.u32 %v3247, 16
        %v3499 = vrot.slane %v3497, 4
        %v3500 = vor.u32 %v3499, %v3495
        %v3501 = vrot.slane %v3500, 4
        %v3503 = vshll.u32 %v3248, 16
        %v3505 = vrot.slane %v3503, 5
        %v3506 = vsel %vm1598, %v3501, %v3505
        %v3508 = vshrl.u32 %v3249, 16
        %v3510 = vrot.slane %v3508, 4
        %v3511 = vshll.u32 %v3249, 16
        %v3513 = vrot.slane %v3511, 5
        %v3514 = vor.u32 %v3510, %v3513
        %v3515 = vrot.slane %v3514, 4
        %v3517 = vshll.u32 %v3250, 16
        %v3519 = vrot.slane %v3517, 5
        %v3520 = vsel %vm1598, %v3515, %v3519
        %v3521 = vshrl.u32 %v3250, 16
        %v3523 = vrot.slane %v3521, 4
        %v3524 = vor.u32 %v3523, %v3519
        %v3525 = vrot.slane %v3524, 4
        %v3527 = vshll.u32 %v3251, 16
        %v3529 = vrot.slane %v3527, 5
        %v3530 = vsel %vm1598, %v3525, %v3529
        %v3532 = vshrl.u32 %v3252, 16
        %v3534 = vrot.slane %v3532, 4
        %v3535 = vshll.u32 %v3252, 16
        %v3537 = vrot.slane %v3535, 5
        %v3538 = vor.u32 %v3534, %v3537
        %v3539 = vrot.slane %v3538, 4
        %v3541 = vshll.u32 %v3253, 16
        %v3543 = vrot.slane %v3541, 5
        %v3544 = vsel %vm1598, %v3539, %v3543
        %v3545 = vshrl.u32 %v3253, 16
        %v3547 = vrot.slane %v3545, 4
        %v3548 = vor.u32 %v3547, %v3543
        %v3549 = vrot.slane %v3548, 4
        %v3551 = vshll.u32 %v3254, 16
        %v3553 = vrot.slane %v3551, 5
        %v3554 = vsel %vm1598, %v3549, %v3553
        %v3556 = vshrl.u32 %v3255, 16
        %v3558 = vrot.slane %v3556, 4
        %v3559 = vshll.u32 %v3255, 16
        %v3561 = vrot.slane %v3559, 5
        %v3562 = vor.u32 %v3558, %v3561
        %v3563 = vrot.slane %v3562, 4
        %v3565 = vshll.u32 %v3256, 16
        %v3567 = vrot.slane %v3565, 5
        %v3568 = vsel %vm1598, %v3563, %v3567
        %v3569 = vshrl.u32 %v3256, 16
        %v3571 = vrot.slane %v3569, 4
        %v3572 = vor.u32 %v3571, %v3567
        %v3573 = vrot.slane %v3572, 4
        %v3575 = vshll.u32 %v3257, 16
        %v3577 = vrot.slane %v3575, 5
        %v3578 = vsel %vm1598, %v3573, %v3577
        %v3580 = vshrl.u32 %v3258, 16
        %v3582 = vrot.slane %v3580, 4
        %v3583 = vshll.u32 %v3258, 16
        %v3585 = vrot.slane %v3583, 5
        %v3586 = vor.u32 %v3582, %v3585
        %v3587 = vrot.slane %v3586, 4
        %v3589 = vshll.u32 %v3259, 16
        %v3591 = vrot.slane %v3589, 5
        %v3592 = vsel %vm1598, %v3587, %v3591
        %v3593 = vshrl.u32 %v3259, 16
        %v3595 = vrot.slane %v3593, 4
        %v3596 = vor.u32 %v3595, %v3591
        %v3597 = vrot.slane %v3596, 4
        %v3599 = vshll.u32 %v3260, 16
        %v3601 = vrot.slane %v3599, 5
        %v3602 = vsel %vm1598, %v3597, %v3601
        %v3604 = vshrl.u32 %v3261, 16
        %v3606 = vrot.slane %v3604, 4
        %v3607 = vshll.u32 %v3261, 16
        %v3609 = vrot.slane %v3607, 5
        %v3610 = vor.u32 %v3606, %v3609
        %v3611 = vrot.slane %v3610, 4
        %v3613 = vshll.u32 %v3262, 16
        %v3615 = vrot.slane %v3613, 5
        %v3616 = vsel %vm1598, %v3611, %v3615
        %v3617 = vshrl.u32 %v3262, 16
        %v3619 = vrot.slane %v3617, 4
        %v3620 = vor.u32 %v3619, %v3615
        %v3621 = vrot.slane %v3620, 4
        %v3623 = vshll.u32 %v3263, 16
        %v3625 = vrot.slane %v3623, 5
        %v3626 = vsel %vm1598, %v3621, %v3625
        %v3628 = vshrl.u32 %v3264, 16
        %v3630 = vrot.slane %v3628, 4
        %v3631 = vshll.u32 %v3264, 16
        %v3633 = vrot.slane %v3631, 5
        %v3634 = vor.u32 %v3630, %v3633
        %v3635 = vrot.slane %v3634, 4
        %v3637 = vshll.u32 %v3265, 16
        %v3639 = vrot.slane %v3637, 5
        %v3640 = vsel %vm1598, %v3635, %v3639
        %v3641 = vshrl.u32 %v3265, 16
        %v3643 = vrot.slane %v3641, 4
        %v3644 = vor.u32 %v3643, %v3639
        %v3645 = vrot.slane %v3644, 4
        %v3647 = vshll.u32 %v3266, 16
        %v3649 = vrot.slane %v3647, 5
        %v3650 = vsel %vm1598, %v3645, %v3649
        %3683 = vst [vmem:[#allocation3 + $0x1c] sm:$0xf] %v3280
        %3684 = vst [vmem:[#allocation3 + $0x40] sm:$0xf] %v3290
        %3685 = vst [vmem:[#allocation3 + $0x64] sm:$0xf] %v3304
        %3686 = vst [vmem:[#allocation3 + $0x88] sm:$0xf] %v3314
        %3687 = vst [vmem:[#allocation3 + $0xac] sm:$0xf] %v3328
        %3688 = vst [vmem:[#allocation3 + $0xd0] sm:$0xf] %v3338
        %3689 = vst [vmem:[#allocation3 + $0xf4] sm:$0xf] %v3352
        %3690 = vst [vmem:[#allocation3 + $0x118] sm:$0xf] %v3362
        %3691 = vst [vmem:[#allocation3 + $0x13c] sm:$0xf] %v3376
        %3692 = vst [vmem:[#allocation3 + $0x160] sm:$0xf] %v3386
        %3693 = vst [vmem:[#allocation3 + $0x184] sm:$0xf] %v3400
        %3694 = vst [vmem:[#allocation3 + $0x1a8] sm:$0xf] %v3410
        %3695 = vst [vmem:[#allocation3 + $0x1cc] sm:$0xf] %v3424
        %3696 = vst [vmem:[#allocation3 + $0x1f0] sm:$0xf] %v3434
        %3697 = vst [vmem:[#allocation3 + $0x214] sm:$0xf] %v3448
        %3698 = vst [vmem:[#allocation3 + $0x238] sm:$0xf] %v3458
        %3699 = vst [vmem:[#allocation3 + $0x25c] sm:$0xf] %v3472
        %3700 = vst [vmem:[#allocation3 + $0x280] sm:$0xf] %v3482
        %3701 = vst [vmem:[#allocation3 + $0x2a4] sm:$0xf] %v3496
        %3702 = vst [vmem:[#allocation3 + $0x2c8] sm:$0xf] %v3506
        %3703 = vst [vmem:[#allocation3 + $0x2ec] sm:$0xf] %v3520
        %3704 = vst [vmem:[#allocation3 + $0x310] sm:$0xf] %v3530
        %3705 = vst [vmem:[#allocation3 + $0x334] sm:$0xf] %v3544
        %3706 = vst [vmem:[#allocation3 + $0x358] sm:$0xf] %v3554
        %3707 = vst [vmem:[#allocation3 + $0x37c] sm:$0xf] %v3568
        %3708 = vst [vmem:[#allocation3 + $0x3a0] sm:$0xf] %v3578
        %3709 = vst [vmem:[#allocation3 + $0x3c4] sm:$0xf] %v3592
        %3710 = vst [vmem:[#allocation3 + $0x3e8] sm:$0xf] %v3602
        %3711 = vst [vmem:[#allocation3 + $0x40c] sm:$0xf] %v3616
        %3712 = vst [vmem:[#allocation3 + $0x430] sm:$0xf] %v3626
        %3713 = vst [vmem:[#allocation3 + $0x454] sm:$0xf] %v3640
        %3714 = vst [vmem:[#allocation3 + $0x478] sm:$0xf] %v3650
        %v3715 = vld [vmem:[%s3154] sm:$0xe]
        %v3716 = vld [vmem:[%s3154 + $0x4] sm:$0xf]
        %v3717 = vld [vmem:[%s3154 + $0x8] sm:$0x1]
        %v3718 = vld [vmem:[%s3154 + $0xc] sm:$0xe]
        %v3719 = vld [vmem:[%s3154 + $0x10] sm:$0xf]
        %v3720 = vld [vmem:[%s3154 + $0x14] sm:$0x1]
        %v3721 = vld [vmem:[%s3154 + $0x18] sm:$0xe]
        %v3722 = vld [vmem:[%s3154 + $0x1c] sm:$0xf]
        %v3723 = vld [vmem:[%s3154 + $0x20] sm:$0x1]
        %v3724 = vld [vmem:[%s3154 + $0x24] sm:$0xe]
        %v3725 = vld [vmem:[%s3154 + $0x28] sm:$0xf]
        %v3726 = vld [vmem:[%s3154 + $0x2c] sm:$0x1]
        %v3727 = vld [vmem:[%s3154 + $0x30] sm:$0xe]
        %v3728 = vld [vmem:[%s3154 + $0x34] sm:$0xf]
        %v3729 = vld [vmem:[%s3154 + $0x38] sm:$0x1]
        %v3730 = vld [vmem:[%s3154 + $0x3c] sm:$0xe]
        %v3731 = vld [vmem:[%s3154 + $0x40] sm:$0xf]
        %v3732 = vld [vmem:[%s3154 + $0x44] sm:$0x1]
        %v3733 = vld [vmem:[%s3154 + $0x48] sm:$0xe]
        %v3734 = vld [vmem:[%s3154 + $0x4c] sm:$0xf]
        %v3735 = vld [vmem:[%s3154 + $0x50] sm:$0x1]
        %v3736 = vld [vmem:[%s3154 + $0x54] sm:$0xe]
        %v3737 = vld [vmem:[%s3154 + $0x58] sm:$0xf]
        %v3738 = vld [vmem:[%s3154 + $0x5c] sm:$0x1]
        %v3739 = vld [vmem:[%s3154 + $0x60] sm:$0xe]
        %v3740 = vld [vmem:[%s3154 + $0x64] sm:$0xf]
        %v3741 = vld [vmem:[%s3154 + $0x68] sm:$0x1]
        %v3742 = vld [vmem:[%s3154 + $0x6c] sm:$0xe]
        %v3743 = vld [vmem:[%s3154 + $0x70] sm:$0xf]
        %v3744 = vld [vmem:[%s3154 + $0x74] sm:$0x1]
        %v3745 = vld [vmem:[%s3154 + $0x78] sm:$0xe]
        %v3746 = vld [vmem:[%s3154 + $0x7c] sm:$0xf]
        %v3747 = vld [vmem:[%s3154 + $0x80] sm:$0x1]
        %v3748 = vld [vmem:[%s3154 + $0x84] sm:$0xe]
        %v3749 = vld [vmem:[%s3154 + $0x88] sm:$0xf]
        %v3750 = vld [vmem:[%s3154 + $0x8c] sm:$0x1]
        %v3751 = vld [vmem:[%s3154 + $0x90] sm:$0xe]
        %v3752 = vld [vmem:[%s3154 + $0x94] sm:$0xf]
        %v3753 = vld [vmem:[%s3154 + $0x98] sm:$0x1]
        %v3754 = vld [vmem:[%s3154 + $0x9c] sm:$0xe]
        %v3755 = vld [vmem:[%s3154 + $0xa0] sm:$0xf]
        %v3756 = vld [vmem:[%s3154 + $0xa4] sm:$0x1]
        %v3757 = vld [vmem:[%s3154 + $0xa8] sm:$0xe]
        %v3758 = vld [vmem:[%s3154 + $0xac] sm:$0xf]
        %v3759 = vld [vmem:[%s3154 + $0xb0] sm:$0x1]
        %v3760 = vld [vmem:[%s3154 + $0xb4] sm:$0xe]
        %v3761 = vld [vmem:[%s3154 + $0xb8] sm:$0xf]
        %v3762 = vld [vmem:[%s3154 + $0xbc] sm:$0x1]
        %v3811 = vrot.slane %v3715, 5
        %v3812 = vrot.slane %v3811, 4
        %v3813 = vrot.slane %v3716, 5
        %v3814 = vsel %vm2145, %v3812, %v3813
        %v3815 = vrot.slane %v3813, 4
        %v3816 = vrot.slane %v3717, 5
        %v3817 = vsel %vm2145, %v3815, %v3816
        %v3818 = vrot.slane %v3718, 5
        %v3819 = vrot.slane %v3818, 4
        %v3820 = vrot.slane %v3719, 5
        %v3821 = vsel %vm2145, %v3819, %v3820
        %v3822 = vrot.slane %v3820, 4
        %v3823 = vrot.slane %v3720, 5
        %v3824 = vsel %vm2145, %v3822, %v3823
        %v3825 = vrot.slane %v3721, 5
        %v3826 = vrot.slane %v3825, 4
        %v3827 = vrot.slane %v3722, 5
        %v3828 = vsel %vm2145, %v3826, %v3827
        %v3829 = vrot.slane %v3827, 4
        %v3830 = vrot.slane %v3723, 5
        %v3831 = vsel %vm2145, %v3829, %v3830
        %v3832 = vrot.slane %v3724, 5
        %v3833 = vrot.slane %v3832, 4
        %v3834 = vrot.slane %v3725, 5
        %v3835 = vsel %vm2145, %v3833, %v3834
        %v3836 = vrot.slane %v3834, 4
        %v3837 = vrot.slane %v3726, 5
        %v3838 = vsel %vm2145, %v3836, %v3837
        %v3839 = vrot.slane %v3727, 5
        %v3840 = vrot.slane %v3839, 4
        %v3841 = vrot.slane %v3728, 5
        %v3842 = vsel %vm2145, %v3840, %v3841
        %v3843 = vrot.slane %v3841, 4
        %v3844 = vrot.slane %v3729, 5
        %v3845 = vsel %vm2145, %v3843, %v3844
        %v3846 = vrot.slane %v3730, 5
        %v3847 = vrot.slane %v3846, 4
        %v3848 = vrot.slane %v3731, 5
        %v3849 = vsel %vm2145, %v3847, %v3848
        %v3850 = vrot.slane %v3848, 4
        %v3851 = vrot.slane %v3732, 5
        %v3852 = vsel %vm2145, %v3850, %v3851
        %v3853 = vrot.slane %v3733, 5
        %v3854 = vrot.slane %v3853, 4
        %v3855 = vrot.slane %v3734, 5
        %v3856 = vsel %vm2145, %v3854, %v3855
        %v3857 = vrot.slane %v3855, 4
        %v3858 = vrot.slane %v3735, 5
        %v3859 = vsel %vm2145, %v3857, %v3858
        %v3860 = vrot.slane %v3736, 5
        %v3861 = vrot.slane %v3860, 4
        %v3862 = vrot.slane %v3737, 5
        %v3863 = vsel %vm2145, %v3861, %v3862
        %v3864 = vrot.slane %v3862, 4
        %v3865 = vrot.slane %v3738, 5
        %v3866 = vsel %vm2145, %v3864, %v3865
        %v3867 = vrot.slane %v3739, 5
        %v3868 = vrot.slane %v3867, 4
        %v3869 = vrot.slane %v3740, 5
        %v3870 = vsel %vm2145, %v3868, %v3869
        %v3871 = vrot.slane %v3869, 4
        %v3872 = vrot.slane %v3741, 5
        %v3873 = vsel %vm2145, %v3871, %v3872
        %v3874 = vrot.slane %v3742, 5
        %v3875 = vrot.slane %v3874, 4
        %v3876 = vrot.slane %v3743, 5
        %v3877 = vsel %vm2145, %v3875, %v3876
        %v3878 = vrot.slane %v3876, 4
        %v3879 = vrot.slane %v3744, 5
        %v3880 = vsel %vm2145, %v3878, %v3879
        %v3881 = vrot.slane %v3745, 5
        %v3882 = vrot.slane %v3881, 4
        %v3883 = vrot.slane %v3746, 5
        %v3884 = vsel %vm2145, %v3882, %v3883
        %v3885 = vrot.slane %v3883, 4
        %v3886 = vrot.slane %v3747, 5
        %v3887 = vsel %vm2145, %v3885, %v3886
        %v3888 = vrot.slane %v3748, 5
        %v3889 = vrot.slane %v3888, 4
        %v3890 = vrot.slane %v3749, 5
        %v3891 = vsel %vm2145, %v3889, %v3890
        %v3892 = vrot.slane %v3890, 4
        %v3893 = vrot.slane %v3750, 5
        %v3894 = vsel %vm2145, %v3892, %v3893
        %v3895 = vrot.slane %v3751, 5
        %v3896 = vrot.slane %v3895, 4
        %v3897 = vrot.slane %v3752, 5
        %v3898 = vsel %vm2145, %v3896, %v3897
        %v3899 = vrot.slane %v3897, 4
        %v3900 = vrot.slane %v3753, 5
        %v3901 = vsel %vm2145, %v3899, %v3900
        %v3902 = vrot.slane %v3754, 5
        %v3903 = vrot.slane %v3902, 4
        %v3904 = vrot.slane %v3755, 5
        %v3905 = vsel %vm2145, %v3903, %v3904
        %v3906 = vrot.slane %v3904, 4
        %v3907 = vrot.slane %v3756, 5
        %v3908 = vsel %vm2145, %v3906, %v3907
        %v3909 = vrot.slane %v3757, 5
        %v3910 = vrot.slane %v3909, 4
        %v3911 = vrot.slane %v3758, 5
        %v3912 = vsel %vm2145, %v3910, %v3911
        %v3913 = vrot.slane %v3911, 4
        %v3914 = vrot.slane %v3759, 5
        %v3915 = vsel %vm2145, %v3913, %v3914
        %v3916 = vrot.slane %v3760, 5
        %v3917 = vrot.slane %v3916, 4
        %v3918 = vrot.slane %v3761, 5
        %v3919 = vsel %vm2145, %v3917, %v3918
        %v3920 = vrot.slane %v3918, 4
        %v3921 = vrot.slane %v3762, 5
        %v3922 = vsel %vm2145, %v3920, %v3921
        %3955 = vst [vmem:[#allocation3 + $0x20] sm:$0xf] %v3814
        %3956 = vst [vmem:[#allocation3 + $0x44] sm:$0xf] %v3817
        %3957 = vst [vmem:[#allocation3 + $0x68] sm:$0xf] %v3821
        %3958 = vst [vmem:[#allocation3 + $0x8c] sm:$0xf] %v3824
        %3959 = vst [vmem:[#allocation3 + $0xb0] sm:$0xf] %v3828
        %3960 = vst [vmem:[#allocation3 + $0xd4] sm:$0xf] %v3831
        %3961 = vst [vmem:[#allocation3 + $0xf8] sm:$0xf] %v3835
        %3962 = vst [vmem:[#allocation3 + $0x11c] sm:$0xf] %v3838
        %3963 = vst [vmem:[#allocation3 + $0x140] sm:$0xf] %v3842
        %3964 = vst [vmem:[#allocation3 + $0x164] sm:$0xf] %v3845
        %3965 = vst [vmem:[#allocation3 + $0x188] sm:$0xf] %v3849
        %3966 = vst [vmem:[#allocation3 + $0x1ac] sm:$0xf] %v3852
        %3967 = vst [vmem:[#allocation3 + $0x1d0] sm:$0xf] %v3856
        %3968 = vst [vmem:[#allocation3 + $0x1f4] sm:$0xf] %v3859
        %3969 = vst [vmem:[#allocation3 + $0x218] sm:$0xf] %v3863
        %3970 = vst [vmem:[#allocation3 + $0x23c] sm:$0xf] %v3866
        %3971 = vst [vmem:[#allocation3 + $0x260] sm:$0xf] %v3870
        %3972 = vst [vmem:[#allocation3 + $0x284] sm:$0xf] %v3873
        %3973 = vst [vmem:[#allocation3 + $0x2a8] sm:$0xf] %v3877
        %3974 = vst [vmem:[#allocation3 + $0x2cc] sm:$0xf] %v3880
        %3975 = vst [vmem:[#allocation3 + $0x2f0] sm:$0xf] %v3884
        %3976 = vst [vmem:[#allocation3 + $0x314] sm:$0xf] %v3887
        %3977 = vst [vmem:[#allocation3 + $0x338] sm:$0xf] %v3891
        %3978 = vst [vmem:[#allocation3 + $0x35c] sm:$0xf] %v3894
        %3979 = vst [vmem:[#allocation3 + $0x380] sm:$0xf] %v3898
        %3980 = vst [vmem:[#allocation3 + $0x3a4] sm:$0xf] %v3901
        %3981 = vst [vmem:[#allocation3 + $0x3c8] sm:$0xf] %v3905
        %3982 = vst [vmem:[#allocation3 + $0x3ec] sm:$0xf] %v3908
        %3983 = vst [vmem:[#allocation3 + $0x410] sm:$0xf] %v3912
        %3984 = vst [vmem:[#allocation3 + $0x434] sm:$0xf] %v3915
        %3985 = vst [vmem:[#allocation3 + $0x458] sm:$0xf] %v3919
        %3986 = vst [vmem:[#allocation3 + $0x47c] sm:$0xf] %v3922
        %v3987 = vld [vmem:[#allocation3] sm:$0xff]
        %v3988 = vld [vmem:[#allocation3 + $0x8] sm:$0xff]
        %v3989 = vld [vmem:[#allocation3 + $0x10] sm:$0xff]
        %v3990 = vld [vmem:[#allocation3 + $0x18] sm:$0xff]
        %v3991 = vld [vmem:[#allocation3 + $0x20] sm:$0xf]
        %v3992 = vld [vmem:[#allocation3 + $0x24] sm:$0xff]
        %v3993 = vld [vmem:[#allocation3 + $0x2c] sm:$0xff]
        %v3994 = vld [vmem:[#allocation3 + $0x34] sm:$0xff]
        %v3995 = vld [vmem:[#allocation3 + $0x3c] sm:$0xff]
        %v3996 = vld [vmem:[#allocation3 + $0x44] sm:$0xf]
        %v3997 = vld [vmem:[#allocation3 + $0x48] sm:$0xff]
        %v3998 = vld [vmem:[#allocation3 + $0x50] sm:$0xff]
        %v3999 = vld [vmem:[#allocation3 + $0x58] sm:$0xff]
        %v4000 = vld [vmem:[#allocation3 + $0x60] sm:$0xff]
        %v4001 = vld [vmem:[#allocation3 + $0x68] sm:$0xf]
        %v4002 = vld [vmem:[#allocation3 + $0x6c] sm:$0xff]
        %v4003 = vld [vmem:[#allocation3 + $0x74] sm:$0xff]
        %v4004 = vld [vmem:[#allocation3 + $0x7c] sm:$0xff]
        %v4005 = vld [vmem:[#allocation3 + $0x84] sm:$0xff]
        %v4006 = vld [vmem:[#allocation3 + $0x8c] sm:$0xf]
        %v4007 = vld [vmem:[#allocation3 + $0x90] sm:$0xff]
        %v4008 = vld [vmem:[#allocation3 + $0x98] sm:$0xff]
        %v4009 = vld [vmem:[#allocation3 + $0xa0] sm:$0xff]
        %v4010 = vld [vmem:[#allocation3 + $0xa8] sm:$0xff]
        %v4011 = vld [vmem:[#allocation3 + $0xb0] sm:$0xf]
        %v4012 = vld [vmem:[#allocation3 + $0xb4] sm:$0xff]
        %v4013 = vld [vmem:[#allocation3 + $0xbc] sm:$0xff]
        %v4014 = vld [vmem:[#allocation3 + $0xc4] sm:$0xff]
        %v4015 = vld [vmem:[#allocation3 + $0xcc] sm:$0xff]
        %v4016 = vld [vmem:[#allocation3 + $0xd4] sm:$0xf]
        %v4017 = vld [vmem:[#allocation3 + $0xd8] sm:$0xff]
        %v4018 = vld [vmem:[#allocation3 + $0xe0] sm:$0xff]
        %v4019 = vld [vmem:[#allocation3 + $0xe8] sm:$0xff]
        %v4020 = vld [vmem:[#allocation3 + $0xf0] sm:$0xff]
        %v4021 = vld [vmem:[#allocation3 + $0xf8] sm:$0xf]
        %v4022 = vld [vmem:[#allocation3 + $0xfc] sm:$0xff]
        %v4023 = vld [vmem:[#allocation3 + $0x104] sm:$0xff]
        %v4024 = vld [vmem:[#allocation3 + $0x10c] sm:$0xff]
        %v4025 = vld [vmem:[#allocation3 + $0x114] sm:$0xff]
        %v4026 = vld [vmem:[#allocation3 + $0x11c] sm:$0xf]
        %v4027 = vld [vmem:[#allocation3 + $0x120] sm:$0xff]
        %v4028 = vld [vmem:[#allocation3 + $0x128] sm:$0xff]
        %v4029 = vld [vmem:[#allocation3 + $0x130] sm:$0xff]
        %v4030 = vld [vmem:[#allocation3 + $0x138] sm:$0xff]
        %v4031 = vld [vmem:[#allocation3 + $0x140] sm:$0xf]
        %v4032 = vld [vmem:[#allocation3 + $0x144] sm:$0xff]
        %v4033 = vld [vmem:[#allocation3 + $0x14c] sm:$0xff]
        %v4034 = vld [vmem:[#allocation3 + $0x154] sm:$0xff]
        %v4035 = vld [vmem:[#allocation3 + $0x15c] sm:$0xff]
        %v4036 = vld [vmem:[#allocation3 + $0x164] sm:$0xf]
        %v4037 = vld [vmem:[#allocation3 + $0x168] sm:$0xff]
        %v4038 = vld [vmem:[#allocation3 + $0x170] sm:$0xff]
        %v4039 = vld [vmem:[#allocation3 + $0x178] sm:$0xff]
        %v4040 = vld [vmem:[#allocation3 + $0x180] sm:$0xff]
        %v4041 = vld [vmem:[#allocation3 + $0x188] sm:$0xf]
        %v4042 = vld [vmem:[#allocation3 + $0x18c] sm:$0xff]
        %v4043 = vld [vmem:[#allocation3 + $0x194] sm:$0xff]
        %v4044 = vld [vmem:[#allocation3 + $0x19c] sm:$0xff]
        %v4045 = vld [vmem:[#allocation3 + $0x1a4] sm:$0xff]
        %v4046 = vld [vmem:[#allocation3 + $0x1ac] sm:$0xf]
        %v4047 = vld [vmem:[#allocation3 + $0x1b0] sm:$0xff]
        %v4048 = vld [vmem:[#allocation3 + $0x1b8] sm:$0xff]
        %v4049 = vld [vmem:[#allocation3 + $0x1c0] sm:$0xff]
        %v4050 = vld [vmem:[#allocation3 + $0x1c8] sm:$0xff]
        %v4051 = vld [vmem:[#allocation3 + $0x1d0] sm:$0xf]
        %v4052 = vld [vmem:[#allocation3 + $0x1d4] sm:$0xff]
        %v4053 = vld [vmem:[#allocation3 + $0x1dc] sm:$0xff]
        %v4054 = vld [vmem:[#allocation3 + $0x1e4] sm:$0xff]
        %v4055 = vld [vmem:[#allocation3 + $0x1ec] sm:$0xff]
        %v4056 = vld [vmem:[#allocation3 + $0x1f4] sm:$0xf]
        %v4057 = vld [vmem:[#allocation3 + $0x1f8] sm:$0xff]
        %v4058 = vld [vmem:[#allocation3 + $0x200] sm:$0xff]
        %v4059 = vld [vmem:[#allocation3 + $0x208] sm:$0xff]
        %v4060 = vld [vmem:[#allocation3 + $0x210] sm:$0xff]
        %v4061 = vld [vmem:[#allocation3 + $0x218] sm:$0xf]
        %v4062 = vld [vmem:[#allocation3 + $0x21c] sm:$0xff]
        %v4063 = vld [vmem:[#allocation3 + $0x224] sm:$0xff]
        %v4064 = vld [vmem:[#allocation3 + $0x22c] sm:$0xff]
        %v4065 = vld [vmem:[#allocation3 + $0x234] sm:$0xff]
        %v4066 = vld [vmem:[#allocation3 + $0x23c] sm:$0xf]
        %v4067 = vld [vmem:[#allocation3 + $0x240] sm:$0xff]
        %v4068 = vld [vmem:[#allocation3 + $0x248] sm:$0xff]
        %v4069 = vld [vmem:[#allocation3 + $0x250] sm:$0xff]
        %v4070 = vld [vmem:[#allocation3 + $0x258] sm:$0xff]
        %v4071 = vld [vmem:[#allocation3 + $0x260] sm:$0xf]
        %v4072 = vld [vmem:[#allocation3 + $0x264] sm:$0xff]
        %v4073 = vld [vmem:[#allocation3 + $0x26c] sm:$0xff]
        %v4074 = vld [vmem:[#allocation3 + $0x274] sm:$0xff]
        %v4075 = vld [vmem:[#allocation3 + $0x27c] sm:$0xff]
        %v4076 = vld [vmem:[#allocation3 + $0x284] sm:$0xf]
        %v4077 = vld [vmem:[#allocation3 + $0x288] sm:$0xff]
        %v4078 = vld [vmem:[#allocation3 + $0x290] sm:$0xff]
        %v4079 = vld [vmem:[#allocation3 + $0x298] sm:$0xff]
        %v4080 = vld [vmem:[#allocation3 + $0x2a0] sm:$0xff]
        %v4081 = vld [vmem:[#allocation3 + $0x2a8] sm:$0xf]
        %v4082 = vld [vmem:[#allocation3 + $0x2ac] sm:$0xff]
        %v4083 = vld [vmem:[#allocation3 + $0x2b4] sm:$0xff]
        %v4084 = vld [vmem:[#allocation3 + $0x2bc] sm:$0xff]
        %v4085 = vld [vmem:[#allocation3 + $0x2c4] sm:$0xff]
        %v4086 = vld [vmem:[#allocation3 + $0x2cc] sm:$0xf]
        %v4087 = vld [vmem:[#allocation3 + $0x2d0] sm:$0xff]
        %v4088 = vld [vmem:[#allocation3 + $0x2d8] sm:$0xff]
        %v4089 = vld [vmem:[#allocation3 + $0x2e0] sm:$0xff]
        %v4090 = vld [vmem:[#allocation3 + $0x2e8] sm:$0xff]
        %v4091 = vld [vmem:[#allocation3 + $0x2f0] sm:$0xf]
        %v4092 = vld [vmem:[#allocation3 + $0x2f4] sm:$0xff]
        %v4093 = vld [vmem:[#allocation3 + $0x2fc] sm:$0xff]
        %v4094 = vld [vmem:[#allocation3 + $0x304] sm:$0xff]
        %v4095 = vld [vmem:[#allocation3 + $0x30c] sm:$0xff]
        %v4096 = vld [vmem:[#allocation3 + $0x314] sm:$0xf]
        %v4097 = vld [vmem:[#allocation3 + $0x318] sm:$0xff]
        %v4098 = vld [vmem:[#allocation3 + $0x320] sm:$0xff]
        %v4099 = vld [vmem:[#allocation3 + $0x328] sm:$0xff]
        %v4100 = vld [vmem:[#allocation3 + $0x330] sm:$0xff]
        %v4101 = vld [vmem:[#allocation3 + $0x338] sm:$0xf]
        %v4102 = vld [vmem:[#allocation3 + $0x33c] sm:$0xff]
        %v4103 = vld [vmem:[#allocation3 + $0x344] sm:$0xff]
        %v4104 = vld [vmem:[#allocation3 + $0x34c] sm:$0xff]
        %v4105 = vld [vmem:[#allocation3 + $0x354] sm:$0xff]
        %v4106 = vld [vmem:[#allocation3 + $0x35c] sm:$0xf]
        %v4107 = vld [vmem:[#allocation3 + $0x360] sm:$0xff]
        %v4108 = vld [vmem:[#allocation3 + $0x368] sm:$0xff]
        %v4109 = vld [vmem:[#allocation3 + $0x370] sm:$0xff]
        %v4110 = vld [vmem:[#allocation3 + $0x378] sm:$0xff]
        %v4111 = vld [vmem:[#allocation3 + $0x380] sm:$0xf]
        %v4112 = vld [vmem:[#allocation3 + $0x384] sm:$0xff]
        %v4113 = vld [vmem:[#allocation3 + $0x38c] sm:$0xff]
        %v4114 = vld [vmem:[#allocation3 + $0x394] sm:$0xff]
        %v4115 = vld [vmem:[#allocation3 + $0x39c] sm:$0xff]
        %v4116 = vld [vmem:[#allocation3 + $0x3a4] sm:$0xf]
        %v4117 = vld [vmem:[#allocation3 + $0x3a8] sm:$0xff]
        %v4118 = vld [vmem:[#allocation3 + $0x3b0] sm:$0xff]
        %v4119 = vld [vmem:[#allocation3 + $0x3b8] sm:$0xff]
        %v4120 = vld [vmem:[#allocation3 + $0x3c0] sm:$0xff]
        %v4121 = vld [vmem:[#allocation3 + $0x3c8] sm:$0xf]
        %v4122 = vld [vmem:[#allocation3 + $0x3cc] sm:$0xff]
        %v4123 = vld [vmem:[#allocation3 + $0x3d4] sm:$0xff]
        %v4124 = vld [vmem:[#allocation3 + $0x3dc] sm:$0xff]
        %v4125 = vld [vmem:[#allocation3 + $0x3e4] sm:$0xff]
        %v4126 = vld [vmem:[#allocation3 + $0x3ec] sm:$0xf]
        %v4127 = vld [vmem:[#allocation3 + $0x3f0] sm:$0xff]
        %v4128 = vld [vmem:[#allocation3 + $0x3f8] sm:$0xff]
        %v4129 = vld [vmem:[#allocation3 + $0x400] sm:$0xff]
        %v4130 = vld [vmem:[#allocation3 + $0x408] sm:$0xff]
        %v4131 = vld [vmem:[#allocation3 + $0x410] sm:$0xf]
        %v4132 = vld [vmem:[#allocation3 + $0x414] sm:$0xff]
        %v4133 = vld [vmem:[#allocation3 + $0x41c] sm:$0xff]
        %v4134 = vld [vmem:[#allocation3 + $0x424] sm:$0xff]
        %v4135 = vld [vmem:[#allocation3 + $0x42c] sm:$0xff]
        %v4136 = vld [vmem:[#allocation3 + $0x434] sm:$0xf]
        %v4137 = vld [vmem:[#allocation3 + $0x438] sm:$0xff]
        %v4138 = vld [vmem:[#allocation3 + $0x440] sm:$0xff]
        %v4139 = vld [vmem:[#allocation3 + $0x448] sm:$0xff]
        %v4140 = vld [vmem:[#allocation3 + $0x450] sm:$0xff]
        %v4141 = vld [vmem:[#allocation3 + $0x458] sm:$0xf]
        %v4142 = vld [vmem:[#allocation3 + $0x45c] sm:$0xff]
        %v4143 = vld [vmem:[#allocation3 + $0x464] sm:$0xff]
        %v4144 = vld [vmem:[#allocation3 + $0x46c] sm:$0xff]
        %v4145 = vld [vmem:[#allocation3 + $0x474] sm:$0xff]
        %v4146 = vld [vmem:[#allocation3 + $0x47c] sm:$0xf]
        %v4147 = vld [vmem:[%s7] sm:$0xf]
        %v4148 = vld [vmem:[%s7 + $0x4] sm:$0xf]
        %v4149 = vld [vmem:[%s7 + $0x8] sm:$0xf]
        %v4150 = vld [vmem:[%s7 + $0xc] sm:$0xf]
        %v4151 = vld [vmem:[%s7 + $0x10] sm:$0xf]
        %v4152 = vld [vmem:[%s7 + $0x14] sm:$0xf]
        %v4153 = vld [vmem:[%s7 + $0x18] sm:$0xf]
        %v4154 = vld [vmem:[%s7 + $0x1c] sm:$0xf]
        %v4155 = vld [vmem:[%s7 + $0x20] sm:$0xf]
        %v4156 = vld [vmem:[%s7 + $0x24] sm:$0xf]
        %v4157 = vld [vmem:[%s7 + $0x28] sm:$0xf]
        %v4158 = vld [vmem:[%s7 + $0x2c] sm:$0xf]
        %v4159 = vld [vmem:[%s7 + $0x30] sm:$0xf]
        %v4160 = vld [vmem:[%s7 + $0x34] sm:$0xf]
        %v4161 = vld [vmem:[%s7 + $0x38] sm:$0xf]
        %v4162 = vld [vmem:[%s7 + $0x3c] sm:$0xf]
        %v4163 = vld [vmem:[%s7 + $0x40] sm:$0xf]
        %v4164 = vld [vmem:[%s7 + $0x44] sm:$0xf]
        %v4165 = vld [vmem:[%s7 + $0x48] sm:$0xf]
        %v4166 = vld [vmem:[%s7 + $0x4c] sm:$0xf]
        %v4167 = vld [vmem:[%s7 + $0x50] sm:$0xf]
        %v4168 = vld [vmem:[%s7 + $0x54] sm:$0xf]
        %v4169 = vld [vmem:[%s7 + $0x58] sm:$0xf]
        %v4170 = vld [vmem:[%s7 + $0x5c] sm:$0xf]
        %v4171 = vld [vmem:[%s7 + $0x60] sm:$0xf]
        %v4172 = vld [vmem:[%s7 + $0x64] sm:$0xf]
        %v4173 = vld [vmem:[%s7 + $0x68] sm:$0xf]
        %v4174 = vld [vmem:[%s7 + $0x6c] sm:$0xf]
        %v4175 = vld [vmem:[%s7 + $0x70] sm:$0xf]
        %v4176 = vld [vmem:[%s7 + $0x74] sm:$0xf]
        %v4177 = vld [vmem:[%s7 + $0x78] sm:$0xf]
        %v4178 = vld [vmem:[%s7 + $0x7c] sm:$0xf]
        %v4179 = vld [vmem:[%s7 + $0x80] sm:$0xf]
        %v4180 = vld [vmem:[%s7 + $0x84] sm:$0xf]
        %v4181 = vld [vmem:[%s7 + $0x88] sm:$0xf]
        %v4182 = vld [vmem:[%s7 + $0x8c] sm:$0xf]
        %v4183 = vld [vmem:[%s7 + $0x90] sm:$0xf]
        %v4184 = vld [vmem:[%s7 + $0x94] sm:$0xf]
        %v4185 = vld [vmem:[%s7 + $0x98] sm:$0xf]
        %v4186 = vld [vmem:[%s7 + $0x9c] sm:$0xf]
        %v4187 = vld [vmem:[%s7 + $0xa0] sm:$0xf]
        %v4188 = vld [vmem:[%s7 + $0xa4] sm:$0xf]
        %v4189 = vld [vmem:[%s7 + $0xa8] sm:$0xf]
        %v4190 = vld [vmem:[%s7 + $0xac] sm:$0xf]
        %v4191 = vld [vmem:[%s7 + $0xb0] sm:$0xf]
        %v4192 = vld [vmem:[%s7 + $0xb4] sm:$0xf]
        %v4193 = vld [vmem:[%s7 + $0xb8] sm:$0xf]
        %v4194 = vld [vmem:[%s7 + $0xbc] sm:$0xf]
        %v4195 = vld [vmem:[%s7 + $0xc0] sm:$0xf]
        %v4196 = vld [vmem:[%s7 + $0xc4] sm:$0xf]
        %v4197 = vld [vmem:[%s7 + $0xc8] sm:$0xf]
        %v4198 = vld [vmem:[%s7 + $0xcc] sm:$0xf]
        %v4199 = vld [vmem:[%s7 + $0xd0] sm:$0xf]
        %v4200 = vld [vmem:[%s7 + $0xd4] sm:$0xf]
        %v4201 = vld [vmem:[%s7 + $0xd8] sm:$0xf]
        %v4202 = vld [vmem:[%s7 + $0xdc] sm:$0xf]
        %v4203 = vld [vmem:[%s7 + $0xe0] sm:$0xf]
        %v4204 = vld [vmem:[%s7 + $0xe4] sm:$0xf]
        %v4205 = vld [vmem:[%s7 + $0xe8] sm:$0xf]
        %v4206 = vld [vmem:[%s7 + $0xec] sm:$0xf]
        %v4207 = vld [vmem:[%s7 + $0xf0] sm:$0xf]
        %v4208 = vld [vmem:[%s7 + $0xf4] sm:$0xf]
        %v4209 = vld [vmem:[%s7 + $0xf8] sm:$0xf]
        %v4210 = vld [vmem:[%s7 + $0xfc] sm:$0xf]
        %v4211 = vld [vmem:[%s7 + $0x100] sm:$0xf]
        %v4212 = vld [vmem:[%s7 + $0x104] sm:$0xf]
        %v4213 = vld [vmem:[%s7 + $0x108] sm:$0xf]
        %v4214 = vld [vmem:[%s7 + $0x10c] sm:$0xf]
        %v4215 = vld [vmem:[%s7 + $0x110] sm:$0xf]
        %v4216 = vld [vmem:[%s7 + $0x114] sm:$0xf]
        %v4217 = vld [vmem:[%s7 + $0x118] sm:$0xf]
        %v4218 = vld [vmem:[%s7 + $0x11c] sm:$0xf]
        %v4219 = vld [vmem:[%s7 + $0x120] sm:$0xf]
        %v4220 = vld [vmem:[%s7 + $0x124] sm:$0xf]
        %v4221 = vld [vmem:[%s7 + $0x128] sm:$0xf]
        %v4222 = vld [vmem:[%s7 + $0x12c] sm:$0xf]
        %v4223 = vld [vmem:[%s7 + $0x130] sm:$0xf]
        %v4224 = vld [vmem:[%s7 + $0x134] sm:$0xf]
        %v4225 = vld [vmem:[%s7 + $0x138] sm:$0xf]
        %v4226 = vld [vmem:[%s7 + $0x13c] sm:$0xf]
        %v4227 = vld [vmem:[%s7 + $0x140] sm:$0xf]
        %v4228 = vld [vmem:[%s7 + $0x144] sm:$0xf]
        %v4229 = vld [vmem:[%s7 + $0x148] sm:$0xf]
        %v4230 = vld [vmem:[%s7 + $0x14c] sm:$0xf]
        %v4231 = vld [vmem:[%s7 + $0x150] sm:$0xf]
        %v4232 = vld [vmem:[%s7 + $0x154] sm:$0xf]
        %v4233 = vld [vmem:[%s7 + $0x158] sm:$0xf]
        %v4234 = vld [vmem:[%s7 + $0x15c] sm:$0xf]
        %v4235 = vld [vmem:[%s7 + $0x160] sm:$0xf]
        %v4236 = vld [vmem:[%s7 + $0x164] sm:$0xf]
        %v4237 = vld [vmem:[%s7 + $0x168] sm:$0xf]
        %v4238 = vld [vmem:[%s7 + $0x16c] sm:$0xf]
        %v4239 = vld [vmem:[%s7 + $0x170] sm:$0xf]
        %v4240 = vld [vmem:[%s7 + $0x174] sm:$0xf]
        %v4241 = vld [vmem:[%s7 + $0x178] sm:$0xf]
        %v4242 = vld [vmem:[%s7 + $0x17c] sm:$0xf]
        %v4243 = vld [vmem:[%s7 + $0x180] sm:$0xf]
        %v4244 = vld [vmem:[%s7 + $0x184] sm:$0xf]
        %v4245 = vld [vmem:[%s7 + $0x188] sm:$0xf]
        %v4246 = vld [vmem:[%s7 + $0x18c] sm:$0xf]
        %v4247 = vld [vmem:[%s7 + $0x190] sm:$0xf]
        %v4248 = vld [vmem:[%s7 + $0x194] sm:$0xf]
        %v4249 = vld [vmem:[%s7 + $0x198] sm:$0xf]
        %v4250 = vld [vmem:[%s7 + $0x19c] sm:$0xf]
        %v4251 = vld [vmem:[%s7 + $0x1a0] sm:$0xf]
        %v4252 = vld [vmem:[%s7 + $0x1a4] sm:$0xf]
        %v4253 = vld [vmem:[%s7 + $0x1a8] sm:$0xf]
        %v4254 = vld [vmem:[%s7 + $0x1ac] sm:$0xf]
        %v4255 = vld [vmem:[%s7 + $0x1b0] sm:$0xf]
        %v4256 = vld [vmem:[%s7 + $0x1b4] sm:$0xf]
        %v4257 = vld [vmem:[%s7 + $0x1b8] sm:$0xf]
        %v4258 = vld [vmem:[%s7 + $0x1bc] sm:$0xf]
        %v4259 = vld [vmem:[%s7 + $0x1c0] sm:$0xf]
        %v4260 = vld [vmem:[%s7 + $0x1c4] sm:$0xf]
        %v4261 = vld [vmem:[%s7 + $0x1c8] sm:$0xf]
        %v4262 = vld [vmem:[%s7 + $0x1cc] sm:$0xf]
        %v4263 = vld [vmem:[%s7 + $0x1d0] sm:$0xf]
        %v4264 = vld [vmem:[%s7 + $0x1d4] sm:$0xf]
        %v4265 = vld [vmem:[%s7 + $0x1d8] sm:$0xf]
        %v4266 = vld [vmem:[%s7 + $0x1dc] sm:$0xf]
        %v4267 = vld [vmem:[%s7 + $0x1e0] sm:$0xf]
        %v4268 = vld [vmem:[%s7 + $0x1e4] sm:$0xf]
        %v4269 = vld [vmem:[%s7 + $0x1e8] sm:$0xf]
        %v4270 = vld [vmem:[%s7 + $0x1ec] sm:$0xf]
        %v4271 = vld [vmem:[%s7 + $0x1f0] sm:$0xf]
        %v4272 = vld [vmem:[%s7 + $0x1f4] sm:$0xf]
        %v4273 = vld [vmem:[%s7 + $0x1f8] sm:$0xf]
        %v4274 = vld [vmem:[%s7 + $0x1fc] sm:$0xf]
        %v4275 = vld [vmem:[%s7 + $0x200] sm:$0xf]
        %v4276 = vld [vmem:[%s7 + $0x204] sm:$0xf]
        %v4277 = vld [vmem:[%s7 + $0x208] sm:$0xf]
        %v4278 = vld [vmem:[%s7 + $0x20c] sm:$0xf]
        %v4279 = vld [vmem:[%s7 + $0x210] sm:$0xf]
        %v4280 = vld [vmem:[%s7 + $0x214] sm:$0xf]
        %v4281 = vld [vmem:[%s7 + $0x218] sm:$0xf]
        %v4282 = vld [vmem:[%s7 + $0x21c] sm:$0xf]
        %v4283 = vld [vmem:[%s7 + $0x220] sm:$0xf]
        %v4284 = vld [vmem:[%s7 + $0x224] sm:$0xf]
        %v4285 = vld [vmem:[%s7 + $0x228] sm:$0xf]
        %v4286 = vld [vmem:[%s7 + $0x22c] sm:$0xf]
        %v4287 = vld [vmem:[%s7 + $0x230] sm:$0xf]
        %v4288 = vld [vmem:[%s7 + $0x234] sm:$0xf]
        %v4289 = vld [vmem:[%s7 + $0x238] sm:$0xf]
        %v4290 = vld [vmem:[%s7 + $0x23c] sm:$0xf]
        %v4291 = vld [vmem:[%s8] sm:$0x1]
        %v4293 = vperm.slane %v4291, 0
        %v4455 = vunpack.c.l.b16 %v3987
        %v4456 = vunpack.c.h.b16 %v3987
        %v4457 = vunpack.c.l.b16 %v3988
        %v4458 = vunpack.c.h.b16 %v3988
        %v4459 = vunpack.c.l.b16 %v3989
        %v4460 = vunpack.c.h.b16 %v3989
        %v4461 = vunpack.c.l.b16 %v3990
        %v4462 = vunpack.c.h.b16 %v3990
        %v4463 = vunpack.c.l.b16 %v3991
        %v4464 = vunpack.c.l.b16 %v3992
        %v4465 = vunpack.c.h.b16 %v3992
        %v4466 = vunpack.c.l.b16 %v3993
        %v4467 = vunpack.c.h.b16 %v3993
        %v4468 = vunpack.c.l.b16 %v3994
        %v4469 = vunpack.c.h.b16 %v3994
        %v4470 = vunpack.c.l.b16 %v3995
        %v4471 = vunpack.c.h.b16 %v3995
        %v4472 = vunpack.c.l.b16 %v3996
        %v4473 = vunpack.c.l.b16 %v3997
        %v4474 = vunpack.c.h.b16 %v3997
        %v4475 = vunpack.c.l.b16 %v3998
        %v4476 = vunpack.c.h.b16 %v3998
        %v4477 = vunpack.c.l.b16 %v3999
        %v4478 = vunpack.c.h.b16 %v3999
        %v4479 = vunpack.c.l.b16 %v4000
        %v4480 = vunpack.c.h.b16 %v4000
        %v4481 = vunpack.c.l.b16 %v4001
        %v4482 = vunpack.c.l.b16 %v4002
        %v4483 = vunpack.c.h.b16 %v4002
        %v4484 = vunpack.c.l.b16 %v4003
        %v4485 = vunpack.c.h.b16 %v4003
        %v4486 = vunpack.c.l.b16 %v4004
        %v4487 = vunpack.c.h.b16 %v4004
        %v4488 = vunpack.c.l.b16 %v4005
        %v4489 = vunpack.c.h.b16 %v4005
        %v4490 = vunpack.c.l.b16 %v4006
        %v4491 = vunpack.c.l.b16 %v4007
        %v4492 = vunpack.c.h.b16 %v4007
        %v4493 = vunpack.c.l.b16 %v4008
        %v4494 = vunpack.c.h.b16 %v4008
        %v4495 = vunpack.c.l.b16 %v4009
        %v4496 = vunpack.c.h.b16 %v4009
        %v4497 = vunpack.c.l.b16 %v4010
        %v4498 = vunpack.c.h.b16 %v4010
        %v4499 = vunpack.c.l.b16 %v4011
        %v4500 = vunpack.c.l.b16 %v4012
        %v4501 = vunpack.c.h.b16 %v4012
        %v4502 = vunpack.c.l.b16 %v4013
        %v4503 = vunpack.c.h.b16 %v4013
        %v4504 = vunpack.c.l.b16 %v4014
        %v4505 = vunpack.c.h.b16 %v4014
        %v4506 = vunpack.c.l.b16 %v4015
        %v4507 = vunpack.c.h.b16 %v4015
        %v4508 = vunpack.c.l.b16 %v4016
        %v4509 = vunpack.c.l.b16 %v4017
        %v4510 = vunpack.c.h.b16 %v4017
        %v4511 = vunpack.c.l.b16 %v4018
        %v4512 = vunpack.c.h.b16 %v4018
        %v4513 = vunpack.c.l.b16 %v4019
        %v4514 = vunpack.c.h.b16 %v4019
        %v4515 = vunpack.c.l.b16 %v4020
        %v4516 = vunpack.c.h.b16 %v4020
        %v4517 = vunpack.c.l.b16 %v4021
        %v4518 = vunpack.c.l.b16 %v4022
        %v4519 = vunpack.c.h.b16 %v4022
        %v4520 = vunpack.c.l.b16 %v4023
        %v4521 = vunpack.c.h.b16 %v4023
        %v4522 = vunpack.c.l.b16 %v4024
        %v4523 = vunpack.c.h.b16 %v4024
        %v4524 = vunpack.c.l.b16 %v4025
        %v4525 = vunpack.c.h.b16 %v4025
        %v4526 = vunpack.c.l.b16 %v4026
        %v4527 = vunpack.c.l.b16 %v4027
        %v4528 = vunpack.c.h.b16 %v4027
        %v4529 = vunpack.c.l.b16 %v4028
        %v4530 = vunpack.c.h.b16 %v4028
        %v4531 = vunpack.c.l.b16 %v4029
        %v4532 = vunpack.c.h.b16 %v4029
        %v4533 = vunpack.c.l.b16 %v4030
        %v4534 = vunpack.c.h.b16 %v4030
        %v4535 = vunpack.c.l.b16 %v4031
        %v4536 = vunpack.c.l.b16 %v4032
        %v4537 = vunpack.c.h.b16 %v4032
        %v4538 = vunpack.c.l.b16 %v4033
        %v4539 = vunpack.c.h.b16 %v4033
        %v4540 = vunpack.c.l.b16 %v4034
        %v4541 = vunpack.c.h.b16 %v4034
        %v4542 = vunpack.c.l.b16 %v4035
        %v4543 = vunpack.c.h.b16 %v4035
        %v4544 = vunpack.c.l.b16 %v4036
        %v4545 = vunpack.c.l.b16 %v4037
        %v4546 = vunpack.c.h.b16 %v4037
        %v4547 = vunpack.c.l.b16 %v4038
        %v4548 = vunpack.c.h.b16 %v4038
        %v4549 = vunpack.c.l.b16 %v4039
        %v4550 = vunpack.c.h.b16 %v4039
        %v4551 = vunpack.c.l.b16 %v4040
        %v4552 = vunpack.c.h.b16 %v4040
        %v4553 = vunpack.c.l.b16 %v4041
        %v4554 = vunpack.c.l.b16 %v4042
        %v4555 = vunpack.c.h.b16 %v4042
        %v4556 = vunpack.c.l.b16 %v4043
        %v4557 = vunpack.c.h.b16 %v4043
        %v4558 = vunpack.c.l.b16 %v4044
        %v4559 = vunpack.c.h.b16 %v4044
        %v4560 = vunpack.c.l.b16 %v4045
        %v4561 = vunpack.c.h.b16 %v4045
        %v4562 = vunpack.c.l.b16 %v4046
        %v4563 = vunpack.c.l.b16 %v4047
        %v4564 = vunpack.c.h.b16 %v4047
        %v4565 = vunpack.c.l.b16 %v4048
        %v4566 = vunpack.c.h.b16 %v4048
        %v4567 = vunpack.c.l.b16 %v4049
        %v4568 = vunpack.c.h.b16 %v4049
        %v4569 = vunpack.c.l.b16 %v4050
        %v4570 = vunpack.c.h.b16 %v4050
        %v4571 = vunpack.c.l.b16 %v4051
        %v4572 = vunpack.c.l.b16 %v4052
        %v4573 = vunpack.c.h.b16 %v4052
        %v4574 = vunpack.c.l.b16 %v4053
        %v4575 = vunpack.c.h.b16 %v4053
        %v4576 = vunpack.c.l.b16 %v4054
        %v4577 = vunpack.c.h.b16 %v4054
        %v4578 = vunpack.c.l.b16 %v4055
        %v4579 = vunpack.c.h.b16 %v4055
        %v4580 = vunpack.c.l.b16 %v4056
        %v4581 = vunpack.c.l.b16 %v4057
        %v4582 = vunpack.c.h.b16 %v4057
        %v4583 = vunpack.c.l.b16 %v4058
        %v4584 = vunpack.c.h.b16 %v4058
        %v4585 = vunpack.c.l.b16 %v4059
        %v4586 = vunpack.c.h.b16 %v4059
        %v4587 = vunpack.c.l.b16 %v4060
        %v4588 = vunpack.c.h.b16 %v4060
        %v4589 = vunpack.c.l.b16 %v4061
        %v4590 = vunpack.c.l.b16 %v4062
        %v4591 = vunpack.c.h.b16 %v4062
        %v4592 = vunpack.c.l.b16 %v4063
        %v4593 = vunpack.c.h.b16 %v4063
        %v4594 = vunpack.c.l.b16 %v4064
        %v4595 = vunpack.c.h.b16 %v4064
        %v4596 = vunpack.c.l.b16 %v4065
        %v4597 = vunpack.c.h.b16 %v4065
        %v4598 = vunpack.c.l.b16 %v4066
        %v4599 = vunpack.c.l.b16 %v4067
        %v4600 = vunpack.c.h.b16 %v4067
        %v4601 = vunpack.c.l.b16 %v4068
        %v4602 = vunpack.c.h.b16 %v4068
        %v4603 = vunpack.c.l.b16 %v4069
        %v4604 = vunpack.c.h.b16 %v4069
        %v4605 = vunpack.c.l.b16 %v4070
        %v4606 = vunpack.c.h.b16 %v4070
        %v4607 = vunpack.c.l.b16 %v4071
        %v4608 = vunpack.c.l.b16 %v4072
        %v4609 = vunpack.c.h.b16 %v4072
        %v4610 = vunpack.c.l.b16 %v4073
        %v4611 = vunpack.c.h.b16 %v4073
        %v4612 = vunpack.c.l.b16 %v4074
        %v4613 = vunpack.c.h.b16 %v4074
        %v4614 = vunpack.c.l.b16 %v4075
        %v4615 = vunpack.c.h.b16 %v4075
        %v4616 = vunpack.c.l.b16 %v4076
        %v4617 = vunpack.c.l.b16 %v4077
        %v4618 = vunpack.c.h.b16 %v4077
        %v4619 = vunpack.c.l.b16 %v4078
        %v4620 = vunpack.c.h.b16 %v4078
        %v4621 = vunpack.c.l.b16 %v4079
        %v4622 = vunpack.c.h.b16 %v4079
        %v4623 = vunpack.c.l.b16 %v4080
        %v4624 = vunpack.c.h.b16 %v4080
        %v4625 = vunpack.c.l.b16 %v4081
        %v4626 = vunpack.c.l.b16 %v4082
        %v4627 = vunpack.c.h.b16 %v4082
        %v4628 = vunpack.c.l.b16 %v4083
        %v4629 = vunpack.c.h.b16 %v4083
        %v4630 = vunpack.c.l.b16 %v4084
        %v4631 = vunpack.c.h.b16 %v4084
        %v4632 = vunpack.c.l.b16 %v4085
        %v4633 = vunpack.c.h.b16 %v4085
        %v4634 = vunpack.c.l.b16 %v4086
        %v4635 = vunpack.c.l.b16 %v4087
        %v4636 = vunpack.c.h.b16 %v4087
        %v4637 = vunpack.c.l.b16 %v4088
        %v4638 = vunpack.c.h.b16 %v4088
        %v4639 = vunpack.c.l.b16 %v4089
        %v4640 = vunpack.c.h.b16 %v4089
        %v4641 = vunpack.c.l.b16 %v4090
        %v4642 = vunpack.c.h.b16 %v4090
        %v4643 = vunpack.c.l.b16 %v4091
        %v4644 = vunpack.c.l.b16 %v4092
        %v4645 = vunpack.c.h.b16 %v4092
        %v4646 = vunpack.c.l.b16 %v4093
        %v4647 = vunpack.c.h.b16 %v4093
        %v4648 = vunpack.c.l.b16 %v4094
        %v4649 = vunpack.c.h.b16 %v4094
        %v4650 = vunpack.c.l.b16 %v4095
        %v4651 = vunpack.c.h.b16 %v4095
        %v4652 = vunpack.c.l.b16 %v4096
        %v4653 = vunpack.c.l.b16 %v4097
        %v4654 = vunpack.c.h.b16 %v4097
        %v4655 = vunpack.c.l.b16 %v4098
        %v4656 = vunpack.c.h.b16 %v4098
        %v4657 = vunpack.c.l.b16 %v4099
        %v4658 = vunpack.c.h.b16 %v4099
        %v4659 = vunpack.c.l.b16 %v4100
        %v4660 = vunpack.c.h.b16 %v4100
        %v4661 = vunpack.c.l.b16 %v4101
        %v4662 = vunpack.c.l.b16 %v4102
        %v4663 = vunpack.c.h.b16 %v4102
        %v4664 = vunpack.c.l.b16 %v4103
        %v4665 = vunpack.c.h.b16 %v4103
        %v4666 = vunpack.c.l.b16 %v4104
        %v4667 = vunpack.c.h.b16 %v4104
        %v4668 = vunpack.c.l.b16 %v4105
        %v4669 = vunpack.c.h.b16 %v4105
        %v4670 = vunpack.c.l.b16 %v4106
        %v4671 = vunpack.c.l.b16 %v4107
        %v4672 = vunpack.c.h.b16 %v4107
        %v4673 = vunpack.c.l.b16 %v4108
        %v4674 = vunpack.c.h.b16 %v4108
        %v4675 = vunpack.c.l.b16 %v4109
        %v4676 = vunpack.c.h.b16 %v4109
        %v4677 = vunpack.c.l.b16 %v4110
        %v4678 = vunpack.c.h.b16 %v4110
        %v4679 = vunpack.c.l.b16 %v4111
        %v4680 = vunpack.c.l.b16 %v4112
        %v4681 = vunpack.c.h.b16 %v4112
        %v4682 = vunpack.c.l.b16 %v4113
        %v4683 = vunpack.c.h.b16 %v4113
        %v4684 = vunpack.c.l.b16 %v4114
        %v4685 = vunpack.c.h.b16 %v4114
        %v4686 = vunpack.c.l.b16 %v4115
        %v4687 = vunpack.c.h.b16 %v4115
        %v4688 = vunpack.c.l.b16 %v4116
        %v4689 = vunpack.c.l.b16 %v4117
        %v4690 = vunpack.c.h.b16 %v4117
        %v4691 = vunpack.c.l.b16 %v4118
        %v4692 = vunpack.c.h.b16 %v4118
        %v4693 = vunpack.c.l.b16 %v4119
        %v4694 = vunpack.c.h.b16 %v4119
        %v4695 = vunpack.c.l.b16 %v4120
        %v4696 = vunpack.c.h.b16 %v4120
        %v4697 = vunpack.c.l.b16 %v4121
        %v4698 = vunpack.c.l.b16 %v4122
        %v4699 = vunpack.c.h.b16 %v4122
        %v4700 = vunpack.c.l.b16 %v4123
        %v4701 = vunpack.c.h.b16 %v4123
        %v4702 = vunpack.c.l.b16 %v4124
        %v4703 = vunpack.c.h.b16 %v4124
        %v4704 = vunpack.c.l.b16 %v4125
        %v4705 = vunpack.c.h.b16 %v4125
        %v4706 = vunpack.c.l.b16 %v4126
        %v4707 = vunpack.c.l.b16 %v4127
        %v4708 = vunpack.c.h.b16 %v4127
        %v4709 = vunpack.c.l.b16 %v4128
        %v4710 = vunpack.c.h.b16 %v4128
        %v4711 = vunpack.c.l.b16 %v4129
        %v4712 = vunpack.c.h.b16 %v4129
        %v4713 = vunpack.c.l.b16 %v4130
        %v4714 = vunpack.c.h.b16 %v4130
        %v4715 = vunpack.c.l.b16 %v4131
        %v4716 = vunpack.c.l.b16 %v4132
        %v4717 = vunpack.c.h.b16 %v4132
        %v4718 = vunpack.c.l.b16 %v4133
        %v4719 = vunpack.c.h.b16 %v4133
        %v4720 = vunpack.c.l.b16 %v4134
        %v4721 = vunpack.c.h.b16 %v4134
        %v4722 = vunpack.c.l.b16 %v4135
        %v4723 = vunpack.c.h.b16 %v4135
        %v4724 = vunpack.c.l.b16 %v4136
        %v4725 = vunpack.c.l.b16 %v4137
        %v4726 = vunpack.c.h.b16 %v4137
        %v4727 = vunpack.c.l.b16 %v4138
        %v4728 = vunpack.c.h.b16 %v4138
        %v4729 = vunpack.c.l.b16 %v4139
        %v4730 = vunpack.c.h.b16 %v4139
        %v4731 = vunpack.c.l.b16 %v4140
        %v4732 = vunpack.c.h.b16 %v4140
        %v4733 = vunpack.c.l.b16 %v4141
        %v4734 = vunpack.c.l.b16 %v4142
        %v4735 = vunpack.c.h.b16 %v4142
        %v4736 = vunpack.c.l.b16 %v4143
        %v4737 = vunpack.c.h.b16 %v4143
        %v4738 = vunpack.c.l.b16 %v4144
        %v4739 = vunpack.c.h.b16 %v4144
        %v4740 = vunpack.c.l.b16 %v4145
        %v4741 = vunpack.c.h.b16 %v4145
        %v4742 = vunpack.c.l.b16 %v4146
        %v4743 = vpack.c.b16 %v4464, %v4455
        %v4744 = vpack.c.b16 %v4465, %v4456
        %v4745 = vpack.c.b16 %v4466, %v4457
        %v4746 = vpack.c.b16 %v4467, %v4458
        %v4747 = vpack.c.b16 %v4468, %v4459
        %v4748 = vpack.c.b16 %v4469, %v4460
        %v4749 = vpack.c.b16 %v4470, %v4461
        %v4750 = vpack.c.b16 %v4471, %v4462
        %v4751 = vpack.c.b16 %v4472, %v4463
        %v4752 = vpack.c.b16 %v4482, %v4473
        %v4753 = vpack.c.b16 %v4483, %v4474
        %v4754 = vpack.c.b16 %v4484, %v4475
        %v4755 = vpack.c.b16 %v4485, %v4476
        %v4756 = vpack.c.b16 %v4486, %v4477
        %v4757 = vpack.c.b16 %v4487, %v4478
        %v4758 = vpack.c.b16 %v4488, %v4479
        %v4759 = vpack.c.b16 %v4489, %v4480
        %v4760 = vpack.c.b16 %v4490, %v4481
        %v4761 = vpack.c.b16 %v4500, %v4491
        %v4762 = vpack.c.b16 %v4501, %v4492
        %v4763 = vpack.c.b16 %v4502, %v4493
        %v4764 = vpack.c.b16 %v4503, %v4494
        %v4765 = vpack.c.b16 %v4504, %v4495
        %v4766 = vpack.c.b16 %v4505, %v4496
        %v4767 = vpack.c.b16 %v4506, %v4497
        %v4768 = vpack.c.b16 %v4507, %v4498
        %v4769 = vpack.c.b16 %v4508, %v4499
        %v4770 = vpack.c.b16 %v4518, %v4509
        %v4771 = vpack.c.b16 %v4519, %v4510
        %v4772 = vpack.c.b16 %v4520, %v4511
        %v4773 = vpack.c.b16 %v4521, %v4512
        %v4774 = vpack.c.b16 %v4522, %v4513
        %v4775 = vpack.c.b16 %v4523, %v4514
        %v4776 = vpack.c.b16 %v4524, %v4515
        %v4777 = vpack.c.b16 %v4525, %v4516
        %v4778 = vpack.c.b16 %v4526, %v4517
        %v4779 = vpack.c.b16 %v4536, %v4527
        %v4780 = vpack.c.b16 %v4537, %v4528
        %v4781 = vpack.c.b16 %v4538, %v4529
        %v4782 = vpack.c.b16 %v4539, %v4530
        %v4783 = vpack.c.b16 %v4540, %v4531
        %v4784 = vpack.c.b16 %v4541, %v4532
        %v4785 = vpack.c.b16 %v4542, %v4533
        %v4786 = vpack.c.b16 %v4543, %v4534
        %v4787 = vpack.c.b16 %v4544, %v4535
        %v4788 = vpack.c.b16 %v4554, %v4545
        %v4789 = vpack.c.b16 %v4555, %v4546
        %v4790 = vpack.c.b16 %v4556, %v4547
        %v4791 = vpack.c.b16 %v4557, %v4548
        %v4792 = vpack.c.b16 %v4558, %v4549
        %v4793 = vpack.c.b16 %v4559, %v4550
        %v4794 = vpack.c.b16 %v4560, %v4551
        %v4795 = vpack.c.b16 %v4561, %v4552
        %v4796 = vpack.c.b16 %v4562, %v4553
        %v4797 = vpack.c.b16 %v4572, %v4563
        %v4798 = vpack.c.b16 %v4573, %v4564
        %v4799 = vpack.c.b16 %v4574, %v4565
        %v4800 = vpack.c.b16 %v4575, %v4566
        %v4801 = vpack.c.b16 %v4576, %v4567
        %v4802 = vpack.c.b16 %v4577, %v4568
        %v4803 = vpack.c.b16 %v4578, %v4569
        %v4804 = vpack.c.b16 %v4579, %v4570
        %v4805 = vpack.c.b16 %v4580, %v4571
        %v4806 = vpack.c.b16 %v4590, %v4581
        %v4807 = vpack.c.b16 %v4591, %v4582
        %v4808 = vpack.c.b16 %v4592, %v4583
        %v4809 = vpack.c.b16 %v4593, %v4584
        %v4810 = vpack.c.b16 %v4594, %v4585
        %v4811 = vpack.c.b16 %v4595, %v4586
        %v4812 = vpack.c.b16 %v4596, %v4587
        %v4813 = vpack.c.b16 %v4597, %v4588
        %v4814 = vpack.c.b16 %v4598, %v4589
        %v4815 = vpack.c.b16 %v4608, %v4599
        %v4816 = vpack.c.b16 %v4609, %v4600
        %v4817 = vpack.c.b16 %v4610, %v4601
        %v4818 = vpack.c.b16 %v4611, %v4602
        %v4819 = vpack.c.b16 %v4612, %v4603
        %v4820 = vpack.c.b16 %v4613, %v4604
        %v4821 = vpack.c.b16 %v4614, %v4605
        %v4822 = vpack.c.b16 %v4615, %v4606
        %v4823 = vpack.c.b16 %v4616, %v4607
        %v4824 = vpack.c.b16 %v4626, %v4617
        %v4825 = vpack.c.b16 %v4627, %v4618
        %v4826 = vpack.c.b16 %v4628, %v4619
        %v4827 = vpack.c.b16 %v4629, %v4620
        %v4828 = vpack.c.b16 %v4630, %v4621
        %v4829 = vpack.c.b16 %v4631, %v4622
        %v4830 = vpack.c.b16 %v4632, %v4623
        %v4831 = vpack.c.b16 %v4633, %v4624
        %v4832 = vpack.c.b16 %v4634, %v4625
        %v4833 = vpack.c.b16 %v4644, %v4635
        %v4834 = vpack.c.b16 %v4645, %v4636
        %v4835 = vpack.c.b16 %v4646, %v4637
        %v4836 = vpack.c.b16 %v4647, %v4638
        %v4837 = vpack.c.b16 %v4648, %v4639
        %v4838 = vpack.c.b16 %v4649, %v4640
        %v4839 = vpack.c.b16 %v4650, %v4641
        %v4840 = vpack.c.b16 %v4651, %v4642
        %v4841 = vpack.c.b16 %v4652, %v4643
        %v4842 = vpack.c.b16 %v4662, %v4653
        %v4843 = vpack.c.b16 %v4663, %v4654
        %v4844 = vpack.c.b16 %v4664, %v4655
        %v4845 = vpack.c.b16 %v4665, %v4656
        %v4846 = vpack.c.b16 %v4666, %v4657
        %v4847 = vpack.c.b16 %v4667, %v4658
        %v4848 = vpack.c.b16 %v4668, %v4659
        %v4849 = vpack.c.b16 %v4669, %v4660
        %v4850 = vpack.c.b16 %v4670, %v4661
        %v4851 = vpack.c.b16 %v4680, %v4671
        %v4852 = vpack.c.b16 %v4681, %v4672
        %v4853 = vpack.c.b16 %v4682, %v4673
        %v4854 = vpack.c.b16 %v4683, %v4674
        %v4855 = vpack.c.b16 %v4684, %v4675
        %v4856 = vpack.c.b16 %v4685, %v4676
        %v4857 = vpack.c.b16 %v4686, %v4677
        %v4858 = vpack.c.b16 %v4687, %v4678
        %v4859 = vpack.c.b16 %v4688, %v4679
        %v4860 = vpack.c.b16 %v4698, %v4689
        %v4861 = vpack.c.b16 %v4699, %v4690
        %v4862 = vpack.c.b16 %v4700, %v4691
        %v4863 = vpack.c.b16 %v4701, %v4692
        %v4864 = vpack.c.b16 %v4702, %v4693
        %v4865 = vpack.c.b16 %v4703, %v4694
        %v4866 = vpack.c.b16 %v4704, %v4695
        %v4867 = vpack.c.b16 %v4705, %v4696
        %v4868 = vpack.c.b16 %v4706, %v4697
        %v4869 = vpack.c.b16 %v4716, %v4707
        %v4870 = vpack.c.b16 %v4717, %v4708
        %v4871 = vpack.c.b16 %v4718, %v4709
        %v4872 = vpack.c.b16 %v4719, %v4710
        %v4873 = vpack.c.b16 %v4720, %v4711
        %v4874 = vpack.c.b16 %v4721, %v4712
        %v4875 = vpack.c.b16 %v4722, %v4713
        %v4876 = vpack.c.b16 %v4723, %v4714
        %v4877 = vpack.c.b16 %v4724, %v4715
        %v4878 = vpack.c.b16 %v4734, %v4725
        %v4879 = vpack.c.b16 %v4735, %v4726
        %v4880 = vpack.c.b16 %v4736, %v4727
        %v4881 = vpack.c.b16 %v4737, %v4728
        %v4882 = vpack.c.b16 %v4738, %v4729
        %v4883 = vpack.c.b16 %v4739, %v4730
        %v4884 = vpack.c.b16 %v4740, %v4731
        %v4885 = vpack.c.b16 %v4741, %v4732
        %v4886 = vpack.c.b16 %v4742, %v4733
        %v5175 = vunpack.c.l.b16 %v4147
        %v5176 = vunpack.c.l.b16 %v4148
        %v5177 = vunpack.c.l.b16 %v4149
        %v5178 = vunpack.c.l.b16 %v4150
        %v5179 = vunpack.c.l.b16 %v4151
        %v5180 = vunpack.c.l.b16 %v4152
        %v5181 = vunpack.c.l.b16 %v4153
        %v5182 = vunpack.c.l.b16 %v4154
        %v5183 = vunpack.c.l.b16 %v4155
        %v5184 = vunpack.c.l.b16 %v4156
        %v5185 = vunpack.c.l.b16 %v4157
        %v5186 = vunpack.c.l.b16 %v4158
        %v5187 = vunpack.c.l.b16 %v4159
        %v5188 = vunpack.c.l.b16 %v4160
        %v5189 = vunpack.c.l.b16 %v4161
        %v5190 = vunpack.c.l.b16 %v4162
        %v5191 = vunpack.c.l.b16 %v4163
        %v5192 = vunpack.c.l.b16 %v4164
        %v5193 = vunpack.c.l.b16 %v4165
        %v5194 = vunpack.c.l.b16 %v4166
        %v5195 = vunpack.c.l.b16 %v4167
        %v5196 = vunpack.c.l.b16 %v4168
        %v5197 = vunpack.c.l.b16 %v4169
        %v5198 = vunpack.c.l.b16 %v4170
        %v5199 = vunpack.c.l.b16 %v4171
        %v5200 = vunpack.c.l.b16 %v4172
        %v5201 = vunpack.c.l.b16 %v4173
        %v5202 = vunpack.c.l.b16 %v4174
        %v5203 = vunpack.c.l.b16 %v4175
        %v5204 = vunpack.c.l.b16 %v4176
        %v5205 = vunpack.c.l.b16 %v4177
        %v5206 = vunpack.c.l.b16 %v4178
        %v5207 = vunpack.c.l.b16 %v4179
        %v5208 = vunpack.c.l.b16 %v4180
        %v5209 = vunpack.c.l.b16 %v4181
        %v5210 = vunpack.c.l.b16 %v4182
        %v5211 = vunpack.c.l.b16 %v4183
        %v5212 = vunpack.c.l.b16 %v4184
        %v5213 = vunpack.c.l.b16 %v4185
        %v5214 = vunpack.c.l.b16 %v4186
        %v5215 = vunpack.c.l.b16 %v4187
        %v5216 = vunpack.c.l.b16 %v4188
        %v5217 = vunpack.c.l.b16 %v4189
        %v5218 = vunpack.c.l.b16 %v4190
        %v5219 = vunpack.c.l.b16 %v4191
        %v5220 = vunpack.c.l.b16 %v4192
        %v5221 = vunpack.c.l.b16 %v4193
        %v5222 = vunpack.c.l.b16 %v4194
        %v5223 = vunpack.c.l.b16 %v4195
        %v5224 = vunpack.c.l.b16 %v4196
        %v5225 = vunpack.c.l.b16 %v4197
        %v5226 = vunpack.c.l.b16 %v4198
        %v5227 = vunpack.c.l.b16 %v4199
        %v5228 = vunpack.c.l.b16 %v4200
        %v5229 = vunpack.c.l.b16 %v4201
        %v5230 = vunpack.c.l.b16 %v4202
        %v5231 = vunpack.c.l.b16 %v4203
        %v5232 = vunpack.c.l.b16 %v4204
        %v5233 = vunpack.c.l.b16 %v4205
        %v5234 = vunpack.c.l.b16 %v4206
        %v5235 = vunpack.c.l.b16 %v4207
        %v5236 = vunpack.c.l.b16 %v4208
        %v5237 = vunpack.c.l.b16 %v4209
        %v5238 = vunpack.c.l.b16 %v4210
        %v5239 = vunpack.c.l.b16 %v4211
        %v5240 = vunpack.c.l.b16 %v4212
        %v5241 = vunpack.c.l.b16 %v4213
        %v5242 = vunpack.c.l.b16 %v4214
        %v5243 = vunpack.c.l.b16 %v4215
        %v5244 = vunpack.c.l.b16 %v4216
        %v5245 = vunpack.c.l.b16 %v4217
        %v5246 = vunpack.c.l.b16 %v4218
        %v5247 = vunpack.c.l.b16 %v4219
        %v5248 = vunpack.c.l.b16 %v4220
        %v5249 = vunpack.c.l.b16 %v4221
        %v5250 = vunpack.c.l.b16 %v4222
        %v5251 = vunpack.c.l.b16 %v4223
        %v5252 = vunpack.c.l.b16 %v4224
        %v5253 = vunpack.c.l.b16 %v4225
        %v5254 = vunpack.c.l.b16 %v4226
        %v5255 = vunpack.c.l.b16 %v4227
        %v5256 = vunpack.c.l.b16 %v4228
        %v5257 = vunpack.c.l.b16 %v4229
        %v5258 = vunpack.c.l.b16 %v4230
        %v5259 = vunpack.c.l.b16 %v4231
        %v5260 = vunpack.c.l.b16 %v4232
        %v5261 = vunpack.c.l.b16 %v4233
        %v5262 = vunpack.c.l.b16 %v4234
        %v5263 = vunpack.c.l.b16 %v4235
        %v5264 = vunpack.c.l.b16 %v4236
        %v5265 = vunpack.c.l.b16 %v4237
        %v5266 = vunpack.c.l.b16 %v4238
        %v5267 = vunpack.c.l.b16 %v4239
        %v5268 = vunpack.c.l.b16 %v4240
        %v5269 = vunpack.c.l.b16 %v4241
        %v5270 = vunpack.c.l.b16 %v4242
        %v5271 = vunpack.c.l.b16 %v4243
        %v5272 = vunpack.c.l.b16 %v4244
        %v5273 = vunpack.c.l.b16 %v4245
        %v5274 = vunpack.c.l.b16 %v4246
        %v5275 = vunpack.c.l.b16 %v4247
        %v5276 = vunpack.c.l.b16 %v4248
        %v5277 = vunpack.c.l.b16 %v4249
        %v5278 = vunpack.c.l.b16 %v4250
        %v5279 = vunpack.c.l.b16 %v4251
        %v5280 = vunpack.c.l.b16 %v4252
        %v5281 = vunpack.c.l.b16 %v4253
        %v5282 = vunpack.c.l.b16 %v4254
        %v5283 = vunpack.c.l.b16 %v4255
        %v5284 = vunpack.c.l.b16 %v4256
        %v5285 = vunpack.c.l.b16 %v4257
        %v5286 = vunpack.c.l.b16 %v4258
        %v5287 = vunpack.c.l.b16 %v4259
        %v5288 = vunpack.c.l.b16 %v4260
        %v5289 = vunpack.c.l.b16 %v4261
        %v5290 = vunpack.c.l.b16 %v4262
        %v5291 = vunpack.c.l.b16 %v4263
        %v5292 = vunpack.c.l.b16 %v4264
        %v5293 = vunpack.c.l.b16 %v4265
        %v5294 = vunpack.c.l.b16 %v4266
        %v5295 = vunpack.c.l.b16 %v4267
        %v5296 = vunpack.c.l.b16 %v4268
        %v5297 = vunpack.c.l.b16 %v4269
        %v5298 = vunpack.c.l.b16 %v4270
        %v5299 = vunpack.c.l.b16 %v4271
        %v5300 = vunpack.c.l.b16 %v4272
        %v5301 = vunpack.c.l.b16 %v4273
        %v5302 = vunpack.c.l.b16 %v4274
        %v5303 = vunpack.c.l.b16 %v4275
        %v5304 = vunpack.c.l.b16 %v4276
        %v5305 = vunpack.c.l.b16 %v4277
        %v5306 = vunpack.c.l.b16 %v4278
        %v5307 = vunpack.c.l.b16 %v4279
        %v5308 = vunpack.c.l.b16 %v4280
        %v5309 = vunpack.c.l.b16 %v4281
        %v5310 = vunpack.c.l.b16 %v4282
        %v5311 = vunpack.c.l.b16 %v4283
        %v5312 = vunpack.c.l.b16 %v4284
        %v5313 = vunpack.c.l.b16 %v4285
        %v5314 = vunpack.c.l.b16 %v4286
        %v5315 = vunpack.c.l.b16 %v4287
        %v5316 = vunpack.c.l.b16 %v4288
        %v5317 = vunpack.c.l.b16 %v4289
        %v5318 = vunpack.c.l.b16 %v4290
        %v5319 = vpack.c.b16 %v5176, %v5175
        %v5320 = vpack.c.b16 %v5178, %v5177
        %v5321 = vpack.c.b16 %v5180, %v5179
        %v5322 = vpack.c.b16 %v5182, %v5181
        %v5323 = vpack.c.b16 %v5184, %v5183
        %v5324 = vpack.c.b16 %v5186, %v5185
        %v5325 = vpack.c.b16 %v5188, %v5187
        %v5326 = vpack.c.b16 %v5190, %v5189
        %v5327 = vpack.c.b16 %v5192, %v5191
        %v5328 = vpack.c.b16 %v5194, %v5193
        %v5329 = vpack.c.b16 %v5196, %v5195
        %v5330 = vpack.c.b16 %v5198, %v5197
        %v5331 = vpack.c.b16 %v5200, %v5199
        %v5332 = vpack.c.b16 %v5202, %v5201
        %v5333 = vpack.c.b16 %v5204, %v5203
        %v5334 = vpack.c.b16 %v5206, %v5205
        %v5335 = vpack.c.b16 %v5208, %v5207
        %v5336 = vpack.c.b16 %v5210, %v5209
        %v5337 = vpack.c.b16 %v5212, %v5211
        %v5338 = vpack.c.b16 %v5214, %v5213
        %v5339 = vpack.c.b16 %v5216, %v5215
        %v5340 = vpack.c.b16 %v5218, %v5217
        %v5341 = vpack.c.b16 %v5220, %v5219
        %v5342 = vpack.c.b16 %v5222, %v5221
        %v5343 = vpack.c.b16 %v5224, %v5223
        %v5344 = vpack.c.b16 %v5226, %v5225
        %v5345 = vpack.c.b16 %v5228, %v5227
        %v5346 = vpack.c.b16 %v5230, %v5229
        %v5347 = vpack.c.b16 %v5232, %v5231
        %v5348 = vpack.c.b16 %v5234, %v5233
        %v5349 = vpack.c.b16 %v5236, %v5235
        %v5350 = vpack.c.b16 %v5238, %v5237
        %v5351 = vpack.c.b16 %v5240, %v5239
        %v5352 = vpack.c.b16 %v5242, %v5241
        %v5353 = vpack.c.b16 %v5244, %v5243
        %v5354 = vpack.c.b16 %v5246, %v5245
        %v5355 = vpack.c.b16 %v5248, %v5247
        %v5356 = vpack.c.b16 %v5250, %v5249
        %v5357 = vpack.c.b16 %v5252, %v5251
        %v5358 = vpack.c.b16 %v5254, %v5253
        %v5359 = vpack.c.b16 %v5256, %v5255
        %v5360 = vpack.c.b16 %v5258, %v5257
        %v5361 = vpack.c.b16 %v5260, %v5259
        %v5362 = vpack.c.b16 %v5262, %v5261
        %v5363 = vpack.c.b16 %v5264, %v5263
        %v5364 = vpack.c.b16 %v5266, %v5265
        %v5365 = vpack.c.b16 %v5268, %v5267
        %v5366 = vpack.c.b16 %v5270, %v5269
        %v5367 = vpack.c.b16 %v5272, %v5271
        %v5368 = vpack.c.b16 %v5274, %v5273
        %v5369 = vpack.c.b16 %v5276, %v5275
        %v5370 = vpack.c.b16 %v5278, %v5277
        %v5371 = vpack.c.b16 %v5280, %v5279
        %v5372 = vpack.c.b16 %v5282, %v5281
        %v5373 = vpack.c.b16 %v5284, %v5283
        %v5374 = vpack.c.b16 %v5286, %v5285
        %v5375 = vpack.c.b16 %v5288, %v5287
        %v5376 = vpack.c.b16 %v5290, %v5289
        %v5377 = vpack.c.b16 %v5292, %v5291
        %v5378 = vpack.c.b16 %v5294, %v5293
        %v5379 = vpack.c.b16 %v5296, %v5295
        %v5380 = vpack.c.b16 %v5298, %v5297
        %v5381 = vpack.c.b16 %v5300, %v5299
        %v5382 = vpack.c.b16 %v5302, %v5301
        %v5383 = vpack.c.b16 %v5304, %v5303
        %v5384 = vpack.c.b16 %v5306, %v5305
        %v5385 = vpack.c.b16 %v5308, %v5307
        %v5386 = vpack.c.b16 %v5310, %v5309
        %v5387 = vpack.c.b16 %v5312, %v5311
        %v5388 = vpack.c.b16 %v5314, %v5313
        %v5389 = vpack.c.b16 %v5316, %v5315
        %v5390 = vpack.c.b16 %v5318, %v5317
        %5463 = vmatpush.bf16.msra.mxu0 %v5326
        %5464 = vmatpush.bf16.msra.mxu0 %v5325
        %5465 = vmatpush.bf16.msra.mxu0 %v5324
        %5466 = vmatpush.bf16.msra.mxu0 %v5323
        %5467 = vmatpush.bf16.msra.mxu0 %v5322
        %5468 = vmatpush.bf16.msra.mxu0 %v5321
        %5469 = vmatpush.bf16.msra.mxu0 %v5320
        %5470 = vmatpush.bf16.msra.mxu0 %v5319
        %5471 = vmatmul.bf16.gmra.mxu0 %v4743
        %v5472 = vpop.f32.mrf.mxu0
        %v5473 = vadd.f32 %v4293, %v5472
        %v5474 = vpop.f32.mrf.mxu0
        %v5475 = vadd.f32 %v4293, %v5474
        %5476 = vmatmul.bf16.gmra.mxu0 %v4752
        %v5477 = vpop.f32.mrf.mxu0
        %v5478 = vadd.f32 %v4293, %v5477
        %v5479 = vpop.f32.mrf.mxu0
        %v5480 = vadd.f32 %v4293, %v5479
        %5481 = vmatmul.bf16.gmra.mxu0 %v4761
        %v5482 = vpop.f32.mrf.mxu0
        %v5483 = vadd.f32 %v4293, %v5482
        %v5484 = vpop.f32.mrf.mxu0
        %v5485 = vadd.f32 %v4293, %v5484
        %5486 = vmatmul.bf16.gmra.mxu0 %v4770
        %v5487 = vpop.f32.mrf.mxu0
        %v5488 = vadd.f32 %v4293, %v5487
        %v5489 = vpop.f32.mrf.mxu0
        %v5490 = vadd.f32 %v4293, %v5489
        %5491 = vmatmul.bf16.gmra.mxu0 %v4779
        %v5492 = vpop.f32.mrf.mxu0
        %v5493 = vadd.f32 %v4293, %v5492
        %v5494 = vpop.f32.mrf.mxu0
        %v5495 = vadd.f32 %v4293, %v5494
        %5496 = vmatmul.bf16.gmra.mxu0 %v4788
        %v5497 = vpop.f32.mrf.mxu0
        %v5498 = vadd.f32 %v4293, %v5497
        %v5499 = vpop.f32.mrf.mxu0
        %v5500 = vadd.f32 %v4293, %v5499
        %5501 = vmatmul.bf16.gmra.mxu0 %v4797
        %v5502 = vpop.f32.mrf.mxu0
        %v5503 = vadd.f32 %v4293, %v5502
        %v5504 = vpop.f32.mrf.mxu0
        %v5505 = vadd.f32 %v4293, %v5504
        %5506 = vmatmul.bf16.gmra.mxu0 %v4806
        %v5507 = vpop.f32.mrf.mxu0
        %v5508 = vadd.f32 %v4293, %v5507
        %v5509 = vpop.f32.mrf.mxu0
        %v5510 = vadd.f32 %v4293, %v5509
        %5511 = vmatmul.bf16.gmra.mxu0 %v4815
        %v5512 = vpop.f32.mrf.mxu0
        %v5513 = vadd.f32 %v4293, %v5512
        %v5514 = vpop.f32.mrf.mxu0
        %v5515 = vadd.f32 %v4293, %v5514
        %5516 = vmatmul.bf16.gmra.mxu0 %v4824
        %v5517 = vpop.f32.mrf.mxu0
        %v5518 = vadd.f32 %v4293, %v5517
        %v5519 = vpop.f32.mrf.mxu0
        %v5520 = vadd.f32 %v4293, %v5519
        %5521 = vmatmul.bf16.gmra.mxu0 %v4833
        %v5522 = vpop.f32.mrf.mxu0
        %v5523 = vadd.f32 %v4293, %v5522
        %v5524 = vpop.f32.mrf.mxu0
        %v5525 = vadd.f32 %v4293, %v5524
        %5526 = vmatmul.bf16.gmra.mxu0 %v4842
        %v5527 = vpop.f32.mrf.mxu0
        %v5528 = vadd.f32 %v4293, %v5527
        %v5529 = vpop.f32.mrf.mxu0
        %v5530 = vadd.f32 %v4293, %v5529
        %5531 = vmatmul.bf16.gmra.mxu0 %v4851
        %v5532 = vpop.f32.mrf.mxu0
        %v5533 = vadd.f32 %v4293, %v5532
        %v5534 = vpop.f32.mrf.mxu0
        %v5535 = vadd.f32 %v4293, %v5534
        %5536 = vmatmul.bf16.gmra.mxu0 %v4860
        %v5537 = vpop.f32.mrf.mxu0
        %v5538 = vadd.f32 %v4293, %v5537
        %v5539 = vpop.f32.mrf.mxu0
        %v5540 = vadd.f32 %v4293, %v5539
        %5541 = vmatmul.bf16.gmra.mxu0 %v4869
        %v5542 = vpop.f32.mrf.mxu0
        %v5543 = vadd.f32 %v4293, %v5542
        %v5544 = vpop.f32.mrf.mxu0
        %v5545 = vadd.f32 %v4293, %v5544
        %5546 = vmatmul.bf16.gmra.mxu0 %v4878
        %v5547 = vpop.f32.mrf.mxu0
        %v5548 = vadd.f32 %v4293, %v5547
        %v5549 = vpop.f32.mrf.mxu0
        %v5550 = vadd.f32 %v4293, %v5549
        %5551 = vdwg.mxu0
        %5552 = vmatpush.bf16.msra.mxu0 %v5334
        %5553 = vmatpush.bf16.msra.mxu0 %v5333
        %5554 = vmatpush.bf16.msra.mxu0 %v5332
        %5555 = vmatpush.bf16.msra.mxu0 %v5331
        %5556 = vmatpush.bf16.msra.mxu0 %v5330
        %5557 = vmatpush.bf16.msra.mxu0 %v5329
        %5558 = vmatpush.bf16.msra.mxu0 %v5328
        %5559 = vmatpush.bf16.msra.mxu0 %v5327
        %5560 = vmatmul.bf16.gmra.mxu0 %v4744
        %v5561 = vpop.f32.mrf.mxu0
        %v5562 = vadd.f32 %v5473, %v5561
        %v5563 = vpop.f32.mrf.mxu0
        %v5564 = vadd.f32 %v5475, %v5563
        %5565 = vmatmul.bf16.gmra.mxu0 %v4753
        %v5566 = vpop.f32.mrf.mxu0
        %v5567 = vadd.f32 %v5478, %v5566
        %v5568 = vpop.f32.mrf.mxu0
        %v5569 = vadd.f32 %v5480, %v5568
        %5570 = vmatmul.bf16.gmra.mxu0 %v4762
        %v5571 = vpop.f32.mrf.mxu0
        %v5572 = vadd.f32 %v5483, %v5571
        %v5573 = vpop.f32.mrf.mxu0
        %v5574 = vadd.f32 %v5485, %v5573
        %5575 = vmatmul.bf16.gmra.mxu0 %v4771
        %v5576 = vpop.f32.mrf.mxu0
        %v5577 = vadd.f32 %v5488, %v5576
        %v5578 = vpop.f32.mrf.mxu0
        %v5579 = vadd.f32 %v5490, %v5578
        %5580 = vmatmul.bf16.gmra.mxu0 %v4780
        %v5581 = vpop.f32.mrf.mxu0
        %v5582 = vadd.f32 %v5493, %v5581
        %v5583 = vpop.f32.mrf.mxu0
        %v5584 = vadd.f32 %v5495, %v5583
        %5585 = vmatmul.bf16.gmra.mxu0 %v4789
        %v5586 = vpop.f32.mrf.mxu0
        %v5587 = vadd.f32 %v5498, %v5586
        %v5588 = vpop.f32.mrf.mxu0
        %v5589 = vadd.f32 %v5500, %v5588
        %5590 = vmatmul.bf16.gmra.mxu0 %v4798
        %v5591 = vpop.f32.mrf.mxu0
        %v5592 = vadd.f32 %v5503, %v5591
        %v5593 = vpop.f32.mrf.mxu0
        %v5594 = vadd.f32 %v5505, %v5593
        %5595 = vmatmul.bf16.gmra.mxu0 %v4807
        %v5596 = vpop.f32.mrf.mxu0
        %v5597 = vadd.f32 %v5508, %v5596
        %v5598 = vpop.f32.mrf.mxu0
        %v5599 = vadd.f32 %v5510, %v5598
        %5600 = vmatmul.bf16.gmra.mxu0 %v4816
        %v5601 = vpop.f32.mrf.mxu0
        %v5602 = vadd.f32 %v5513, %v5601
        %v5603 = vpop.f32.mrf.mxu0
        %v5604 = vadd.f32 %v5515, %v5603
        %5605 = vmatmul.bf16.gmra.mxu0 %v4825
        %v5606 = vpop.f32.mrf.mxu0
        %v5607 = vadd.f32 %v5518, %v5606
        %v5608 = vpop.f32.mrf.mxu0
        %v5609 = vadd.f32 %v5520, %v5608
        %5610 = vmatmul.bf16.gmra.mxu0 %v4834
        %v5611 = vpop.f32.mrf.mxu0
        %v5612 = vadd.f32 %v5523, %v5611
        %v5613 = vpop.f32.mrf.mxu0
        %v5614 = vadd.f32 %v5525, %v5613
        %5615 = vmatmul.bf16.gmra.mxu0 %v4843
        %v5616 = vpop.f32.mrf.mxu0
        %v5617 = vadd.f32 %v5528, %v5616
        %v5618 = vpop.f32.mrf.mxu0
        %v5619 = vadd.f32 %v5530, %v5618
        %5620 = vmatmul.bf16.gmra.mxu0 %v4852
        %v5621 = vpop.f32.mrf.mxu0
        %v5622 = vadd.f32 %v5533, %v5621
        %v5623 = vpop.f32.mrf.mxu0
        %v5624 = vadd.f32 %v5535, %v5623
        %5625 = vmatmul.bf16.gmra.mxu0 %v4861
        %v5626 = vpop.f32.mrf.mxu0
        %v5627 = vadd.f32 %v5538, %v5626
        %v5628 = vpop.f32.mrf.mxu0
        %v5629 = vadd.f32 %v5540, %v5628
        %5630 = vmatmul.bf16.gmra.mxu0 %v4870
        %v5631 = vpop.f32.mrf.mxu0
        %v5632 = vadd.f32 %v5543, %v5631
        %v5633 = vpop.f32.mrf.mxu0
        %v5634 = vadd.f32 %v5545, %v5633
        %5635 = vmatmul.bf16.gmra.mxu0 %v4879
        %v5636 = vpop.f32.mrf.mxu0
        %v5637 = vadd.f32 %v5548, %v5636
        %v5638 = vpop.f32.mrf.mxu0
        %v5639 = vadd.f32 %v5550, %v5638
        %5640 = vdwg.mxu0
        %5641 = vmatpush.bf16.msra.mxu0 %v5342
        %5642 = vmatpush.bf16.msra.mxu0 %v5341
        %5643 = vmatpush.bf16.msra.mxu0 %v5340
        %5644 = vmatpush.bf16.msra.mxu0 %v5339
        %5645 = vmatpush.bf16.msra.mxu0 %v5338
        %5646 = vmatpush.bf16.msra.mxu0 %v5337
        %5647 = vmatpush.bf16.msra.mxu0 %v5336
        %5648 = vmatpush.bf16.msra.mxu0 %v5335
        %5649 = vmatmul.bf16.gmra.mxu0 %v4745
        %v5650 = vpop.f32.mrf.mxu0
        %v5651 = vadd.f32 %v5562, %v5650
        %v5652 = vpop.f32.mrf.mxu0
        %v5653 = vadd.f32 %v5564, %v5652
        %5654 = vmatmul.bf16.gmra.mxu0 %v4754
        %v5655 = vpop.f32.mrf.mxu0
        %v5656 = vadd.f32 %v5567, %v5655
        %v5657 = vpop.f32.mrf.mxu0
        %v5658 = vadd.f32 %v5569, %v5657
        %5659 = vmatmul.bf16.gmra.mxu0 %v4763
        %v5660 = vpop.f32.mrf.mxu0
        %v5661 = vadd.f32 %v5572, %v5660
        %v5662 = vpop.f32.mrf.mxu0
        %v5663 = vadd.f32 %v5574, %v5662
        %5664 = vmatmul.bf16.gmra.mxu0 %v4772
        %v5665 = vpop.f32.mrf.mxu0
        %v5666 = vadd.f32 %v5577, %v5665
        %v5667 = vpop.f32.mrf.mxu0
        %v5668 = vadd.f32 %v5579, %v5667
        %5669 = vmatmul.bf16.gmra.mxu0 %v4781
        %v5670 = vpop.f32.mrf.mxu0
        %v5671 = vadd.f32 %v5582, %v5670
        %v5672 = vpop.f32.mrf.mxu0
        %v5673 = vadd.f32 %v5584, %v5672
        %5674 = vmatmul.bf16.gmra.mxu0 %v4790
        %v5675 = vpop.f32.mrf.mxu0
        %v5676 = vadd.f32 %v5587, %v5675
        %v5677 = vpop.f32.mrf.mxu0
        %v5678 = vadd.f32 %v5589, %v5677
        %5679 = vmatmul.bf16.gmra.mxu0 %v4799
        %v5680 = vpop.f32.mrf.mxu0
        %v5681 = vadd.f32 %v5592, %v5680
        %v5682 = vpop.f32.mrf.mxu0
        %v5683 = vadd.f32 %v5594, %v5682
        %5684 = vmatmul.bf16.gmra.mxu0 %v4808
        %v5685 = vpop.f32.mrf.mxu0
        %v5686 = vadd.f32 %v5597, %v5685
        %v5687 = vpop.f32.mrf.mxu0
        %v5688 = vadd.f32 %v5599, %v5687
        %5689 = vmatmul.bf16.gmra.mxu0 %v4817
        %v5690 = vpop.f32.mrf.mxu0
        %v5691 = vadd.f32 %v5602, %v5690
        %v5692 = vpop.f32.mrf.mxu0
        %v5693 = vadd.f32 %v5604, %v5692
        %5694 = vmatmul.bf16.gmra.mxu0 %v4826
        %v5695 = vpop.f32.mrf.mxu0
        %v5696 = vadd.f32 %v5607, %v5695
        %v5697 = vpop.f32.mrf.mxu0
        %v5698 = vadd.f32 %v5609, %v5697
        %5699 = vmatmul.bf16.gmra.mxu0 %v4835
        %v5700 = vpop.f32.mrf.mxu0
        %v5701 = vadd.f32 %v5612, %v5700
        %v5702 = vpop.f32.mrf.mxu0
        %v5703 = vadd.f32 %v5614, %v5702
        %5704 = vmatmul.bf16.gmra.mxu0 %v4844
        %v5705 = vpop.f32.mrf.mxu0
        %v5706 = vadd.f32 %v5617, %v5705
        %v5707 = vpop.f32.mrf.mxu0
        %v5708 = vadd.f32 %v5619, %v5707
        %5709 = vmatmul.bf16.gmra.mxu0 %v4853
        %v5710 = vpop.f32.mrf.mxu0
        %v5711 = vadd.f32 %v5622, %v5710
        %v5712 = vpop.f32.mrf.mxu0
        %v5713 = vadd.f32 %v5624, %v5712
        %5714 = vmatmul.bf16.gmra.mxu0 %v4862
        %v5715 = vpop.f32.mrf.mxu0
        %v5716 = vadd.f32 %v5627, %v5715
        %v5717 = vpop.f32.mrf.mxu0
        %v5718 = vadd.f32 %v5629, %v5717
        %5719 = vmatmul.bf16.gmra.mxu0 %v4871
        %v5720 = vpop.f32.mrf.mxu0
        %v5721 = vadd.f32 %v5632, %v5720
        %v5722 = vpop.f32.mrf.mxu0
        %v5723 = vadd.f32 %v5634, %v5722
        %5724 = vmatmul.bf16.gmra.mxu0 %v4880
        %v5725 = vpop.f32.mrf.mxu0
        %v5726 = vadd.f32 %v5637, %v5725
        %v5727 = vpop.f32.mrf.mxu0
        %v5728 = vadd.f32 %v5639, %v5727
        %5729 = vdwg.mxu0
        %5730 = vmatpush.bf16.msra.mxu0 %v5350
        %5731 = vmatpush.bf16.msra.mxu0 %v5349
        %5732 = vmatpush.bf16.msra.mxu0 %v5348
        %5733 = vmatpush.bf16.msra.mxu0 %v5347
        %5734 = vmatpush.bf16.msra.mxu0 %v5346
        %5735 = vmatpush.bf16.msra.mxu0 %v5345
        %5736 = vmatpush.bf16.msra.mxu0 %v5344
        %5737 = vmatpush.bf16.msra.mxu0 %v5343
        %5738 = vmatmul.bf16.gmra.mxu0 %v4746
        %v5739 = vpop.f32.mrf.mxu0
        %v5740 = vadd.f32 %v5651, %v5739
        %v5741 = vpop.f32.mrf.mxu0
        %v5742 = vadd.f32 %v5653, %v5741
        %5743 = vmatmul.bf16.gmra.mxu0 %v4755
        %v5744 = vpop.f32.mrf.mxu0
        %v5745 = vadd.f32 %v5656, %v5744
        %v5746 = vpop.f32.mrf.mxu0
        %v5747 = vadd.f32 %v5658, %v5746
        %5748 = vmatmul.bf16.gmra.mxu0 %v4764
        %v5749 = vpop.f32.mrf.mxu0
        %v5750 = vadd.f32 %v5661, %v5749
        %v5751 = vpop.f32.mrf.mxu0
        %v5752 = vadd.f32 %v5663, %v5751
        %5753 = vmatmul.bf16.gmra.mxu0 %v4773
        %v5754 = vpop.f32.mrf.mxu0
        %v5755 = vadd.f32 %v5666, %v5754
        %v5756 = vpop.f32.mrf.mxu0
        %v5757 = vadd.f32 %v5668, %v5756
        %5758 = vmatmul.bf16.gmra.mxu0 %v4782
        %v5759 = vpop.f32.mrf.mxu0
        %v5760 = vadd.f32 %v5671, %v5759
        %v5761 = vpop.f32.mrf.mxu0
        %v5762 = vadd.f32 %v5673, %v5761
        %5763 = vmatmul.bf16.gmra.mxu0 %v4791
        %v5764 = vpop.f32.mrf.mxu0
        %v5765 = vadd.f32 %v5676, %v5764
        %v5766 = vpop.f32.mrf.mxu0
        %v5767 = vadd.f32 %v5678, %v5766
        %5768 = vmatmul.bf16.gmra.mxu0 %v4800
        %v5769 = vpop.f32.mrf.mxu0
        %v5770 = vadd.f32 %v5681, %v5769
        %v5771 = vpop.f32.mrf.mxu0
        %v5772 = vadd.f32 %v5683, %v5771
        %5773 = vmatmul.bf16.gmra.mxu0 %v4809
        %v5774 = vpop.f32.mrf.mxu0
        %v5775 = vadd.f32 %v5686, %v5774
        %v5776 = vpop.f32.mrf.mxu0
        %v5777 = vadd.f32 %v5688, %v5776
        %5778 = vmatmul.bf16.gmra.mxu0 %v4818
        %v5779 = vpop.f32.mrf.mxu0
        %v5780 = vadd.f32 %v5691, %v5779
        %v5781 = vpop.f32.mrf.mxu0
        %v5782 = vadd.f32 %v5693, %v5781
        %5783 = vmatmul.bf16.gmra.mxu0 %v4827
        %v5784 = vpop.f32.mrf.mxu0
        %v5785 = vadd.f32 %v5696, %v5784
        %v5786 = vpop.f32.mrf.mxu0
        %v5787 = vadd.f32 %v5698, %v5786
        %5788 = vmatmul.bf16.gmra.mxu0 %v4836
        %v5789 = vpop.f32.mrf.mxu0
        %v5790 = vadd.f32 %v5701, %v5789
        %v5791 = vpop.f32.mrf.mxu0
        %v5792 = vadd.f32 %v5703, %v5791
        %5793 = vmatmul.bf16.gmra.mxu0 %v4845
        %v5794 = vpop.f32.mrf.mxu0
        %v5795 = vadd.f32 %v5706, %v5794
        %v5796 = vpop.f32.mrf.mxu0
        %v5797 = vadd.f32 %v5708, %v5796
        %5798 = vmatmul.bf16.gmra.mxu0 %v4854
        %v5799 = vpop.f32.mrf.mxu0
        %v5800 = vadd.f32 %v5711, %v5799
        %v5801 = vpop.f32.mrf.mxu0
        %v5802 = vadd.f32 %v5713, %v5801
        %5803 = vmatmul.bf16.gmra.mxu0 %v4863
        %v5804 = vpop.f32.mrf.mxu0
        %v5805 = vadd.f32 %v5716, %v5804
        %v5806 = vpop.f32.mrf.mxu0
        %v5807 = vadd.f32 %v5718, %v5806
        %5808 = vmatmul.bf16.gmra.mxu0 %v4872
        %v5809 = vpop.f32.mrf.mxu0
        %v5810 = vadd.f32 %v5721, %v5809
        %v5811 = vpop.f32.mrf.mxu0
        %v5812 = vadd.f32 %v5723, %v5811
        %5813 = vmatmul.bf16.gmra.mxu0 %v4881
        %v5814 = vpop.f32.mrf.mxu0
        %v5815 = vadd.f32 %v5726, %v5814
        %v5816 = vpop.f32.mrf.mxu0
        %v5817 = vadd.f32 %v5728, %v5816
        %5818 = vdwg.mxu0
        %5819 = vmatpush.bf16.msra.mxu0 %v5358
        %5820 = vmatpush.bf16.msra.mxu0 %v5357
        %5821 = vmatpush.bf16.msra.mxu0 %v5356
        %5822 = vmatpush.bf16.msra.mxu0 %v5355
        %5823 = vmatpush.bf16.msra.mxu0 %v5354
        %5824 = vmatpush.bf16.msra.mxu0 %v5353
        %5825 = vmatpush.bf16.msra.mxu0 %v5352
        %5826 = vmatpush.bf16.msra.mxu0 %v5351
        %5827 = vmatmul.bf16.gmra.mxu0 %v4747
        %v5828 = vpop.f32.mrf.mxu0
        %v5829 = vadd.f32 %v5740, %v5828
        %v5830 = vpop.f32.mrf.mxu0
        %v5831 = vadd.f32 %v5742, %v5830
        %5832 = vmatmul.bf16.gmra.mxu0 %v4756
        %v5833 = vpop.f32.mrf.mxu0
        %v5834 = vadd.f32 %v5745, %v5833
        %v5835 = vpop.f32.mrf.mxu0
        %v5836 = vadd.f32 %v5747, %v5835
        %5837 = vmatmul.bf16.gmra.mxu0 %v4765
        %v5838 = vpop.f32.mrf.mxu0
        %v5839 = vadd.f32 %v5750, %v5838
        %v5840 = vpop.f32.mrf.mxu0
        %v5841 = vadd.f32 %v5752, %v5840
        %5842 = vmatmul.bf16.gmra.mxu0 %v4774
        %v5843 = vpop.f32.mrf.mxu0
        %v5844 = vadd.f32 %v5755, %v5843
        %v5845 = vpop.f32.mrf.mxu0
        %v5846 = vadd.f32 %v5757, %v5845
        %5847 = vmatmul.bf16.gmra.mxu0 %v4783
        %v5848 = vpop.f32.mrf.mxu0
        %v5849 = vadd.f32 %v5760, %v5848
        %v5850 = vpop.f32.mrf.mxu0
        %v5851 = vadd.f32 %v5762, %v5850
        %5852 = vmatmul.bf16.gmra.mxu0 %v4792
        %v5853 = vpop.f32.mrf.mxu0
        %v5854 = vadd.f32 %v5765, %v5853
        %v5855 = vpop.f32.mrf.mxu0
        %v5856 = vadd.f32 %v5767, %v5855
        %5857 = vmatmul.bf16.gmra.mxu0 %v4801
        %v5858 = vpop.f32.mrf.mxu0
        %v5859 = vadd.f32 %v5770, %v5858
        %v5860 = vpop.f32.mrf.mxu0
        %v5861 = vadd.f32 %v5772, %v5860
        %5862 = vmatmul.bf16.gmra.mxu0 %v4810
        %v5863 = vpop.f32.mrf.mxu0
        %v5864 = vadd.f32 %v5775, %v5863
        %v5865 = vpop.f32.mrf.mxu0
        %v5866 = vadd.f32 %v5777, %v5865
        %5867 = vmatmul.bf16.gmra.mxu0 %v4819
        %v5868 = vpop.f32.mrf.mxu0
        %v5869 = vadd.f32 %v5780, %v5868
        %v5870 = vpop.f32.mrf.mxu0
        %v5871 = vadd.f32 %v5782, %v5870
        %5872 = vmatmul.bf16.gmra.mxu0 %v4828
        %v5873 = vpop.f32.mrf.mxu0
        %v5874 = vadd.f32 %v5785, %v5873
        %v5875 = vpop.f32.mrf.mxu0
        %v5876 = vadd.f32 %v5787, %v5875
        %5877 = vmatmul.bf16.gmra.mxu0 %v4837
        %v5878 = vpop.f32.mrf.mxu0
        %v5879 = vadd.f32 %v5790, %v5878
        %v5880 = vpop.f32.mrf.mxu0
        %v5881 = vadd.f32 %v5792, %v5880
        %5882 = vmatmul.bf16.gmra.mxu0 %v4846
        %v5883 = vpop.f32.mrf.mxu0
        %v5884 = vadd.f32 %v5795, %v5883
        %v5885 = vpop.f32.mrf.mxu0
        %v5886 = vadd.f32 %v5797, %v5885
        %5887 = vmatmul.bf16.gmra.mxu0 %v4855
        %v5888 = vpop.f32.mrf.mxu0
        %v5889 = vadd.f32 %v5800, %v5888
        %v5890 = vpop.f32.mrf.mxu0
        %v5891 = vadd.f32 %v5802, %v5890
        %5892 = vmatmul.bf16.gmra.mxu0 %v4864
        %v5893 = vpop.f32.mrf.mxu0
        %v5894 = vadd.f32 %v5805, %v5893
        %v5895 = vpop.f32.mrf.mxu0
        %v5896 = vadd.f32 %v5807, %v5895
        %5897 = vmatmul.bf16.gmra.mxu0 %v4873
        %v5898 = vpop.f32.mrf.mxu0
        %v5899 = vadd.f32 %v5810, %v5898
        %v5900 = vpop.f32.mrf.mxu0
        %v5901 = vadd.f32 %v5812, %v5900
        %5902 = vmatmul.bf16.gmra.mxu0 %v4882
        %v5903 = vpop.f32.mrf.mxu0
        %v5904 = vadd.f32 %v5815, %v5903
        %v5905 = vpop.f32.mrf.mxu0
        %v5906 = vadd.f32 %v5817, %v5905
        %5907 = vdwg.mxu0
        %5908 = vmatpush.bf16.msra.mxu0 %v5366
        %5909 = vmatpush.bf16.msra.mxu0 %v5365
        %5910 = vmatpush.bf16.msra.mxu0 %v5364
        %5911 = vmatpush.bf16.msra.mxu0 %v5363
        %5912 = vmatpush.bf16.msra.mxu0 %v5362
        %5913 = vmatpush.bf16.msra.mxu0 %v5361
        %5914 = vmatpush.bf16.msra.mxu0 %v5360
        %5915 = vmatpush.bf16.msra.mxu0 %v5359
        %5916 = vmatmul.bf16.gmra.mxu0 %v4748
        %v5917 = vpop.f32.mrf.mxu0
        %v5918 = vadd.f32 %v5829, %v5917
        %v5919 = vpop.f32.mrf.mxu0
        %v5920 = vadd.f32 %v5831, %v5919
        %5921 = vmatmul.bf16.gmra.mxu0 %v4757
        %v5922 = vpop.f32.mrf.mxu0
        %v5923 = vadd.f32 %v5834, %v5922
        %v5924 = vpop.f32.mrf.mxu0
        %v5925 = vadd.f32 %v5836, %v5924
        %5926 = vmatmul.bf16.gmra.mxu0 %v4766
        %v5927 = vpop.f32.mrf.mxu0
        %v5928 = vadd.f32 %v5839, %v5927
        %v5929 = vpop.f32.mrf.mxu0
        %v5930 = vadd.f32 %v5841, %v5929
        %5931 = vmatmul.bf16.gmra.mxu0 %v4775
        %v5932 = vpop.f32.mrf.mxu0
        %v5933 = vadd.f32 %v5844, %v5932
        %v5934 = vpop.f32.mrf.mxu0
        %v5935 = vadd.f32 %v5846, %v5934
        %5936 = vmatmul.bf16.gmra.mxu0 %v4784
        %v5937 = vpop.f32.mrf.mxu0
        %v5938 = vadd.f32 %v5849, %v5937
        %v5939 = vpop.f32.mrf.mxu0
        %v5940 = vadd.f32 %v5851, %v5939
        %5941 = vmatmul.bf16.gmra.mxu0 %v4793
        %v5942 = vpop.f32.mrf.mxu0
        %v5943 = vadd.f32 %v5854, %v5942
        %v5944 = vpop.f32.mrf.mxu0
        %v5945 = vadd.f32 %v5856, %v5944
        %5946 = vmatmul.bf16.gmra.mxu0 %v4802
        %v5947 = vpop.f32.mrf.mxu0
        %v5948 = vadd.f32 %v5859, %v5947
        %v5949 = vpop.f32.mrf.mxu0
        %v5950 = vadd.f32 %v5861, %v5949
        %5951 = vmatmul.bf16.gmra.mxu0 %v4811
        %v5952 = vpop.f32.mrf.mxu0
        %v5953 = vadd.f32 %v5864, %v5952
        %v5954 = vpop.f32.mrf.mxu0
        %v5955 = vadd.f32 %v5866, %v5954
        %5956 = vmatmul.bf16.gmra.mxu0 %v4820
        %v5957 = vpop.f32.mrf.mxu0
        %v5958 = vadd.f32 %v5869, %v5957
        %v5959 = vpop.f32.mrf.mxu0
        %v5960 = vadd.f32 %v5871, %v5959
        %5961 = vmatmul.bf16.gmra.mxu0 %v4829
        %v5962 = vpop.f32.mrf.mxu0
        %v5963 = vadd.f32 %v5874, %v5962
        %v5964 = vpop.f32.mrf.mxu0
        %v5965 = vadd.f32 %v5876, %v5964
        %5966 = vmatmul.bf16.gmra.mxu0 %v4838
        %v5967 = vpop.f32.mrf.mxu0
        %v5968 = vadd.f32 %v5879, %v5967
        %v5969 = vpop.f32.mrf.mxu0
        %v5970 = vadd.f32 %v5881, %v5969
        %5971 = vmatmul.bf16.gmra.mxu0 %v4847
        %v5972 = vpop.f32.mrf.mxu0
        %v5973 = vadd.f32 %v5884, %v5972
        %v5974 = vpop.f32.mrf.mxu0
        %v5975 = vadd.f32 %v5886, %v5974
        %5976 = vmatmul.bf16.gmra.mxu0 %v4856
        %v5977 = vpop.f32.mrf.mxu0
        %v5978 = vadd.f32 %v5889, %v5977
        %v5979 = vpop.f32.mrf.mxu0
        %v5980 = vadd.f32 %v5891, %v5979
        %5981 = vmatmul.bf16.gmra.mxu0 %v4865
        %v5982 = vpop.f32.mrf.mxu0
        %v5983 = vadd.f32 %v5894, %v5982
        %v5984 = vpop.f32.mrf.mxu0
        %v5985 = vadd.f32 %v5896, %v5984
        %5986 = vmatmul.bf16.gmra.mxu0 %v4874
        %v5987 = vpop.f32.mrf.mxu0
        %v5988 = vadd.f32 %v5899, %v5987
        %v5989 = vpop.f32.mrf.mxu0
        %v5990 = vadd.f32 %v5901, %v5989
        %5991 = vmatmul.bf16.gmra.mxu0 %v4883
        %v5992 = vpop.f32.mrf.mxu0
        %v5993 = vadd.f32 %v5904, %v5992
        %v5994 = vpop.f32.mrf.mxu0
        %v5995 = vadd.f32 %v5906, %v5994
        %5996 = vdwg.mxu0
        %5997 = vmatpush.bf16.msra.mxu0 %v5374
        %5998 = vmatpush.bf16.msra.mxu0 %v5373
        %5999 = vmatpush.bf16.msra.mxu0 %v5372
        %6000 = vmatpush.bf16.msra.mxu0 %v5371
        %6001 = vmatpush.bf16.msra.mxu0 %v5370
        %6002 = vmatpush.bf16.msra.mxu0 %v5369
        %6003 = vmatpush.bf16.msra.mxu0 %v5368
        %6004 = vmatpush.bf16.msra.mxu0 %v5367
        %6005 = vmatmul.bf16.gmra.mxu0 %v4749
        %v6006 = vpop.f32.mrf.mxu0
        %v6007 = vadd.f32 %v5918, %v6006
        %v6008 = vpop.f32.mrf.mxu0
        %v6009 = vadd.f32 %v5920, %v6008
        %6010 = vmatmul.bf16.gmra.mxu0 %v4758
        %v6011 = vpop.f32.mrf.mxu0
        %v6012 = vadd.f32 %v5923, %v6011
        %v6013 = vpop.f32.mrf.mxu0
        %v6014 = vadd.f32 %v5925, %v6013
        %6015 = vmatmul.bf16.gmra.mxu0 %v4767
        %v6016 = vpop.f32.mrf.mxu0
        %v6017 = vadd.f32 %v5928, %v6016
        %v6018 = vpop.f32.mrf.mxu0
        %v6019 = vadd.f32 %v5930, %v6018
        %6020 = vmatmul.bf16.gmra.mxu0 %v4776
        %v6021 = vpop.f32.mrf.mxu0
        %v6022 = vadd.f32 %v5933, %v6021
        %v6023 = vpop.f32.mrf.mxu0
        %v6024 = vadd.f32 %v5935, %v6023
        %6025 = vmatmul.bf16.gmra.mxu0 %v4785
        %v6026 = vpop.f32.mrf.mxu0
        %v6027 = vadd.f32 %v5938, %v6026
        %v6028 = vpop.f32.mrf.mxu0
        %v6029 = vadd.f32 %v5940, %v6028
        %6030 = vmatmul.bf16.gmra.mxu0 %v4794
        %v6031 = vpop.f32.mrf.mxu0
        %v6032 = vadd.f32 %v5943, %v6031
        %v6033 = vpop.f32.mrf.mxu0
        %v6034 = vadd.f32 %v5945, %v6033
        %6035 = vmatmul.bf16.gmra.mxu0 %v4803
        %v6036 = vpop.f32.mrf.mxu0
        %v6037 = vadd.f32 %v5948, %v6036
        %v6038 = vpop.f32.mrf.mxu0
        %v6039 = vadd.f32 %v5950, %v6038
        %6040 = vmatmul.bf16.gmra.mxu0 %v4812
        %v6041 = vpop.f32.mrf.mxu0
        %v6042 = vadd.f32 %v5953, %v6041
        %v6043 = vpop.f32.mrf.mxu0
        %v6044 = vadd.f32 %v5955, %v6043
        %6045 = vmatmul.bf16.gmra.mxu0 %v4821
        %v6046 = vpop.f32.mrf.mxu0
        %v6047 = vadd.f32 %v5958, %v6046
        %v6048 = vpop.f32.mrf.mxu0
        %v6049 = vadd.f32 %v5960, %v6048
        %6050 = vmatmul.bf16.gmra.mxu0 %v4830
        %v6051 = vpop.f32.mrf.mxu0
        %v6052 = vadd.f32 %v5963, %v6051
        %v6053 = vpop.f32.mrf.mxu0
        %v6054 = vadd.f32 %v5965, %v6053
        %6055 = vmatmul.bf16.gmra.mxu0 %v4839
        %v6056 = vpop.f32.mrf.mxu0
        %v6057 = vadd.f32 %v5968, %v6056
        %v6058 = vpop.f32.mrf.mxu0
        %v6059 = vadd.f32 %v5970, %v6058
        %6060 = vmatmul.bf16.gmra.mxu0 %v4848
        %v6061 = vpop.f32.mrf.mxu0
        %v6062 = vadd.f32 %v5973, %v6061
        %v6063 = vpop.f32.mrf.mxu0
        %v6064 = vadd.f32 %v5975, %v6063
        %6065 = vmatmul.bf16.gmra.mxu0 %v4857
        %v6066 = vpop.f32.mrf.mxu0
        %v6067 = vadd.f32 %v5978, %v6066
        %v6068 = vpop.f32.mrf.mxu0
        %v6069 = vadd.f32 %v5980, %v6068
        %6070 = vmatmul.bf16.gmra.mxu0 %v4866
        %v6071 = vpop.f32.mrf.mxu0
        %v6072 = vadd.f32 %v5983, %v6071
        %v6073 = vpop.f32.mrf.mxu0
        %v6074 = vadd.f32 %v5985, %v6073
        %6075 = vmatmul.bf16.gmra.mxu0 %v4875
        %v6076 = vpop.f32.mrf.mxu0
        %v6077 = vadd.f32 %v5988, %v6076
        %v6078 = vpop.f32.mrf.mxu0
        %v6079 = vadd.f32 %v5990, %v6078
        %6080 = vmatmul.bf16.gmra.mxu0 %v4884
        %v6081 = vpop.f32.mrf.mxu0
        %v6082 = vadd.f32 %v5993, %v6081
        %v6083 = vpop.f32.mrf.mxu0
        %v6084 = vadd.f32 %v5995, %v6083
        %6085 = vdwg.mxu0
        %6086 = vmatpush.bf16.msra.mxu0 %v5382
        %6087 = vmatpush.bf16.msra.mxu0 %v5381
        %6088 = vmatpush.bf16.msra.mxu0 %v5380
        %6089 = vmatpush.bf16.msra.mxu0 %v5379
        %6090 = vmatpush.bf16.msra.mxu0 %v5378
        %6091 = vmatpush.bf16.msra.mxu0 %v5377
        %6092 = vmatpush.bf16.msra.mxu0 %v5376
        %6093 = vmatpush.bf16.msra.mxu0 %v5375
        %6094 = vmatmul.bf16.gmra.mxu0 %v4750
        %v6095 = vpop.f32.mrf.mxu0
        %v6096 = vadd.f32 %v6007, %v6095
        %v6097 = vpop.f32.mrf.mxu0
        %v6098 = vadd.f32 %v6009, %v6097
        %6099 = vmatmul.bf16.gmra.mxu0 %v4759
        %v6100 = vpop.f32.mrf.mxu0
        %v6101 = vadd.f32 %v6012, %v6100
        %v6102 = vpop.f32.mrf.mxu0
        %v6103 = vadd.f32 %v6014, %v6102
        %6104 = vmatmul.bf16.gmra.mxu0 %v4768
        %v6105 = vpop.f32.mrf.mxu0
        %v6106 = vadd.f32 %v6017, %v6105
        %v6107 = vpop.f32.mrf.mxu0
        %v6108 = vadd.f32 %v6019, %v6107
        %6109 = vmatmul.bf16.gmra.mxu0 %v4777
        %v6110 = vpop.f32.mrf.mxu0
        %v6111 = vadd.f32 %v6022, %v6110
        %v6112 = vpop.f32.mrf.mxu0
        %v6113 = vadd.f32 %v6024, %v6112
        %6114 = vmatmul.bf16.gmra.mxu0 %v4786
        %v6115 = vpop.f32.mrf.mxu0
        %v6116 = vadd.f32 %v6027, %v6115
        %v6117 = vpop.f32.mrf.mxu0
        %v6118 = vadd.f32 %v6029, %v6117
        %6119 = vmatmul.bf16.gmra.mxu0 %v4795
        %v6120 = vpop.f32.mrf.mxu0
        %v6121 = vadd.f32 %v6032, %v6120
        %v6122 = vpop.f32.mrf.mxu0
        %v6123 = vadd.f32 %v6034, %v6122
        %6124 = vmatmul.bf16.gmra.mxu0 %v4804
        %v6125 = vpop.f32.mrf.mxu0
        %v6126 = vadd.f32 %v6037, %v6125
        %v6127 = vpop.f32.mrf.mxu0
        %v6128 = vadd.f32 %v6039, %v6127
        %6129 = vmatmul.bf16.gmra.mxu0 %v4813
        %v6130 = vpop.f32.mrf.mxu0
        %v6131 = vadd.f32 %v6042, %v6130
        %v6132 = vpop.f32.mrf.mxu0
        %v6133 = vadd.f32 %v6044, %v6132
        %6134 = vmatmul.bf16.gmra.mxu0 %v4822
        %v6135 = vpop.f32.mrf.mxu0
        %v6136 = vadd.f32 %v6047, %v6135
        %v6137 = vpop.f32.mrf.mxu0
        %v6138 = vadd.f32 %v6049, %v6137
        %6139 = vmatmul.bf16.gmra.mxu0 %v4831
        %v6140 = vpop.f32.mrf.mxu0
        %v6141 = vadd.f32 %v6052, %v6140
        %v6142 = vpop.f32.mrf.mxu0
        %v6143 = vadd.f32 %v6054, %v6142
        %6144 = vmatmul.bf16.gmra.mxu0 %v4840
        %v6145 = vpop.f32.mrf.mxu0
        %v6146 = vadd.f32 %v6057, %v6145
        %v6147 = vpop.f32.mrf.mxu0
        %v6148 = vadd.f32 %v6059, %v6147
        %6149 = vmatmul.bf16.gmra.mxu0 %v4849
        %v6150 = vpop.f32.mrf.mxu0
        %v6151 = vadd.f32 %v6062, %v6150
        %v6152 = vpop.f32.mrf.mxu0
        %v6153 = vadd.f32 %v6064, %v6152
        %6154 = vmatmul.bf16.gmra.mxu0 %v4858
        %v6155 = vpop.f32.mrf.mxu0
        %v6156 = vadd.f32 %v6067, %v6155
        %v6157 = vpop.f32.mrf.mxu0
        %v6158 = vadd.f32 %v6069, %v6157
        %6159 = vmatmul.bf16.gmra.mxu0 %v4867
        %v6160 = vpop.f32.mrf.mxu0
        %v6161 = vadd.f32 %v6072, %v6160
        %v6162 = vpop.f32.mrf.mxu0
        %v6163 = vadd.f32 %v6074, %v6162
        %6164 = vmatmul.bf16.gmra.mxu0 %v4876
        %v6165 = vpop.f32.mrf.mxu0
        %v6166 = vadd.f32 %v6077, %v6165
        %v6167 = vpop.f32.mrf.mxu0
        %v6168 = vadd.f32 %v6079, %v6167
        %6169 = vmatmul.bf16.gmra.mxu0 %v4885
        %v6170 = vpop.f32.mrf.mxu0
        %v6171 = vadd.f32 %v6082, %v6170
        %v6172 = vpop.f32.mrf.mxu0
        %v6173 = vadd.f32 %v6084, %v6172
        %6174 = vdwg.mxu0
        %6175 = vmatpush.bf16.msra.mxu0 %v5390
        %6176 = vmatpush.bf16.msra.mxu0 %v5389
        %6177 = vmatpush.bf16.msra.mxu0 %v5388
        %6178 = vmatpush.bf16.msra.mxu0 %v5387
        %6179 = vmatpush.bf16.msra.mxu0 %v5386
        %6180 = vmatpush.bf16.msra.mxu0 %v5385
        %6181 = vmatpush.bf16.msra.mxu0 %v5384
        %6182 = vmatpush.bf16.msra.mxu0 %v5383
        %6183 = vmatmul.bf16.gmra.mxu0 %v4751
        %v6184 = vpop.f32.mrf.mxu0
        %v6185 = vadd.f32 %v6096, %v6184
        %v6186 = vpop.f32.mrf.mxu0
        %v6187 = vadd.f32 %v6098, %v6186
        %6188 = vmatmul.bf16.gmra.mxu0 %v4760
        %v6189 = vpop.f32.mrf.mxu0
        %v6190 = vadd.f32 %v6101, %v6189
        %v6191 = vpop.f32.mrf.mxu0
        %v6192 = vadd.f32 %v6103, %v6191
        %6193 = vmatmul.bf16.gmra.mxu0 %v4769
        %v6194 = vpop.f32.mrf.mxu0
        %v6195 = vadd.f32 %v6106, %v6194
        %v6196 = vpop.f32.mrf.mxu0
        %v6197 = vadd.f32 %v6108, %v6196
        %6198 = vmatmul.bf16.gmra.mxu0 %v4778
        %v6199 = vpop.f32.mrf.mxu0
        %v6200 = vadd.f32 %v6111, %v6199
        %v6201 = vpop.f32.mrf.mxu0
        %v6202 = vadd.f32 %v6113, %v6201
        %6203 = vmatmul.bf16.gmra.mxu0 %v4787
        %v6204 = vpop.f32.mrf.mxu0
        %v6205 = vadd.f32 %v6116, %v6204
        %v6206 = vpop.f32.mrf.mxu0
        %v6207 = vadd.f32 %v6118, %v6206
        %6208 = vmatmul.bf16.gmra.mxu0 %v4796
        %v6209 = vpop.f32.mrf.mxu0
        %v6210 = vadd.f32 %v6121, %v6209
        %v6211 = vpop.f32.mrf.mxu0
        %v6212 = vadd.f32 %v6123, %v6211
        %6213 = vmatmul.bf16.gmra.mxu0 %v4805
        %v6214 = vpop.f32.mrf.mxu0
        %v6215 = vadd.f32 %v6126, %v6214
        %v6216 = vpop.f32.mrf.mxu0
        %v6217 = vadd.f32 %v6128, %v6216
        %6218 = vmatmul.bf16.gmra.mxu0 %v4814
        %v6219 = vpop.f32.mrf.mxu0
        %v6220 = vadd.f32 %v6131, %v6219
        %v6221 = vpop.f32.mrf.mxu0
        %v6222 = vadd.f32 %v6133, %v6221
        %6223 = vmatmul.bf16.gmra.mxu0 %v4823
        %v6224 = vpop.f32.mrf.mxu0
        %v6225 = vadd.f32 %v6136, %v6224
        %v6226 = vpop.f32.mrf.mxu0
        %v6227 = vadd.f32 %v6138, %v6226
        %6228 = vmatmul.bf16.gmra.mxu0 %v4832
        %v6229 = vpop.f32.mrf.mxu0
        %v6230 = vadd.f32 %v6141, %v6229
        %v6231 = vpop.f32.mrf.mxu0
        %v6232 = vadd.f32 %v6143, %v6231
        %6233 = vmatmul.bf16.gmra.mxu0 %v4841
        %v6234 = vpop.f32.mrf.mxu0
        %v6235 = vadd.f32 %v6146, %v6234
        %v6236 = vpop.f32.mrf.mxu0
        %v6237 = vadd.f32 %v6148, %v6236
        %6238 = vmatmul.bf16.gmra.mxu0 %v4850
        %v6239 = vpop.f32.mrf.mxu0
        %v6240 = vadd.f32 %v6151, %v6239
        %v6241 = vpop.f32.mrf.mxu0
        %v6242 = vadd.f32 %v6153, %v6241
        %6243 = vmatmul.bf16.gmra.mxu0 %v4859
        %v6244 = vpop.f32.mrf.mxu0
        %v6245 = vadd.f32 %v6156, %v6244
        %v6246 = vpop.f32.mrf.mxu0
        %v6247 = vadd.f32 %v6158, %v6246
        %6248 = vmatmul.bf16.gmra.mxu0 %v4868
        %v6249 = vpop.f32.mrf.mxu0
        %v6250 = vadd.f32 %v6161, %v6249
        %v6251 = vpop.f32.mrf.mxu0
        %v6252 = vadd.f32 %v6163, %v6251
        %6253 = vmatmul.bf16.gmra.mxu0 %v4877
        %v6254 = vpop.f32.mrf.mxu0
        %v6255 = vadd.f32 %v6166, %v6254
        %v6256 = vpop.f32.mrf.mxu0
        %v6257 = vadd.f32 %v6168, %v6256
        %6258 = vmatmul.bf16.gmra.mxu0 %v4886
        %v6259 = vpop.f32.mrf.mxu0
        %v6260 = vadd.f32 %v6171, %v6259
        %v6261 = vpop.f32.mrf.mxu0
        %v6262 = vadd.f32 %v6173, %v6261
        %6263 = vdwg.mxu0
        %v6264 = vld [vmem:[%s9] sm:$0x1]
        %v6266 = vperm.slane %v6264, 0
        %v6268 = vmul.f32 %v6185, %v6266
        %v6269 = vmul.f32 %v6187, %v6266
        %v6270 = vmul.f32 %v6190, %v6266
        %v6271 = vmul.f32 %v6192, %v6266
        %v6272 = vmul.f32 %v6195, %v6266
        %v6273 = vmul.f32 %v6197, %v6266
        %v6274 = vmul.f32 %v6200, %v6266
        %v6275 = vmul.f32 %v6202, %v6266
        %v6276 = vmul.f32 %v6205, %v6266
        %v6277 = vmul.f32 %v6207, %v6266
        %v6278 = vmul.f32 %v6210, %v6266
        %v6279 = vmul.f32 %v6212, %v6266
        %v6280 = vmul.f32 %v6215, %v6266
        %v6281 = vmul.f32 %v6217, %v6266
        %v6282 = vmul.f32 %v6220, %v6266
        %v6283 = vmul.f32 %v6222, %v6266
        %v6284 = vmul.f32 %v6225, %v6266
        %v6285 = vmul.f32 %v6227, %v6266
        %v6286 = vmul.f32 %v6230, %v6266
        %v6287 = vmul.f32 %v6232, %v6266
        %v6288 = vmul.f32 %v6235, %v6266
        %v6289 = vmul.f32 %v6237, %v6266
        %v6290 = vmul.f32 %v6240, %v6266
        %v6291 = vmul.f32 %v6242, %v6266
        %v6292 = vmul.f32 %v6245, %v6266
        %v6293 = vmul.f32 %v6247, %v6266
        %v6294 = vmul.f32 %v6250, %v6266
        %v6295 = vmul.f32 %v6252, %v6266
        %v6296 = vmul.f32 %v6255, %v6266
        %v6297 = vmul.f32 %v6257, %v6266
        %v6298 = vmul.f32 %v6260, %v6266
        %v6299 = vmul.f32 %v6262, %v6266
        %v6300 = vld [vmem:[%s10] sm:$0x1]
        %v6302 = vperm.slane %v6300, 0
        %v6304 = vadd.f32 %v6268, %v6302
        %v6305 = vadd.f32 %v6269, %v6302
        %v6306 = vadd.f32 %v6270, %v6302
        %v6307 = vadd.f32 %v6271, %v6302
        %v6308 = vadd.f32 %v6272, %v6302
        %v6309 = vadd.f32 %v6273, %v6302
        %v6310 = vadd.f32 %v6274, %v6302
        %v6311 = vadd.f32 %v6275, %v6302
        %v6312 = vadd.f32 %v6276, %v6302
        %v6313 = vadd.f32 %v6277, %v6302
        %v6314 = vadd.f32 %v6278, %v6302
        %v6315 = vadd.f32 %v6279, %v6302
        %v6316 = vadd.f32 %v6280, %v6302
        %v6317 = vadd.f32 %v6281, %v6302
        %v6318 = vadd.f32 %v6282, %v6302
        %v6319 = vadd.f32 %v6283, %v6302
        %v6320 = vadd.f32 %v6284, %v6302
        %v6321 = vadd.f32 %v6285, %v6302
        %v6322 = vadd.f32 %v6286, %v6302
        %v6323 = vadd.f32 %v6287, %v6302
        %v6324 = vadd.f32 %v6288, %v6302
        %v6325 = vadd.f32 %v6289, %v6302
        %v6326 = vadd.f32 %v6290, %v6302
        %v6327 = vadd.f32 %v6291, %v6302
        %v6328 = vadd.f32 %v6292, %v6302
        %v6329 = vadd.f32 %v6293, %v6302
        %v6330 = vadd.f32 %v6294, %v6302
        %v6331 = vadd.f32 %v6295, %v6302
        %v6332 = vadd.f32 %v6296, %v6302
        %v6333 = vadd.f32 %v6297, %v6302
        %v6334 = vadd.f32 %v6298, %v6302
        %v6335 = vadd.f32 %v6299, %v6302
        %v6336 = vmax.f32 %v6304, 0.0
        %v6337 = vmax.f32 %v6305, 0.0
        %v6338 = vmax.f32 %v6306, 0.0
        %v6339 = vmax.f32 %v6307, 0.0
        %v6340 = vmax.f32 %v6308, 0.0
        %v6341 = vmax.f32 %v6309, 0.0
        %v6342 = vmax.f32 %v6310, 0.0
        %v6343 = vmax.f32 %v6311, 0.0
        %v6344 = vmax.f32 %v6312, 0.0
        %v6345 = vmax.f32 %v6313, 0.0
        %v6346 = vmax.f32 %v6314, 0.0
        %v6347 = vmax.f32 %v6315, 0.0
        %v6348 = vmax.f32 %v6316, 0.0
        %v6349 = vmax.f32 %v6317, 0.0
        %v6350 = vmax.f32 %v6318, 0.0
        %v6351 = vmax.f32 %v6319, 0.0
        %v6352 = vmax.f32 %v6320, 0.0
        %v6353 = vmax.f32 %v6321, 0.0
        %v6354 = vmax.f32 %v6322, 0.0
        %v6355 = vmax.f32 %v6323, 0.0
        %v6356 = vmax.f32 %v6324, 0.0
        %v6357 = vmax.f32 %v6325, 0.0
        %v6358 = vmax.f32 %v6326, 0.0
        %v6359 = vmax.f32 %v6327, 0.0
        %v6360 = vmax.f32 %v6328, 0.0
        %v6361 = vmax.f32 %v6329, 0.0
        %v6362 = vmax.f32 %v6330, 0.0
        %v6363 = vmax.f32 %v6331, 0.0
        %v6364 = vmax.f32 %v6332, 0.0
        %v6365 = vmax.f32 %v6333, 0.0
        %v6366 = vmax.f32 %v6334, 0.0
        %v6367 = vmax.f32 %v6335, 0.0
        %v6368 = vpack.c.bf16 %v6337, %v6336
        %v6369 = vpack.c.bf16 %v6339, %v6338
        %v6370 = vpack.c.bf16 %v6341, %v6340
        %v6371 = vpack.c.bf16 %v6343, %v6342
        %v6372 = vpack.c.bf16 %v6345, %v6344
        %v6373 = vpack.c.bf16 %v6347, %v6346
        %v6374 = vpack.c.bf16 %v6349, %v6348
        %v6375 = vpack.c.bf16 %v6351, %v6350
        %v6376 = vpack.c.bf16 %v6353, %v6352
        %v6377 = vpack.c.bf16 %v6355, %v6354
        %v6378 = vpack.c.bf16 %v6357, %v6356
        %v6379 = vpack.c.bf16 %v6359, %v6358
        %v6380 = vpack.c.bf16 %v6361, %v6360
        %v6381 = vpack.c.bf16 %v6363, %v6362
        %v6382 = vpack.c.bf16 %v6365, %v6364
        %v6383 = vpack.c.bf16 %v6367, %v6366
        %v6384 = vld [vmem:[%s11] sm:$0xf]
        %v6385 = vld [vmem:[%s11 + $0x4] sm:$0xf]
        %v6386 = vld [vmem:[%s11 + $0x8] sm:$0xf]
        %v6387 = vld [vmem:[%s11 + $0xc] sm:$0xf]
        %v6388 = vld [vmem:[%s11 + $0x10] sm:$0xf]
        %v6389 = vld [vmem:[%s11 + $0x14] sm:$0xf]
        %v6390 = vld [vmem:[%s11 + $0x18] sm:$0xf]
        %v6391 = vld [vmem:[%s11 + $0x1c] sm:$0xf]
        %v6392 = vld [vmem:[%s11 + $0x20] sm:$0xf]
        %v6393 = vld [vmem:[%s11 + $0x24] sm:$0xf]
        %v6394 = vld [vmem:[%s11 + $0x28] sm:$0xf]
        %v6395 = vld [vmem:[%s11 + $0x2c] sm:$0xf]
        %v6396 = vld [vmem:[%s11 + $0x30] sm:$0xf]
        %v6397 = vld [vmem:[%s11 + $0x34] sm:$0xf]
        %v6398 = vld [vmem:[%s11 + $0x38] sm:$0xf]
        %v6399 = vld [vmem:[%s11 + $0x3c] sm:$0xf]
        %v6400 = vld [vmem:[%s12] sm:$0x1]
        %v6402 = vperm.slane %v6400, 0
        %v6420 = vunpack.c.l.b16 %v6384
        %v6421 = vunpack.c.l.b16 %v6385
        %v6422 = vunpack.c.l.b16 %v6386
        %v6423 = vunpack.c.l.b16 %v6387
        %v6424 = vunpack.c.l.b16 %v6388
        %v6425 = vunpack.c.l.b16 %v6389
        %v6426 = vunpack.c.l.b16 %v6390
        %v6427 = vunpack.c.l.b16 %v6391
        %v6428 = vunpack.c.l.b16 %v6392
        %v6429 = vunpack.c.l.b16 %v6393
        %v6430 = vunpack.c.l.b16 %v6394
        %v6431 = vunpack.c.l.b16 %v6395
        %v6432 = vunpack.c.l.b16 %v6396
        %v6433 = vunpack.c.l.b16 %v6397
        %v6434 = vunpack.c.l.b16 %v6398
        %v6435 = vunpack.c.l.b16 %v6399
        %v6436 = vpack.c.b16 %v6421, %v6420
        %v6437 = vpack.c.b16 %v6423, %v6422
        %v6438 = vpack.c.b16 %v6425, %v6424
        %v6439 = vpack.c.b16 %v6427, %v6426
        %v6440 = vpack.c.b16 %v6429, %v6428
        %v6441 = vpack.c.b16 %v6431, %v6430
        %v6442 = vpack.c.b16 %v6433, %v6432
        %v6443 = vpack.c.b16 %v6435, %v6434
        %6452 = vmatpush.bf16.msra.mxu0 %v6443
        %6453 = vmatpush.bf16.msra.mxu0 %v6442
        %6454 = vmatpush.bf16.msra.mxu0 %v6441
        %6455 = vmatpush.bf16.msra.mxu0 %v6440
        %6456 = vmatpush.bf16.msra.mxu0 %v6439
        %6457 = vmatpush.bf16.msra.mxu0 %v6438
        %6458 = vmatpush.bf16.msra.mxu0 %v6437
        %6459 = vmatpush.bf16.msra.mxu0 %v6436
        %6460 = vmatmul.bf16.gmra.mxu0 %v6368
        %v6461 = vpop.f32.mrf.mxu0
        %v6462 = vadd.f32 %v6402, %v6461
        %v6463 = vpop.f32.mrf.mxu0
        %v6464 = vadd.f32 %v6402, %v6463
        %6465 = vmatmul.bf16.gmra.mxu0 %v6369
        %v6466 = vpop.f32.mrf.mxu0
        %v6467 = vadd.f32 %v6402, %v6466
        %v6468 = vpop.f32.mrf.mxu0
        %v6469 = vadd.f32 %v6402, %v6468
        %6470 = vmatmul.bf16.gmra.mxu0 %v6370
        %v6471 = vpop.f32.mrf.mxu0
        %v6472 = vadd.f32 %v6402, %v6471
        %v6473 = vpop.f32.mrf.mxu0
        %v6474 = vadd.f32 %v6402, %v6473
        %6475 = vmatmul.bf16.gmra.mxu0 %v6371
        %v6476 = vpop.f32.mrf.mxu0
        %v6477 = vadd.f32 %v6402, %v6476
        %v6478 = vpop.f32.mrf.mxu0
        %v6479 = vadd.f32 %v6402, %v6478
        %6480 = vmatmul.bf16.gmra.mxu0 %v6372
        %v6481 = vpop.f32.mrf.mxu0
        %v6482 = vadd.f32 %v6402, %v6481
        %v6483 = vpop.f32.mrf.mxu0
        %v6484 = vadd.f32 %v6402, %v6483
        %6485 = vmatmul.bf16.gmra.mxu0 %v6373
        %v6486 = vpop.f32.mrf.mxu0
        %v6487 = vadd.f32 %v6402, %v6486
        %v6488 = vpop.f32.mrf.mxu0
        %v6489 = vadd.f32 %v6402, %v6488
        %6490 = vmatmul.bf16.gmra.mxu0 %v6374
        %v6491 = vpop.f32.mrf.mxu0
        %v6492 = vadd.f32 %v6402, %v6491
        %v6493 = vpop.f32.mrf.mxu0
        %v6494 = vadd.f32 %v6402, %v6493
        %6495 = vmatmul.bf16.gmra.mxu0 %v6375
        %v6496 = vpop.f32.mrf.mxu0
        %v6497 = vadd.f32 %v6402, %v6496
        %v6498 = vpop.f32.mrf.mxu0
        %v6499 = vadd.f32 %v6402, %v6498
        %6500 = vmatmul.bf16.gmra.mxu0 %v6376
        %v6501 = vpop.f32.mrf.mxu0
        %v6502 = vadd.f32 %v6402, %v6501
        %v6503 = vpop.f32.mrf.mxu0
        %v6504 = vadd.f32 %v6402, %v6503
        %6505 = vmatmul.bf16.gmra.mxu0 %v6377
        %v6506 = vpop.f32.mrf.mxu0
        %v6507 = vadd.f32 %v6402, %v6506
        %v6508 = vpop.f32.mrf.mxu0
        %v6509 = vadd.f32 %v6402, %v6508
        %6510 = vmatmul.bf16.gmra.mxu0 %v6378
        %v6511 = vpop.f32.mrf.mxu0
        %v6512 = vadd.f32 %v6402, %v6511
        %v6513 = vpop.f32.mrf.mxu0
        %v6514 = vadd.f32 %v6402, %v6513
        %6515 = vmatmul.bf16.gmra.mxu0 %v6379
        %v6516 = vpop.f32.mrf.mxu0
        %v6517 = vadd.f32 %v6402, %v6516
        %v6518 = vpop.f32.mrf.mxu0
        %v6519 = vadd.f32 %v6402, %v6518
        %6520 = vmatmul.bf16.gmra.mxu0 %v6380
        %v6521 = vpop.f32.mrf.mxu0
        %v6522 = vadd.f32 %v6402, %v6521
        %v6523 = vpop.f32.mrf.mxu0
        %v6524 = vadd.f32 %v6402, %v6523
        %6525 = vmatmul.bf16.gmra.mxu0 %v6381
        %v6526 = vpop.f32.mrf.mxu0
        %v6527 = vadd.f32 %v6402, %v6526
        %v6528 = vpop.f32.mrf.mxu0
        %v6529 = vadd.f32 %v6402, %v6528
        %6530 = vmatmul.bf16.gmra.mxu0 %v6382
        %v6531 = vpop.f32.mrf.mxu0
        %v6532 = vadd.f32 %v6402, %v6531
        %v6533 = vpop.f32.mrf.mxu0
        %v6534 = vadd.f32 %v6402, %v6533
        %6535 = vmatmul.bf16.gmra.mxu0 %v6383
        %v6536 = vpop.f32.mrf.mxu0
        %v6537 = vadd.f32 %v6402, %v6536
        %v6538 = vpop.f32.mrf.mxu0
        %v6539 = vadd.f32 %v6402, %v6538
        %6540 = vdwg.mxu0
        %v6541 = vpack.c.bf16 %v495, %v494
        %v6542 = vpack.c.bf16 %v497, %v496
        %v6543 = vpack.c.bf16 %v499, %v498
        %v6544 = vpack.c.bf16 %v501, %v500
        %v6545 = vpack.c.bf16 %v503, %v502
        %v6546 = vpack.c.bf16 %v505, %v504
        %v6547 = vpack.c.bf16 %v507, %v506
        %v6548 = vpack.c.bf16 %v509, %v508
        %v6549 = vpack.c.bf16 %v511, %v510
        %v6550 = vpack.c.bf16 %v513, %v512
        %v6551 = vpack.c.bf16 %v515, %v514
        %v6552 = vpack.c.bf16 %v517, %v516
        %v6553 = vpack.c.bf16 %v519, %v518
        %v6554 = vpack.c.bf16 %v521, %v520
        %v6555 = vpack.c.bf16 %v523, %v522
        %v6556 = vpack.c.bf16 %v525, %v524
        %v6557 = vld [vmem:[%s13] sm:$0xf]
        %v6558 = vld [vmem:[%s13 + $0x4] sm:$0xf]
        %v6559 = vld [vmem:[%s13 + $0x8] sm:$0xf]
        %v6560 = vld [vmem:[%s13 + $0xc] sm:$0xf]
        %v6561 = vld [vmem:[%s13 + $0x10] sm:$0xf]
        %v6562 = vld [vmem:[%s13 + $0x14] sm:$0xf]
        %v6563 = vld [vmem:[%s13 + $0x18] sm:$0xf]
        %v6564 = vld [vmem:[%s13 + $0x1c] sm:$0xf]
        %v6565 = vld [vmem:[%s13 + $0x20] sm:$0xf]
        %v6566 = vld [vmem:[%s13 + $0x24] sm:$0xf]
        %v6567 = vld [vmem:[%s13 + $0x28] sm:$0xf]
        %v6568 = vld [vmem:[%s13 + $0x2c] sm:$0xf]
        %v6569 = vld [vmem:[%s13 + $0x30] sm:$0xf]
        %v6570 = vld [vmem:[%s13 + $0x34] sm:$0xf]
        %v6571 = vld [vmem:[%s13 + $0x38] sm:$0xf]
        %v6572 = vld [vmem:[%s13 + $0x3c] sm:$0xf]
        %v6573 = vld [vmem:[%s14] sm:$0x1]
        %v6575 = vperm.slane %v6573, 0
        %v6593 = vunpack.c.l.b16 %v6557
        %v6594 = vunpack.c.l.b16 %v6558
        %v6595 = vunpack.c.l.b16 %v6559
        %v6596 = vunpack.c.l.b16 %v6560
        %v6597 = vunpack.c.l.b16 %v6561
        %v6598 = vunpack.c.l.b16 %v6562
        %v6599 = vunpack.c.l.b16 %v6563
        %v6600 = vunpack.c.l.b16 %v6564
        %v6601 = vunpack.c.l.b16 %v6565
        %v6602 = vunpack.c.l.b16 %v6566
        %v6603 = vunpack.c.l.b16 %v6567
        %v6604 = vunpack.c.l.b16 %v6568
        %v6605 = vunpack.c.l.b16 %v6569
        %v6606 = vunpack.c.l.b16 %v6570
        %v6607 = vunpack.c.l.b16 %v6571
        %v6608 = vunpack.c.l.b16 %v6572
        %v6609 = vpack.c.b16 %v6594, %v6593
        %v6610 = vpack.c.b16 %v6596, %v6595
        %v6611 = vpack.c.b16 %v6598, %v6597
        %v6612 = vpack.c.b16 %v6600, %v6599
        %v6613 = vpack.c.b16 %v6602, %v6601
        %v6614 = vpack.c.b16 %v6604, %v6603
        %v6615 = vpack.c.b16 %v6606, %v6605
        %v6616 = vpack.c.b16 %v6608, %v6607
        %6625 = vmatpush.bf16.msra.mxu0 %v6616
        %6626 = vmatpush.bf16.msra.mxu0 %v6615
        %6627 = vmatpush.bf16.msra.mxu0 %v6614
        %6628 = vmatpush.bf16.msra.mxu0 %v6613
        %6629 = vmatpush.bf16.msra.mxu0 %v6612
        %6630 = vmatpush.bf16.msra.mxu0 %v6611
        %6631 = vmatpush.bf16.msra.mxu0 %v6610
        %6632 = vmatpush.bf16.msra.mxu0 %v6609
        %6633 = vmatmul.bf16.gmra.mxu0 %v6541
        %v6634 = vpop.f32.mrf.mxu0
        %v6635 = vadd.f32 %v6575, %v6634
        %v6636 = vpop.f32.mrf.mxu0
        %v6637 = vadd.f32 %v6575, %v6636
        %6638 = vmatmul.bf16.gmra.mxu0 %v6542
        %v6639 = vpop.f32.mrf.mxu0
        %v6640 = vadd.f32 %v6575, %v6639
        %v6641 = vpop.f32.mrf.mxu0
        %v6642 = vadd.f32 %v6575, %v6641
        %6643 = vmatmul.bf16.gmra.mxu0 %v6543
        %v6644 = vpop.f32.mrf.mxu0
        %v6645 = vadd.f32 %v6575, %v6644
        %v6646 = vpop.f32.mrf.mxu0
        %v6647 = vadd.f32 %v6575, %v6646
        %6648 = vmatmul.bf16.gmra.mxu0 %v6544
        %v6649 = vpop.f32.mrf.mxu0
        %v6650 = vadd.f32 %v6575, %v6649
        %v6651 = vpop.f32.mrf.mxu0
        %v6652 = vadd.f32 %v6575, %v6651
        %6653 = vmatmul.bf16.gmra.mxu0 %v6545
        %v6654 = vpop.f32.mrf.mxu0
        %v6655 = vadd.f32 %v6575, %v6654
        %v6656 = vpop.f32.mrf.mxu0
        %v6657 = vadd.f32 %v6575, %v6656
        %6658 = vmatmul.bf16.gmra.mxu0 %v6546
        %v6659 = vpop.f32.mrf.mxu0
        %v6660 = vadd.f32 %v6575, %v6659
        %v6661 = vpop.f32.mrf.mxu0
        %v6662 = vadd.f32 %v6575, %v6661
        %6663 = vmatmul.bf16.gmra.mxu0 %v6547
        %v6664 = vpop.f32.mrf.mxu0
        %v6665 = vadd.f32 %v6575, %v6664
        %v6666 = vpop.f32.mrf.mxu0
        %v6667 = vadd.f32 %v6575, %v6666
        %6668 = vmatmul.bf16.gmra.mxu0 %v6548
        %v6669 = vpop.f32.mrf.mxu0
        %v6670 = vadd.f32 %v6575, %v6669
        %v6671 = vpop.f32.mrf.mxu0
        %v6672 = vadd.f32 %v6575, %v6671
        %6673 = vmatmul.bf16.gmra.mxu0 %v6549
        %v6674 = vpop.f32.mrf.mxu0
        %v6675 = vadd.f32 %v6575, %v6674
        %v6676 = vpop.f32.mrf.mxu0
        %v6677 = vadd.f32 %v6575, %v6676
        %6678 = vmatmul.bf16.gmra.mxu0 %v6550
        %v6679 = vpop.f32.mrf.mxu0
        %v6680 = vadd.f32 %v6575, %v6679
        %v6681 = vpop.f32.mrf.mxu0
        %v6682 = vadd.f32 %v6575, %v6681
        %6683 = vmatmul.bf16.gmra.mxu0 %v6551
        %v6684 = vpop.f32.mrf.mxu0
        %v6685 = vadd.f32 %v6575, %v6684
        %v6686 = vpop.f32.mrf.mxu0
        %v6687 = vadd.f32 %v6575, %v6686
        %6688 = vmatmul.bf16.gmra.mxu0 %v6552
        %v6689 = vpop.f32.mrf.mxu0
        %v6690 = vadd.f32 %v6575, %v6689
        %v6691 = vpop.f32.mrf.mxu0
        %v6692 = vadd.f32 %v6575, %v6691
        %6693 = vmatmul.bf16.gmra.mxu0 %v6553
        %v6694 = vpop.f32.mrf.mxu0
        %v6695 = vadd.f32 %v6575, %v6694
        %v6696 = vpop.f32.mrf.mxu0
        %v6697 = vadd.f32 %v6575, %v6696
        %6698 = vmatmul.bf16.gmra.mxu0 %v6554
        %v6699 = vpop.f32.mrf.mxu0
        %v6700 = vadd.f32 %v6575, %v6699
        %v6701 = vpop.f32.mrf.mxu0
        %v6702 = vadd.f32 %v6575, %v6701
        %6703 = vmatmul.bf16.gmra.mxu0 %v6555
        %v6704 = vpop.f32.mrf.mxu0
        %v6705 = vadd.f32 %v6575, %v6704
        %v6706 = vpop.f32.mrf.mxu0
        %v6707 = vadd.f32 %v6575, %v6706
        %6708 = vmatmul.bf16.gmra.mxu0 %v6556
        %v6709 = vpop.f32.mrf.mxu0
        %v6710 = vadd.f32 %v6575, %v6709
        %v6711 = vpop.f32.mrf.mxu0
        %v6712 = vadd.f32 %v6575, %v6711
        %6713 = vdwg.mxu0
        %v6714 = vadd.f32 %v6462, %v6635
        %v6715 = vadd.f32 %v6464, %v6637
        %v6716 = vadd.f32 %v6467, %v6640
        %v6717 = vadd.f32 %v6469, %v6642
        %v6718 = vadd.f32 %v6472, %v6645
        %v6719 = vadd.f32 %v6474, %v6647
        %v6720 = vadd.f32 %v6477, %v6650
        %v6721 = vadd.f32 %v6479, %v6652
        %v6722 = vadd.f32 %v6482, %v6655
        %v6723 = vadd.f32 %v6484, %v6657
        %v6724 = vadd.f32 %v6487, %v6660
        %v6725 = vadd.f32 %v6489, %v6662
        %v6726 = vadd.f32 %v6492, %v6665
        %v6727 = vadd.f32 %v6494, %v6667
        %v6728 = vadd.f32 %v6497, %v6670
        %v6729 = vadd.f32 %v6499, %v6672
        %v6730 = vadd.f32 %v6502, %v6675
        %v6731 = vadd.f32 %v6504, %v6677
        %v6732 = vadd.f32 %v6507, %v6680
        %v6733 = vadd.f32 %v6509, %v6682
        %v6734 = vadd.f32 %v6512, %v6685
        %v6735 = vadd.f32 %v6514, %v6687
        %v6736 = vadd.f32 %v6517, %v6690
        %v6737 = vadd.f32 %v6519, %v6692
        %v6738 = vadd.f32 %v6522, %v6695
        %v6739 = vadd.f32 %v6524, %v6697
        %v6740 = vadd.f32 %v6527, %v6700
        %v6741 = vadd.f32 %v6529, %v6702
        %v6742 = vadd.f32 %v6532, %v6705
        %v6743 = vadd.f32 %v6534, %v6707
        %v6744 = vadd.f32 %v6537, %v6710
        %v6745 = vadd.f32 %v6539, %v6712
        %6746 = vst [vmem:[%s487] sm:$0xff] %v6714
        %6747 = vst [vmem:[%s487 + $0x8] sm:$0xff] %v6715
        %6748 = vst [vmem:[%s487 + $0x10] sm:$0xff] %v6716
        %6749 = vst [vmem:[%s487 + $0x18] sm:$0xff] %v6717
        %6750 = vst [vmem:[%s487 + $0x20] sm:$0xff] %v6718
        %6751 = vst [vmem:[%s487 + $0x28] sm:$0xff] %v6719
        %6752 = vst [vmem:[%s487 + $0x30] sm:$0xff] %v6720
        %6753 = vst [vmem:[%s487 + $0x38] sm:$0xff] %v6721
        %6754 = vst [vmem:[%s487 + $0x40] sm:$0xff] %v6722
        %6755 = vst [vmem:[%s487 + $0x48] sm:$0xff] %v6723
        %6756 = vst [vmem:[%s487 + $0x50] sm:$0xff] %v6724
        %6757 = vst [vmem:[%s487 + $0x58] sm:$0xff] %v6725
        %6758 = vst [vmem:[%s487 + $0x60] sm:$0xff] %v6726
        %6759 = vst [vmem:[%s487 + $0x68] sm:$0xff] %v6727
        %6760 = vst [vmem:[%s487 + $0x70] sm:$0xff] %v6728
        %6761 = vst [vmem:[%s487 + $0x78] sm:$0xff] %v6729
        %6762 = vst [vmem:[%s487 + $0x80] sm:$0xff] %v6730
        %6763 = vst [vmem:[%s487 + $0x88] sm:$0xff] %v6731
        %6764 = vst [vmem:[%s487 + $0x90] sm:$0xff] %v6732
        %6765 = vst [vmem:[%s487 + $0x98] sm:$0xff] %v6733
        %6766 = vst [vmem:[%s487 + $0xa0] sm:$0xff] %v6734
        %6767 = vst [vmem:[%s487 + $0xa8] sm:$0xff] %v6735
        %6768 = vst [vmem:[%s487 + $0xb0] sm:$0xff] %v6736
        %6769 = vst [vmem:[%s487 + $0xb8] sm:$0xff] %v6737
        %6770 = vst [vmem:[%s487 + $0xc0] sm:$0xff] %v6738
        %6771 = vst [vmem:[%s487 + $0xc8] sm:$0xff] %v6739
        %6772 = vst [vmem:[%s487 + $0xd0] sm:$0xff] %v6740
        %6773 = vst [vmem:[%s487 + $0xd8] sm:$0xff] %v6741
        %6774 = vst [vmem:[%s487 + $0xe0] sm:$0xff] %v6742
        %6775 = vst [vmem:[%s487 + $0xe8] sm:$0xff] %v6743
        %6776 = vst [vmem:[%s487 + $0xf0] sm:$0xff] %v6744
        %6777 = vst [vmem:[%s487 + $0xf8] sm:$0xff] %v6745
        %s6778 = sand.u32 %s357, 1
        %s6779 = scalar_lea.sflag [#allocation5], %s6778
        %s6780 = sand.u32 %s357, 1
        %s6781 = smul.addr %s6780, 256
        %s6782 = scalar_lea.vmem [#allocation4], %s6781
        // Predicated region
        $region81: #{preact_residual_unit.1} parent=79 // pred_check
          %p6783 = pneg %p367
        $region82: #{preact_residual_unit.1} parent=79 // pred_check_branch
          %6785 = sbr.rel (%p6783) target = $region84
        $region83: #{preact_residual_unit.1} parent=79 // pred_region
          %6787 = vsyncadd %s6779, 0
          %s6788 = smul.addr %s29, 32
          %s6789 = smul.addr %s6788, 8
          %s6790 = scalar_lea.hbm %s15, %s6789
          %s6791 = sshll.u32 %s6782, 4
          %s6792 = int_to_ptr.vmem [resolvable:$true] %s6791
          %s6793 = sshll.u32 %s6790, 4
          %s6794 = int_to_ptr.hbm [resolvable:$true] %s6793
          %6799 = dma.vmem_to_hbm [thread:$0]  %s6792, 4096, %s6794, %s6779, 128, 128, 8
        $region84: #{preact_residual_unit.1} parent=79 // pred_fallthru
          _
      $region80: #{preact_residual_unit.1} parent=5 // pred_fallthru
        _
      %p6800 = scmp.le.s32.totalorder 2, %s24
      // Predicated region
      $region85: #{preact_residual_unit.1} parent=5 // pred_check
        %p6801 = pneg %p6800
      $region86: #{preact_residual_unit.1} parent=5 // pred_check_branch
        %6803 = sbr.rel (%p6801) target = $region88
      $region87: #{preact_residual_unit.1} parent=5 // pred_region
        %s6804 = ssub.s32 %s24, 2
        // Predicated region
        $region89: #{preact_residual_unit.1} parent=87 // pred_check
          %p6805 = pneg %p373
        $region90: #{preact_residual_unit.1} parent=87 // pred_check_branch
          %6807 = sbr.rel (%p6805) target = $region92
        $region91: #{preact_residual_unit.1} parent=87 // pred_region
          %s6808 = sand.u32 %s358, 1
          %s6809 = scalar_lea.sflag [#allocation5], %s6808
          %s6810 = sand.u32 %s358, 1
          %s6811 = smul.addr %s6810, 256
          %s6812 = scalar_lea.vmem [#allocation4], %s6811
          %6814 = dma.done %s6809, 4096
        $region92: #{preact_residual_unit.1} parent=87 // pred_fallthru
          _
      $region88: #{preact_residual_unit.1} parent=5 // pred_fallthru
        _
    $region6: #{preact_residual_unit.1} parent=1 // loop_footer
      %s28 = sadd.s32 1, %s24
    $region7: #{preact_residual_unit.1} parent=1 // loop_footer_branch
      %23 = sbr.rel target = $region3
    $region8: #{preact_residual_unit.1} parent=1 // loop_exit
      _
    %6815 = vsyncpa [#allocation5], 1
    %s6816 = scalar_lea.sflag [#allocation5], 1
    %6817 = vsyncpa %s6816, 1

</llo_original>
